<compile_context>
chip_gen: v5e
topology: v5e:2x2
jax: 0.10.0
libtpu: 0.0.40
codegen_flags: <defaults>
</compile_context>

<pallas_src>
import functools

import jax
import jax.numpy as jnp
from jax.experimental import pallas as pl
from jax.experimental.pallas import tpu as pltpu

N_FEAT = 784                    # input features (no padding needed: full-dim block)
H0, H1, H2 = 1024, 512, 256
N_OUT, N_OUT_PAD = 1, 128       # pad final layer so the output store is lane-dense


def _round_up(x, m):
    return (x + m - 1) // m * m


def _act_dtype():
    """bf16 elementwise math only where the VPU supports it (v6e/v7x)."""
    try:
        kind = jax.devices()[0].device_kind.lower()
    except Exception:
        kind = ""
    return jnp.bfloat16 if ("v6" in kind or "v7" in kind) else jnp.float32


def _choose_tm(B):
    """Batch tile: tiny B -> one step w/ minimal padding; larger B -> >=2 steps
    (v7x megacore) with rows-per-step capped at 512 (v6e per-step overhead)."""
    if B <= 16:
        return _round_up(B, 8)
    return min(512, _round_up(pl.cdiv(B, 2), 16))


def _leaky_relu(x, slope=0.2):
    # max(x, 0.2*x) == LeakyReLU(0.2); avoids compare+select on the VPU.
    return jnp.maximum(x, x * slope)


def discriminator_kernel(x_ref,
                         w0_ref, b0_ref,
                         w1_ref, b1_ref,
                         w2_ref, b2_ref,
                         w3_ref, b3_ref,
                         o_ref, *, act_dtype):
    """Fused 4-layer MLP forward for one batch tile.

    x_ref is f32 (TM, 784) and cast to bf16 in-kernel; weights are bf16 and
    VMEM-resident across the grid.  Matmuls accumulate in f32 on the MXU;
    bias + LeakyReLU run in `act_dtype` (bf16 on v6e/v7x, f32 on v5e).
    """
    x = x_ref[...].astype(jnp.bfloat16)

    # hidden0: Linear(784, 1024) + LeakyReLU(0.2)   (Dropout = identity at eval)
    h = jnp.dot(x, w0_ref[...], preferred_element_type=jnp.float32)
    h = _leaky_relu(h.astype(act_dtype) + b0_ref[...].astype(act_dtype))

    # hidden1: Linear(1024, 512) + LeakyReLU(0.2)
    h = jnp.dot(h.astype(jnp.bfloat16), w1_ref[...],
                preferred_element_type=jnp.float32)
    h = _leaky_relu(h.astype(act_dtype) + b1_ref[...].astype(act_dtype))

    # hidden2: Linear(512, 256) + LeakyReLU(0.2)
    h = jnp.dot(h.astype(jnp.bfloat16), w2_ref[...],
                preferred_element_type=jnp.float32)
    h = _leaky_relu(h.astype(act_dtype) + b2_ref[...].astype(act_dtype))

    # out: Linear(256, 128-padded) + Sigmoid.  Only column 0 is meaningful; the
    # padded columns hold sigmoid(0)=0.5 garbage and are sliced off in the wrapper.
    logits = jnp.dot(h.astype(jnp.bfloat16), w3_ref[...],
                     preferred_element_type=jnp.float32) + b3_ref[...]
    o_ref[...] = jax.nn.sigmoid(logits).astype(o_ref.dtype)


@jax.jit
def discriminator_forward(x, pparams):
    """x: (B, 784) float32.  pparams: bf16 weights (in,out) / f32 biases (1,out)."""
    B = x.shape[0]
    TM = _choose_tm(B)
    B_pad = _round_up(B, TM)
    act_dtype = _act_dtype()

    # Only pad the batch if needed (pure zero rows; features stay at 784).
    xp = x if B_pad == B else jnp.pad(x, ((0, B_pad - B), (0, 0)))

    w0, b0 = pparams["w0"], pparams["b0"]   # (784,1024) bf16, (1,1024) f32
    w1, b1 = pparams["w1"], pparams["b1"]   # (1024,512) bf16, (1,512)  f32
    w2, b2 = pparams["w2"], pparams["b2"]   # (512,256)  bf16, (1,256)  f32
    w3, b3 = pparams["w3"], pparams["b3"]   # (256,128)  bf16, (1,128)  f32

    # Constant index_map => weight/bias blocks stay VMEM-resident across the grid.
    resident = lambda arr: pl.BlockSpec(arr.shape, lambda i: (0, 0))

    weight_bytes = sum(int(v.size) * v.dtype.itemsize for v in pparams.values())
    flops = 2 * B_pad * (N_FEAT * H0 + H0 * H1 + H1 * H2 + H2 * N_OUT_PAD)
    cost = pl.CostEstimate(
        flops=flops,
        transcendentals=B_pad * N_OUT_PAD,                        # sigmoid exps
        bytes_accessed=(weight_bytes
                        + B_pad * N_FEAT * 4                       # x read (f32)
                        + B_pad * N_OUT_PAD * 2),                  # out write (bf16)
    )

    out = pl.pallas_call(
        functools.partial(discriminator_kernel, act_dtype=act_dtype),
        out_shape=jax.ShapeDtypeStruct((B_pad, N_OUT_PAD), jnp.bfloat16),
        grid=(B_pad // TM,),
        in_specs=[
            pl.BlockSpec((TM, N_FEAT), lambda i: (i, 0)),          # x: tiled over batch
            resident(w0), resident(b0),                            # resident weights/biases
            resident(w1), resident(b1),
            resident(w2), resident(b2),
            resident(w3), resident(b3),
        ],
        out_specs=pl.BlockSpec((TM, N_OUT_PAD), lambda i: (i, 0)),
        compiler_params=pltpu.CompilerParams(
            dimension_semantics=("parallel",),                     # megacore on v7x
            vmem_limit_bytes=32 << 20,
        ),
        cost_estimate=cost,
    )(xp, w0, b0, w1, b1, w2, b2, w3, b3)

    return out[:B, :N_OUT].astype(jnp.float32)


def init_params(key):
    """Deterministic init mimicking nn.Linear default U(-1/sqrt(in), 1/sqrt(in)).

    Weights stored transposed to (in, out) f32; biases as (1, out) f32."""
    dims = [(N_FEAT, H0), (H0, H1), (H1, H2), (H2, N_OUT)]
    params = {}
    for i, (d_in, d_out) in enumerate(dims):
        key, kw, kb = jax.random.split(key, 3)
        bound = 1.0 / jnp.sqrt(d_in)
        params[f"w{i}"] = jax.random.uniform(
            kw, (d_in, d_out), jnp.float32, -bound, bound)
        params[f"b{i}"] = jax.random.uniform(
            kb, (1, d_out), jnp.float32, -bound, bound)
    return params


def prepare_params(params):
    """Pad final layer to lane width, cast weights to bf16 (done once)."""
    w3 = jnp.pad(params["w3"], ((0, 0), (0, N_OUT_PAD - N_OUT)))   # zero cols
    b3 = jnp.pad(params["b3"], ((0, 0), (0, N_OUT_PAD - N_OUT)))
    return {
        "w0": params["w0"].astype(jnp.bfloat16), "b0": params["b0"],
        "w1": params["w1"].astype(jnp.bfloat16), "b1": params["b1"],
        "w2": params["w2"].astype(jnp.bfloat16), "b2": params["b2"],
        "w3": w3.astype(jnp.bfloat16),           "b3": b3,
    }


def reference_forward(x, pparams, act_dtype):
    """Plain-JAX reference mirroring the kernel's mixed-precision numerics."""
    h = jnp.dot(x.astype(jnp.bfloat16), pparams["w0"],
                preferred_element_type=jnp.float32)
    h = _leaky_relu(h.astype(act_dtype) + pparams["b0"].astype(act_dtype))
    h = jnp.dot(h.astype(jnp.bfloat16), pparams["w1"],
                preferred_element_type=jnp.float32)
    h = _leaky_relu(h.astype(act_dtype) + pparams["b1"].astype(act_dtype))
    h = jnp.dot(h.astype(jnp.bfloat16), pparams["w2"],
                preferred_element_type=jnp.float32)
    h = _leaky_relu(h.astype(act_dtype) + pparams["b2"].astype(act_dtype))
    logits = jnp.dot(h.astype(jnp.bfloat16), pparams["w3"],
                     preferred_element_type=jnp.float32) + pparams["b3"]
    out = jax.nn.sigmoid(logits).astype(jnp.bfloat16).astype(jnp.float32)
    return out[:, :N_OUT]


if __name__ == "__main__":
    key = jax.random.PRNGKey(0)
    key, kx = jax.random.split(key)

    B = 8
    x = jax.random.normal(kx, (B, N_FEAT), jnp.float32)
    params = init_params(key)
    pparams = prepare_params(params)

    out = discriminator_forward(x, pparams)
    out = jax.block_until_ready(out)

    ref = reference_forward(x, pparams, _act_dtype())
    assert out.shape == (B, N_OUT), out.shape
    assert jnp.allclose(out, ref, atol=1e-2, rtol=1e-2), "mismatch vs reference"

    print("KERNEL_OK")
</pallas_src>

<mosaic_0001>
module attributes {stable_mosaic.version = 11 : i64} {
  func.func @discriminator_kernel(%arg0: i32, %arg1: memref<8x784xf32, #tpu.memory_space<vmem>>, %arg2: memref<784x1024xbf16, #tpu.memory_space<vmem>>, %arg3: memref<1x1024xf32, #tpu.memory_space<vmem>>, %arg4: memref<1024x512xbf16, #tpu.memory_space<vmem>>, %arg5: memref<1x512xf32, #tpu.memory_space<vmem>>, %arg6: memref<512x256xbf16, #tpu.memory_space<vmem>>, %arg7: memref<1x256xf32, #tpu.memory_space<vmem>>, %arg8: memref<256x128xbf16, #tpu.memory_space<vmem>>, %arg9: memref<1x128xf32, #tpu.memory_space<vmem>>, %arg10: memref<8x128xbf16, #tpu.memory_space<vmem>>) attributes {dimension_semantics = [#tpu.dimension_semantics<parallel>], iteration_bounds = array<i64: 1>, scalar_prefetch = 0 : i64, scratch_operands = 0 : i64, tpu.core_type = #tpu.core_type<tc>, window_params = [{transform_indices = @transform_0, window_bounds = array<i64: 8, 784>}, {pipeline_mode = #tpu.pipeline_mode<synchronous>, transform_indices = @transform_1, window_bounds = array<i64: 784, 1024>}, {pipeline_mode = #tpu.pipeline_mode<synchronous>, transform_indices = @transform_2, window_bounds = array<i64: 1, 1024>}, {pipeline_mode = #tpu.pipeline_mode<synchronous>, transform_indices = @transform_3, window_bounds = array<i64: 1024, 512>}, {pipeline_mode = #tpu.pipeline_mode<synchronous>, transform_indices = @transform_4, window_bounds = array<i64: 1, 512>}, {pipeline_mode = #tpu.pipeline_mode<synchronous>, transform_indices = @transform_5, window_bounds = array<i64: 512, 256>}, {pipeline_mode = #tpu.pipeline_mode<synchronous>, transform_indices = @transform_6, window_bounds = array<i64: 1, 256>}, {pipeline_mode = #tpu.pipeline_mode<synchronous>, transform_indices = @transform_7, window_bounds = array<i64: 256, 128>}, {pipeline_mode = #tpu.pipeline_mode<synchronous>, transform_indices = @transform_8, window_bounds = array<i64: 1, 128>}, {transform_indices = @transform_9, window_bounds = array<i64: 8, 128>}]} {
    %c0 = arith.constant 0 : index
    %c0_0 = arith.constant 0 : index
    %0 = vector.load %arg1[%c0, %c0_0] : memref<8x784xf32, #tpu.memory_space<vmem>>, vector<8x784xf32>
    %1 = arith.truncf %0 : vector<8x784xf32> to vector<8x784xbf16>
    %c0_1 = arith.constant 0 : index
    %c0_2 = arith.constant 0 : index
    %2 = vector.load %arg2[%c0_1, %c0_2] : memref<784x1024xbf16, #tpu.memory_space<vmem>>, vector<784x1024xbf16>
    %cst = arith.constant dense<0.000000e+00> : vector<8x1024xf32>
    %3 = tpu.matmul %1, %2, %cst {dimension_numbers = #tpu.dot_dimension_numbers<[1], [0], [0], [1], [0, 0, 1, 1], [], []>} : vector<8x784xbf16>, vector<784x1024xbf16>, vector<8x1024xf32> -> vector<8x1024xf32>
    %c0_3 = arith.constant 0 : index
    %c0_4 = arith.constant 0 : index
    %4 = vector.load %arg3[%c0_3, %c0_4] : memref<1x1024xf32, #tpu.memory_space<vmem>>, vector<1x1024xf32>
    %5 = vector.broadcast %4 : vector<1x1024xf32> to vector<8x1024xf32>
    %6 = arith.addf %3, %5 : vector<8x1024xf32>
    %cst_5 = arith.constant 2.000000e-01 : f32
    %7 = vector.broadcast %cst_5 : f32 to vector<8x1024xf32>
    %8 = arith.mulf %6, %7 : vector<8x1024xf32>
    %9 = arith.maximumf %6, %8 : vector<8x1024xf32>
    %10 = arith.truncf %9 : vector<8x1024xf32> to vector<8x1024xbf16>
    %c0_6 = arith.constant 0 : index
    %c0_7 = arith.constant 0 : index
    %11 = vector.load %arg4[%c0_6, %c0_7] : memref<1024x512xbf16, #tpu.memory_space<vmem>>, vector<1024x512xbf16>
    %cst_8 = arith.constant dense<0.000000e+00> : vector<8x512xf32>
    %12 = tpu.matmul %10, %11, %cst_8 {dimension_numbers = #tpu.dot_dimension_numbers<[1], [0], [0], [1], [0, 0, 1, 1], [], []>} : vector<8x1024xbf16>, vector<1024x512xbf16>, vector<8x512xf32> -> vector<8x512xf32>
    %c0_9 = arith.constant 0 : index
    %c0_10 = arith.constant 0 : index
    %13 = vector.load %arg5[%c0_9, %c0_10] : memref<1x512xf32, #tpu.memory_space<vmem>>, vector<1x512xf32>
    %14 = vector.broadcast %13 : vector<1x512xf32> to vector<8x512xf32>
    %15 = arith.addf %12, %14 : vector<8x512xf32>
    %cst_11 = arith.constant 2.000000e-01 : f32
    %16 = vector.broadcast %cst_11 : f32 to vector<8x512xf32>
    %17 = arith.mulf %15, %16 : vector<8x512xf32>
    %18 = arith.maximumf %15, %17 : vector<8x512xf32>
    %19 = arith.truncf %18 : vector<8x512xf32> to vector<8x512xbf16>
    %c0_12 = arith.constant 0 : index
    %c0_13 = arith.constant 0 : index
    %20 = vector.load %arg6[%c0_12, %c0_13] : memref<512x256xbf16, #tpu.memory_space<vmem>>, vector<512x256xbf16>
    %cst_14 = arith.constant dense<0.000000e+00> : vector<8x256xf32>
    %21 = tpu.matmul %19, %20, %cst_14 {dimension_numbers = #tpu.dot_dimension_numbers<[1], [0], [0], [1], [0, 0, 1, 1], [], []>} : vector<8x512xbf16>, vector<512x256xbf16>, vector<8x256xf32> -> vector<8x256xf32>
    %c0_15 = arith.constant 0 : index
    %c0_16 = arith.constant 0 : index
    %22 = vector.load %arg7[%c0_15, %c0_16] : memref<1x256xf32, #tpu.memory_space<vmem>>, vector<1x256xf32>
    %23 = vector.broadcast %22 : vector<1x256xf32> to vector<8x256xf32>
    %24 = arith.addf %21, %23 : vector<8x256xf32>
    %cst_17 = arith.constant 2.000000e-01 : f32
    %25 = vector.broadcast %cst_17 : f32 to vector<8x256xf32>
    %26 = arith.mulf %24, %25 : vector<8x256xf32>
    %27 = arith.maximumf %24, %26 : vector<8x256xf32>
    %28 = arith.truncf %27 : vector<8x256xf32> to vector<8x256xbf16>
    %c0_18 = arith.constant 0 : index
    %c0_19 = arith.constant 0 : index
    %29 = vector.load %arg8[%c0_18, %c0_19] : memref<256x128xbf16, #tpu.memory_space<vmem>>, vector<256x128xbf16>
    %cst_20 = arith.constant dense<0.000000e+00> : vector<8x128xf32>
    %30 = tpu.matmul %28, %29, %cst_20 {dimension_numbers = #tpu.dot_dimension_numbers<[1], [0], [0], [1], [0, 0, 1, 1], [], []>} : vector<8x256xbf16>, vector<256x128xbf16>, vector<8x128xf32> -> vector<8x128xf32>
    %c0_21 = arith.constant 0 : index
    %c0_22 = arith.constant 0 : index
    %31 = vector.load %arg9[%c0_21, %c0_22] : memref<1x128xf32, #tpu.memory_space<vmem>>, vector<1x128xf32>
    %32 = vector.broadcast %31 : vector<1x128xf32> to vector<8x128xf32>
    %33 = arith.addf %30, %32 : vector<8x128xf32>
    %34 = arith.negf %33 : vector<8x128xf32>
    %35 = math.exp %34 : vector<8x128xf32>
    %cst_23 = arith.constant 1.000000e+00 : f32
    %36 = vector.broadcast %cst_23 : f32 to vector<8x128xf32>
    %37 = arith.addf %36, %35 : vector<8x128xf32>
    %38 = arith.divf %36, %37 : vector<8x128xf32>
    %39 = arith.truncf %38 : vector<8x128xf32> to vector<8x128xbf16>
    %c0_24 = arith.constant 0 : index
    %c0_25 = arith.constant 0 : index
    %40 = vector.load %arg10[%c0_24, %c0_25] : memref<8x128xbf16, #tpu.memory_space<vmem>>, vector<8x128xbf16>
    tpu.vector_store %arg10[%c0_24, %c0_25], %39 {strides = array<i32>} : memref<8x128xbf16, #tpu.memory_space<vmem>>, vector<8x128xbf16>,
    return
  }
  func.func @transform_0(%arg0: i32) -> (i32, i32) {
    %c0_i32 = arith.constant 0 : i32
    %c0_i32_0 = arith.constant 0 : i32
    return %arg0, %c0_i32 : i32, i32
  }
  func.func @transform_1(%arg0: i32) -> (i32, i32) {
    %c0_i32 = arith.constant 0 : i32
    %c0_i32_0 = arith.constant 0 : i32
    %c0_i32_1 = arith.constant 0 : i32
    return %c0_i32, %c0_i32_0 : i32, i32
  }
  func.func @transform_2(%arg0: i32) -> (i32, i32) {
    %c0_i32 = arith.constant 0 : i32
    %c0_i32_0 = arith.constant 0 : i32
    %c0_i32_1 = arith.constant 0 : i32
    return %c0_i32, %c0_i32_0 : i32, i32
  }
  func.func @transform_3(%arg0: i32) -> (i32, i32) {
    %c0_i32 = arith.constant 0 : i32
    %c0_i32_0 = arith.constant 0 : i32
    %c0_i32_1 = arith.constant 0 : i32
    return %c0_i32, %c0_i32_0 : i32, i32
  }
  func.func @transform_4(%arg0: i32) -> (i32, i32) {
    %c0_i32 = arith.constant 0 : i32
    %c0_i32_0 = arith.constant 0 : i32
    %c0_i32_1 = arith.constant 0 : i32
    return %c0_i32, %c0_i32_0 : i32, i32
  }
  func.func @transform_5(%arg0: i32) -> (i32, i32) {
    %c0_i32 = arith.constant 0 : i32
    %c0_i32_0 = arith.constant 0 : i32
    %c0_i32_1 = arith.constant 0 : i32
    return %c0_i32, %c0_i32_0 : i32, i32
  }
  func.func @transform_6(%arg0: i32) -> (i32, i32) {
    %c0_i32 = arith.constant 0 : i32
    %c0_i32_0 = arith.constant 0 : i32
    %c0_i32_1 = arith.constant 0 : i32
    return %c0_i32, %c0_i32_0 : i32, i32
  }
  func.func @transform_7(%arg0: i32) -> (i32, i32) {
    %c0_i32 = arith.constant 0 : i32
    %c0_i32_0 = arith.constant 0 : i32
    %c0_i32_1 = arith.constant 0 : i32
    return %c0_i32, %c0_i32_0 : i32, i32
  }
  func.func @transform_8(%arg0: i32) -> (i32, i32) {
    %c0_i32 = arith.constant 0 : i32
    %c0_i32_0 = arith.constant 0 : i32
    %c0_i32_1 = arith.constant 0 : i32
    return %c0_i32, %c0_i32_0 : i32, i32
  }
  func.func @transform_9(%arg0: i32) -> (i32, i32) {
    %c0_i32 = arith.constant 0 : i32
    %c0_i32_0 = arith.constant 0 : i32
    return %arg0, %c0_i32 : i32, i32
  }
}

</mosaic_0001>

<llo_original>
// kernel: discriminator_forward.1
$region0: #{discriminator_forward.1}
  #allocation0 [shape = 'u32[]', space=smem, size = 0x4, offset = 0x4, fixed_abs, tag = 'smem constant byte address 0x4 - core index']
  #allocation1 [shape = 'u32[72,128]{1,0:T(1,128)}', space=vmem, size = 0x9000, scoped, tag = 'internal scratch']
  %s0 = inlined_call_operand.hbm [shape: f32[8,784], index: 0, kind: input, shape index: {}]
  %s1 = inlined_call_operand.hbm [shape: bf16[784,1024], index: 1, kind: input, shape index: {}]
  %s2 = inlined_call_operand.hbm [shape: f32[1,1024], index: 2, kind: input, shape index: {}]
  %s3 = inlined_call_operand.hbm [shape: bf16[1024,512], index: 3, kind: input, shape index: {}]
  %s4 = inlined_call_operand.hbm [shape: f32[1,512], index: 4, kind: input, shape index: {}]
  %s5 = inlined_call_operand.hbm [shape: bf16[512,256], index: 5, kind: input, shape index: {}]
  %s6 = inlined_call_operand.hbm [shape: f32[1,256], index: 6, kind: input, shape index: {}]
  %s7 = inlined_call_operand.hbm [shape: bf16[256,128], index: 7, kind: input, shape index: {}]
  %s8 = inlined_call_operand.hbm [shape: f32[1,128], index: 8, kind: input, shape index: {}]
  %s9 = inlined_call_operand.vmem [shape: bf16[8,128], index: 9, kind: output, shape index: {}]
  %s10 = sld [smem:[#allocation0]]
  $region82: #{discriminator_forward.1} parent=0
    _
  %s12 = ssub.s32 1, %s10
  %s13 = scalar_select 0, %s12, %s10
  $region1: #{discriminator_forward.1} parent=0
    #allocation2 [shape = 'u8[28672]{0}', space=vmem, size = 0x7000, scoped, tag = 'input window, operand 0, single buffered']
    #allocation3 [shape = 's32[1]{0}', space=sflag, size = 0x4, scoped, tag = 'scoped memory for discriminator_forward.1']
    #allocation4 [shape = 'u8[1605632]{0}', space=vmem, size = 0x188000, scoped, tag = 'input window, operand 1, single buffered']
    #allocation5 [shape = 's32[1]{0}', space=sflag, size = 0x4, scoped, tag = 'scoped memory for discriminator_forward.1']
    #allocation6 [shape = 'u8[4096]{0}', space=vmem, size = 0x1000, scoped, tag = 'input window, operand 2, single buffered']
    #allocation7 [shape = 'u8[1048576]{0}', space=vmem, size = 0x100000, scoped, tag = 'input window, operand 3, single buffered']
    #allocation8 [shape = 's32[1]{0}', space=sflag, size = 0x4, scoped, tag = 'scoped memory for discriminator_forward.1']
    #allocation9 [shape = 'u8[2048]{0}', space=vmem, size = 0x800, scoped, tag = 'input window, operand 4, single buffered']
    #allocation10 [shape = 'u8[262144]{0}', space=vmem, size = 0x40000, scoped, tag = 'input window, operand 5, single buffered']
    #allocation11 [shape = 's32[1]{0}', space=sflag, size = 0x4, scoped, tag = 'scoped memory for discriminator_forward.1']
    #allocation12 [shape = 'u8[1024]{0}', space=vmem, size = 0x400, scoped, tag = 'input window, operand 6, single buffered']
    #allocation13 [shape = 'u8[65536]{0}', space=vmem, size = 0x10000, scoped, tag = 'input window, operand 7, single buffered']
    #allocation14 [shape = 's32[1]{0}', space=sflag, size = 0x4, scoped, tag = 'scoped memory for discriminator_forward.1']
    #allocation15 [shape = 'u8[512]{0}', space=vmem, size = 0x400, scoped, tag = 'input window, operand 8, single buffered']
    %14 = vsyncpa [#allocation3], 0
    %15 = vsyncpa [#allocation5], 0
    %16 = vsyncpa [#allocation8], 0
    %17 = vsyncpa [#allocation11], 0
    %18 = vsyncpa [#allocation14], 0
    // Predicated region
    $region2: #{discriminator_forward.1} parent=1 // pred_check
      _
    $region3: #{discriminator_forward.1} parent=1 // pred_check_branch
      %20 = sbr.rel (0) target = $region5
    $region4: #{discriminator_forward.1} parent=1 // pred_region
      %22 = vsyncadd [#allocation3], 0
      %s24 = sshll.u32 %s0, 4
      %s25 = int_to_ptr.hbm [resolvable:$true] %s24
      %s26 = sshll.u32 [#allocation2], 4
      %s27 = int_to_ptr.vmem [resolvable:$true] %s26
      %29 = dma.hbm_to_vmem [thread:$0]  %s25, 896, %s27, [#allocation3]
    $region5: #{discriminator_forward.1} parent=1 // pred_fallthru
      _
    // Predicated region
    $region6: #{discriminator_forward.1} parent=1 // pred_check
      _
    $region7: #{discriminator_forward.1} parent=1 // pred_check_branch
      %31 = sbr.rel (0) target = $region9
    $region8: #{discriminator_forward.1} parent=1 // pred_region
      %33 = vsyncadd [#allocation5], 0
      %s34 = sshll.u32 %s1, 4
      %s35 = int_to_ptr.hbm [resolvable:$true] %s34
      %s36 = sshll.u32 [#allocation4], 4
      %s37 = int_to_ptr.vmem [resolvable:$true] %s36
      %42 = dma.hbm_to_vmem [thread:$0]  %s35, 50176, %s37, [#allocation5], 512, 512, 32
    $region9: #{discriminator_forward.1} parent=1 // pred_fallthru
      _
    // Predicated region
    $region10: #{discriminator_forward.1} parent=1 // pred_check
      _
    $region11: #{discriminator_forward.1} parent=1 // pred_check_branch
      %44 = sbr.rel (0) target = $region13
    $region12: #{discriminator_forward.1} parent=1 // pred_region
      %46 = vsyncadd [#allocation5], 0
      %s48 = sshll.u32 %s2, 4
      %s49 = int_to_ptr.hbm [resolvable:$true] %s48
      %s50 = sshll.u32 [#allocation6], 4
      %s51 = int_to_ptr.vmem [resolvable:$true] %s50
      %53 = dma.hbm_to_vmem [thread:$0]  %s49, 128, %s51, [#allocation5]
    $region13: #{discriminator_forward.1} parent=1 // pred_fallthru
      _
    // Predicated region
    $region14: #{discriminator_forward.1} parent=1 // pred_check
      _
    $region15: #{discriminator_forward.1} parent=1 // pred_check_branch
      %55 = sbr.rel (0) target = $region17
    $region16: #{discriminator_forward.1} parent=1 // pred_region
      %57 = vsyncadd [#allocation8], 0
      %s58 = sshll.u32 %s3, 4
      %s59 = int_to_ptr.hbm [resolvable:$true] %s58
      %s60 = sshll.u32 [#allocation7], 4
      %s61 = int_to_ptr.vmem [resolvable:$true] %s60
      %66 = dma.hbm_to_vmem [thread:$0]  %s59, 32768, %s61, [#allocation8], 256, 256, 16
    $region17: #{discriminator_forward.1} parent=1 // pred_fallthru
      _
    // Predicated region
    $region18: #{discriminator_forward.1} parent=1 // pred_check
      _
    $region19: #{discriminator_forward.1} parent=1 // pred_check_branch
      %68 = sbr.rel (0) target = $region21
    $region20: #{discriminator_forward.1} parent=1 // pred_region
      %70 = vsyncadd [#allocation8], 0
      %s72 = sshll.u32 %s4, 4
      %s73 = int_to_ptr.hbm [resolvable:$true] %s72
      %s74 = sshll.u32 [#allocation9], 4
      %s75 = int_to_ptr.vmem [resolvable:$true] %s74
      %77 = dma.hbm_to_vmem [thread:$0]  %s73, 64, %s75, [#allocation8]
    $region21: #{discriminator_forward.1} parent=1 // pred_fallthru
      _
    // Predicated region
    $region22: #{discriminator_forward.1} parent=1 // pred_check
      _
    $region23: #{discriminator_forward.1} parent=1 // pred_check_branch
      %79 = sbr.rel (0) target = $region25
    $region24: #{discriminator_forward.1} parent=1 // pred_region
      %81 = vsyncadd [#allocation11], 0
      %s82 = sshll.u32 %s5, 4
      %s83 = int_to_ptr.hbm [resolvable:$true] %s82
      %s84 = sshll.u32 [#allocation10], 4
      %s85 = int_to_ptr.vmem [resolvable:$true] %s84
      %90 = dma.hbm_to_vmem [thread:$0]  %s83, 8192, %s85, [#allocation11], 128, 128, 8
    $region25: #{discriminator_forward.1} parent=1 // pred_fallthru
      _
    // Predicated region
    $region26: #{discriminator_forward.1} parent=1 // pred_check
      _
    $region27: #{discriminator_forward.1} parent=1 // pred_check_branch
      %92 = sbr.rel (0) target = $region29
    $region28: #{discriminator_forward.1} parent=1 // pred_region
      %94 = vsyncadd [#allocation11], 0
      %s96 = sshll.u32 %s6, 4
      %s97 = int_to_ptr.hbm [resolvable:$true] %s96
      %s98 = sshll.u32 [#allocation12], 4
      %s99 = int_to_ptr.vmem [resolvable:$true] %s98
      %101 = dma.hbm_to_vmem [thread:$0]  %s97, 32, %s99, [#allocation11]
    $region29: #{discriminator_forward.1} parent=1 // pred_fallthru
      _
    // Predicated region
    $region30: #{discriminator_forward.1} parent=1 // pred_check
      _
    $region31: #{discriminator_forward.1} parent=1 // pred_check_branch
      %103 = sbr.rel (0) target = $region33
    $region32: #{discriminator_forward.1} parent=1 // pred_region
      %105 = vsyncadd [#allocation14], 0
      %s106 = sshll.u32 %s7, 4
      %s107 = int_to_ptr.hbm [resolvable:$true] %s106
      %s108 = sshll.u32 [#allocation13], 4
      %s109 = int_to_ptr.vmem [resolvable:$true] %s108
      %114 = dma.hbm_to_vmem [thread:$0]  %s107, 2048, %s109, [#allocation14], 64, 64, 4
    $region33: #{discriminator_forward.1} parent=1 // pred_fallthru
      _
    // Predicated region
    $region34: #{discriminator_forward.1} parent=1 // pred_check
      _
    $region35: #{discriminator_forward.1} parent=1 // pred_check_branch
      %116 = sbr.rel (0) target = $region37
    $region36: #{discriminator_forward.1} parent=1 // pred_region
      %118 = vsyncadd [#allocation14], 0
      %s120 = sshll.u32 %s8, 4
      %s121 = int_to_ptr.hbm [resolvable:$true] %s120
      %s122 = sshll.u32 [#allocation15], 4
      %s123 = int_to_ptr.vmem [resolvable:$true] %s122
      %125 = dma.hbm_to_vmem [thread:$0]  %s121, 16, %s123, [#allocation14]
    $region37: #{discriminator_forward.1} parent=1 // pred_fallthru
      _
    // Predicated region
    $region38: #{discriminator_forward.1} parent=1 // pred_check
      _
    $region39: #{discriminator_forward.1} parent=1 // pred_check_branch
      %127 = sbr.rel (0) target = $region41
    $region40: #{discriminator_forward.1} parent=1 // pred_region
      %129 = dma.done [#allocation3], 896
    $region41: #{discriminator_forward.1} parent=1 // pred_fallthru
      _
    // Predicated region
    $region42: #{discriminator_forward.1} parent=1 // pred_check
      _
    $region43: #{discriminator_forward.1} parent=1 // pred_check_branch
      %131 = sbr.rel (0) target = $region45
    $region44: #{discriminator_forward.1} parent=1 // pred_region
      %133 = dma.done [#allocation5], 50176
    $region45: #{discriminator_forward.1} parent=1 // pred_fallthru
      _
    // Predicated region
    $region46: #{discriminator_forward.1} parent=1 // pred_check
      _
    $region47: #{discriminator_forward.1} parent=1 // pred_check_branch
      %135 = sbr.rel (0) target = $region49
    $region48: #{discriminator_forward.1} parent=1 // pred_region
      %137 = dma.done [#allocation5], 128
    $region49: #{discriminator_forward.1} parent=1 // pred_fallthru
      _
    // Predicated region
    $region50: #{discriminator_forward.1} parent=1 // pred_check
      _
    $region51: #{discriminator_forward.1} parent=1 // pred_check_branch
      %139 = sbr.rel (0) target = $region53
    $region52: #{discriminator_forward.1} parent=1 // pred_region
      %141 = dma.done [#allocation8], 32768
    $region53: #{discriminator_forward.1} parent=1 // pred_fallthru
      _
    // Predicated region
    $region54: #{discriminator_forward.1} parent=1 // pred_check
      _
    $region55: #{discriminator_forward.1} parent=1 // pred_check_branch
      %143 = sbr.rel (0) target = $region57
    $region56: #{discriminator_forward.1} parent=1 // pred_region
      %145 = dma.done [#allocation8], 64
    $region57: #{discriminator_forward.1} parent=1 // pred_fallthru
      _
    // Predicated region
    $region58: #{discriminator_forward.1} parent=1 // pred_check
      _
    $region59: #{discriminator_forward.1} parent=1 // pred_check_branch
      %147 = sbr.rel (0) target = $region61
    $region60: #{discriminator_forward.1} parent=1 // pred_region
      %149 = dma.done [#allocation11], 8192
    $region61: #{discriminator_forward.1} parent=1 // pred_fallthru
      _
    // Predicated region
    $region62: #{discriminator_forward.1} parent=1 // pred_check
      _
    $region63: #{discriminator_forward.1} parent=1 // pred_check_branch
      %151 = sbr.rel (0) target = $region65
    $region64: #{discriminator_forward.1} parent=1 // pred_region
      %153 = dma.done [#allocation11], 32
    $region65: #{discriminator_forward.1} parent=1 // pred_fallthru
      _
    // Predicated region
    $region66: #{discriminator_forward.1} parent=1 // pred_check
      _
    $region67: #{discriminator_forward.1} parent=1 // pred_check_branch
      %155 = sbr.rel (0) target = $region69
    $region68: #{discriminator_forward.1} parent=1 // pred_region
      %157 = dma.done [#allocation14], 2048
    $region69: #{discriminator_forward.1} parent=1 // pred_fallthru
      _
    // Predicated region
    $region70: #{discriminator_forward.1} parent=1 // pred_check
      _
    $region71: #{discriminator_forward.1} parent=1 // pred_check_branch
      %159 = sbr.rel (0) target = $region73
    $region72: #{discriminator_forward.1} parent=1 // pred_region
      %161 = dma.done [#allocation14], 16
    $region73: #{discriminator_forward.1} parent=1 // pred_fallthru
      _
    %v163 = vld [vmem:[#allocation2] sm:$0xff]
    %v164 = vld [vmem:[#allocation2 + $0x8] sm:$0xff]
    %v165 = vld [vmem:[#allocation2 + $0x10] sm:$0xff]
    %v166 = vld [vmem:[#allocation2 + $0x18] sm:$0xff]
    %v167 = vld [vmem:[#allocation2 + $0x20] sm:$0xff]
    %v168 = vld [vmem:[#allocation2 + $0x28] sm:$0xff]
    %v169 = vld [vmem:[#allocation2 + $0x30] sm:$0xff]
    %v170 = vpack.c.bf16 %v163, %v163
    %v171 = vpack.c.bf16 %v164, %v164
    %v172 = vpack.c.bf16 %v165, %v165
    %v173 = vpack.c.bf16 %v166, %v166
    %v174 = vpack.c.bf16 %v167, %v167
    %v175 = vpack.c.bf16 %v168, %v168
    %v176 = vpack.c.bf16 %v169, %v169
    %v177 = vld [vmem:[#allocation4] sm:$0xff]
    %v178 = vld [vmem:[#allocation4 + $0x8] sm:$0xff]
    %v179 = vld [vmem:[#allocation4 + $0x10] sm:$0xff]
    %v180 = vld [vmem:[#allocation4 + $0x18] sm:$0xff]
    %v181 = vld [vmem:[#allocation4 + $0x20] sm:$0xff]
    %v182 = vld [vmem:[#allocation4 + $0x28] sm:$0xff]
    %v183 = vld [vmem:[#allocation4 + $0x30] sm:$0xff]
    %v184 = vld [vmem:[#allocation4 + $0x38] sm:$0xff]
    %v185 = vld [vmem:[#allocation4 + $0x40] sm:$0xff]
    %v186 = vld [vmem:[#allocation4 + $0x48] sm:$0xff]
    %v187 = vld [vmem:[#allocation4 + $0x50] sm:$0xff]
    %v188 = vld [vmem:[#allocation4 + $0x58] sm:$0xff]
    %v189 = vld [vmem:[#allocation4 + $0x60] sm:$0xff]
    %v190 = vld [vmem:[#allocation4 + $0x68] sm:$0xff]
    %v191 = vld [vmem:[#allocation4 + $0x70] sm:$0xff]
    %v192 = vld [vmem:[#allocation4 + $0x78] sm:$0xff]
    %v193 = vld [vmem:[#allocation4 + $0x80] sm:$0xff]
    %v194 = vld [vmem:[#allocation4 + $0x88] sm:$0xff]
    %v195 = vld [vmem:[#allocation4 + $0x90] sm:$0xff]
    %v196 = vld [vmem:[#allocation4 + $0x98] sm:$0xff]
    %v197 = vld [vmem:[#allocation4 + $0xa0] sm:$0xff]
    %v198 = vld [vmem:[#allocation4 + $0xa8] sm:$0xff]
    %v199 = vld [vmem:[#allocation4 + $0xb0] sm:$0xff]
    %v200 = vld [vmem:[#allocation4 + $0xb8] sm:$0xff]
    %v201 = vld [vmem:[#allocation4 + $0xc0] sm:$0xff]
    %v202 = vld [vmem:[#allocation4 + $0xc8] sm:$0xff]
    %v203 = vld [vmem:[#allocation4 + $0xd0] sm:$0xff]
    %v204 = vld [vmem:[#allocation4 + $0xd8] sm:$0xff]
    %v205 = vld [vmem:[#allocation4 + $0xe0] sm:$0xff]
    %v206 = vld [vmem:[#allocation4 + $0xe8] sm:$0xff]
    %v207 = vld [vmem:[#allocation4 + $0xf0] sm:$0xff]
    %v208 = vld [vmem:[#allocation4 + $0xf8] sm:$0xff]
    %v209 = vld [vmem:[#allocation4 + $0x100] sm:$0xff]
    %v210 = vld [vmem:[#allocation4 + $0x108] sm:$0xff]
    %v211 = vld [vmem:[#allocation4 + $0x110] sm:$0xff]
    %v212 = vld [vmem:[#allocation4 + $0x118] sm:$0xff]
    %v213 = vld [vmem:[#allocation4 + $0x120] sm:$0xff]
    %v214 = vld [vmem:[#allocation4 + $0x128] sm:$0xff]
    %v215 = vld [vmem:[#allocation4 + $0x130] sm:$0xff]
    %v216 = vld [vmem:[#allocation4 + $0x138] sm:$0xff]
    %v217 = vld [vmem:[#allocation4 + $0x140] sm:$0xff]
    %v218 = vld [vmem:[#allocation4 + $0x148] sm:$0xff]
    %v219 = vld [vmem:[#allocation4 + $0x150] sm:$0xff]
    %v220 = vld [vmem:[#allocation4 + $0x158] sm:$0xff]
    %v221 = vld [vmem:[#allocation4 + $0x160] sm:$0xff]
    %v222 = vld [vmem:[#allocation4 + $0x168] sm:$0xff]
    %v223 = vld [vmem:[#allocation4 + $0x170] sm:$0xff]
    %v224 = vld [vmem:[#allocation4 + $0x178] sm:$0xff]
    %v225 = vld [vmem:[#allocation4 + $0x180] sm:$0xff]
    %v226 = vld [vmem:[#allocation4 + $0x188] sm:$0xff]
    %v227 = vld [vmem:[#allocation4 + $0x190] sm:$0xff]
    %v228 = vld [vmem:[#allocation4 + $0x198] sm:$0xff]
    %v229 = vld [vmem:[#allocation4 + $0x1a0] sm:$0xff]
    %v230 = vld [vmem:[#allocation4 + $0x1a8] sm:$0xff]
    %v231 = vld [vmem:[#allocation4 + $0x1b0] sm:$0xff]
    %v232 = vld [vmem:[#allocation4 + $0x1b8] sm:$0xff]
    %v233 = vld [vmem:[#allocation4 + $0x1c0] sm:$0xff]
    %v234 = vld [vmem:[#allocation4 + $0x1c8] sm:$0xff]
    %v235 = vld [vmem:[#allocation4 + $0x1d0] sm:$0xff]
    %v236 = vld [vmem:[#allocation4 + $0x1d8] sm:$0xff]
    %v237 = vld [vmem:[#allocation4 + $0x1e0] sm:$0xff]
    %v238 = vld [vmem:[#allocation4 + $0x1e8] sm:$0xff]
    %v239 = vld [vmem:[#allocation4 + $0x1f0] sm:$0xff]
    %v240 = vld [vmem:[#allocation4 + $0x1f8] sm:$0xff]
    %v241 = vld [vmem:[#allocation4 + $0x200] sm:$0xff]
    %v242 = vld [vmem:[#allocation4 + $0x208] sm:$0xff]
    %v243 = vld [vmem:[#allocation4 + $0x210] sm:$0xff]
    %v244 = vld [vmem:[#allocation4 + $0x218] sm:$0xff]
    %v245 = vld [vmem:[#allocation4 + $0x220] sm:$0xff]
    %v246 = vld [vmem:[#allocation4 + $0x228] sm:$0xff]
    %v247 = vld [vmem:[#allocation4 + $0x230] sm:$0xff]
    %v248 = vld [vmem:[#allocation4 + $0x238] sm:$0xff]
    %v249 = vld [vmem:[#allocation4 + $0x240] sm:$0xff]
    %v250 = vld [vmem:[#allocation4 + $0x248] sm:$0xff]
    %v251 = vld [vmem:[#allocation4 + $0x250] sm:$0xff]
    %v252 = vld [vmem:[#allocation4 + $0x258] sm:$0xff]
    %v253 = vld [vmem:[#allocation4 + $0x260] sm:$0xff]
    %v254 = vld [vmem:[#allocation4 + $0x268] sm:$0xff]
    %v255 = vld [vmem:[#allocation4 + $0x270] sm:$0xff]
    %v256 = vld [vmem:[#allocation4 + $0x278] sm:$0xff]
    %v257 = vld [vmem:[#allocation4 + $0x280] sm:$0xff]
    %v258 = vld [vmem:[#allocation4 + $0x288] sm:$0xff]
    %v259 = vld [vmem:[#allocation4 + $0x290] sm:$0xff]
    %v260 = vld [vmem:[#allocation4 + $0x298] sm:$0xff]
    %v261 = vld [vmem:[#allocation4 + $0x2a0] sm:$0xff]
    %v262 = vld [vmem:[#allocation4 + $0x2a8] sm:$0xff]
    %v263 = vld [vmem:[#allocation4 + $0x2b0] sm:$0xff]
    %v264 = vld [vmem:[#allocation4 + $0x2b8] sm:$0xff]
    %v265 = vld [vmem:[#allocation4 + $0x2c0] sm:$0xff]
    %v266 = vld [vmem:[#allocation4 + $0x2c8] sm:$0xff]
    %v267 = vld [vmem:[#allocation4 + $0x2d0] sm:$0xff]
    %v268 = vld [vmem:[#allocation4 + $0x2d8] sm:$0xff]
    %v269 = vld [vmem:[#allocation4 + $0x2e0] sm:$0xff]
    %v270 = vld [vmem:[#allocation4 + $0x2e8] sm:$0xff]
    %v271 = vld [vmem:[#allocation4 + $0x2f0] sm:$0xff]
    %v272 = vld [vmem:[#allocation4 + $0x2f8] sm:$0xff]
    %v273 = vld [vmem:[#allocation4 + $0x300] sm:$0xff]
    %v274 = vld [vmem:[#allocation4 + $0x308] sm:$0xff]
    %v275 = vld [vmem:[#allocation4 + $0x310] sm:$0xff]
    %v276 = vld [vmem:[#allocation4 + $0x318] sm:$0xff]
    %v277 = vld [vmem:[#allocation4 + $0x320] sm:$0xff]
    %v278 = vld [vmem:[#allocation4 + $0x328] sm:$0xff]
    %v279 = vld [vmem:[#allocation4 + $0x330] sm:$0xff]
    %v280 = vld [vmem:[#allocation4 + $0x338] sm:$0xff]
    %v281 = vld [vmem:[#allocation4 + $0x340] sm:$0xff]
    %v282 = vld [vmem:[#allocation4 + $0x348] sm:$0xff]
    %v283 = vld [vmem:[#allocation4 + $0x350] sm:$0xff]
    %v284 = vld [vmem:[#allocation4 + $0x358] sm:$0xff]
    %v285 = vld [vmem:[#allocation4 + $0x360] sm:$0xff]
    %v286 = vld [vmem:[#allocation4 + $0x368] sm:$0xff]
    %v287 = vld [vmem:[#allocation4 + $0x370] sm:$0xff]
    %v288 = vld [vmem:[#allocation4 + $0x378] sm:$0xff]
    %v289 = vld [vmem:[#allocation4 + $0x380] sm:$0xff]
    %v290 = vld [vmem:[#allocation4 + $0x388] sm:$0xff]
    %v291 = vld [vmem:[#allocation4 + $0x390] sm:$0xff]
    %v292 = vld [vmem:[#allocation4 + $0x398] sm:$0xff]
    %v293 = vld [vmem:[#allocation4 + $0x3a0] sm:$0xff]
    %v294 = vld [vmem:[#allocation4 + $0x3a8] sm:$0xff]
    %v295 = vld [vmem:[#allocation4 + $0x3b0] sm:$0xff]
    %v296 = vld [vmem:[#allocation4 + $0x3b8] sm:$0xff]
    %v297 = vld [vmem:[#allocation4 + $0x3c0] sm:$0xff]
    %v298 = vld [vmem:[#allocation4 + $0x3c8] sm:$0xff]
    %v299 = vld [vmem:[#allocation4 + $0x3d0] sm:$0xff]
    %v300 = vld [vmem:[#allocation4 + $0x3d8] sm:$0xff]
    %v301 = vld [vmem:[#allocation4 + $0x3e0] sm:$0xff]
    %v302 = vld [vmem:[#allocation4 + $0x3e8] sm:$0xff]
    %v303 = vld [vmem:[#allocation4 + $0x3f0] sm:$0xff]
    %v304 = vld [vmem:[#allocation4 + $0x3f8] sm:$0xff]
    %v305 = vld [vmem:[#allocation4 + $0x400] sm:$0xff]
    %v306 = vld [vmem:[#allocation4 + $0x408] sm:$0xff]
    %v307 = vld [vmem:[#allocation4 + $0x410] sm:$0xff]
    %v308 = vld [vmem:[#allocation4 + $0x418] sm:$0xff]
    %v309 = vld [vmem:[#allocation4 + $0x420] sm:$0xff]
    %v310 = vld [vmem:[#allocation4 + $0x428] sm:$0xff]
    %v311 = vld [vmem:[#allocation4 + $0x430] sm:$0xff]
    %v312 = vld [vmem:[#allocation4 + $0x438] sm:$0xff]
    %v313 = vld [vmem:[#allocation4 + $0x440] sm:$0xff]
    %v314 = vld [vmem:[#allocation4 + $0x448] sm:$0xff]
    %v315 = vld [vmem:[#allocation4 + $0x450] sm:$0xff]
    %v316 = vld [vmem:[#allocation4 + $0x458] sm:$0xff]
    %v317 = vld [vmem:[#allocation4 + $0x460] sm:$0xff]
    %v318 = vld [vmem:[#allocation4 + $0x468] sm:$0xff]
    %v319 = vld [vmem:[#allocation4 + $0x470] sm:$0xff]
    %v320 = vld [vmem:[#allocation4 + $0x478] sm:$0xff]
    %v321 = vld [vmem:[#allocation4 + $0x480] sm:$0xff]
    %v322 = vld [vmem:[#allocation4 + $0x488] sm:$0xff]
    %v323 = vld [vmem:[#allocation4 + $0x490] sm:$0xff]
    %v324 = vld [vmem:[#allocation4 + $0x498] sm:$0xff]
    %v325 = vld [vmem:[#allocation4 + $0x4a0] sm:$0xff]
    %v326 = vld [vmem:[#allocation4 + $0x4a8] sm:$0xff]
    %v327 = vld [vmem:[#allocation4 + $0x4b0] sm:$0xff]
    %v328 = vld [vmem:[#allocation4 + $0x4b8] sm:$0xff]
    %v329 = vld [vmem:[#allocation4 + $0x4c0] sm:$0xff]
    %v330 = vld [vmem:[#allocation4 + $0x4c8] sm:$0xff]
    %v331 = vld [vmem:[#allocation4 + $0x4d0] sm:$0xff]
    %v332 = vld [vmem:[#allocation4 + $0x4d8] sm:$0xff]
    %v333 = vld [vmem:[#allocation4 + $0x4e0] sm:$0xff]
    %v334 = vld [vmem:[#allocation4 + $0x4e8] sm:$0xff]
    %v335 = vld [vmem:[#allocation4 + $0x4f0] sm:$0xff]
    %v336 = vld [vmem:[#allocation4 + $0x4f8] sm:$0xff]
    %v337 = vld [vmem:[#allocation4 + $0x500] sm:$0xff]
    %v338 = vld [vmem:[#allocation4 + $0x508] sm:$0xff]
    %v339 = vld [vmem:[#allocation4 + $0x510] sm:$0xff]
    %v340 = vld [vmem:[#allocation4 + $0x518] sm:$0xff]
    %v341 = vld [vmem:[#allocation4 + $0x520] sm:$0xff]
    %v342 = vld [vmem:[#allocation4 + $0x528] sm:$0xff]
    %v343 = vld [vmem:[#allocation4 + $0x530] sm:$0xff]
    %v344 = vld [vmem:[#allocation4 + $0x538] sm:$0xff]
    %v345 = vld [vmem:[#allocation4 + $0x540] sm:$0xff]
    %v346 = vld [vmem:[#allocation4 + $0x548] sm:$0xff]
    %v347 = vld [vmem:[#allocation4 + $0x550] sm:$0xff]
    %v348 = vld [vmem:[#allocation4 + $0x558] sm:$0xff]
    %v349 = vld [vmem:[#allocation4 + $0x560] sm:$0xff]
    %v350 = vld [vmem:[#allocation4 + $0x568] sm:$0xff]
    %v351 = vld [vmem:[#allocation4 + $0x570] sm:$0xff]
    %v352 = vld [vmem:[#allocation4 + $0x578] sm:$0xff]
    %v353 = vld [vmem:[#allocation4 + $0x580] sm:$0xff]
    %v354 = vld [vmem:[#allocation4 + $0x588] sm:$0xff]
    %v355 = vld [vmem:[#allocation4 + $0x590] sm:$0xff]
    %v356 = vld [vmem:[#allocation4 + $0x598] sm:$0xff]
    %v357 = vld [vmem:[#allocation4 + $0x5a0] sm:$0xff]
    %v358 = vld [vmem:[#allocation4 + $0x5a8] sm:$0xff]
    %v359 = vld [vmem:[#allocation4 + $0x5b0] sm:$0xff]
    %v360 = vld [vmem:[#allocation4 + $0x5b8] sm:$0xff]
    %v361 = vld [vmem:[#allocation4 + $0x5c0] sm:$0xff]
    %v362 = vld [vmem:[#allocation4 + $0x5c8] sm:$0xff]
    %v363 = vld [vmem:[#allocation4 + $0x5d0] sm:$0xff]
    %v364 = vld [vmem:[#allocation4 + $0x5d8] sm:$0xff]
    %v365 = vld [vmem:[#allocation4 + $0x5e0] sm:$0xff]
    %v366 = vld [vmem:[#allocation4 + $0x5e8] sm:$0xff]
    %v367 = vld [vmem:[#allocation4 + $0x5f0] sm:$0xff]
    %v368 = vld [vmem:[#allocation4 + $0x5f8] sm:$0xff]
    %v369 = vld [vmem:[#allocation4 + $0x600] sm:$0xff]
    %v370 = vld [vmem:[#allocation4 + $0x608] sm:$0xff]
    %v371 = vld [vmem:[#allocation4 + $0x610] sm:$0xff]
    %v372 = vld [vmem:[#allocation4 + $0x618] sm:$0xff]
    %v373 = vld [vmem:[#allocation4 + $0x620] sm:$0xff]
    %v374 = vld [vmem:[#allocation4 + $0x628] sm:$0xff]
    %v375 = vld [vmem:[#allocation4 + $0x630] sm:$0xff]
    %v376 = vld [vmem:[#allocation4 + $0x638] sm:$0xff]
    %v377 = vld [vmem:[#allocation4 + $0x640] sm:$0xff]
    %v378 = vld [vmem:[#allocation4 + $0x648] sm:$0xff]
    %v379 = vld [vmem:[#allocation4 + $0x650] sm:$0xff]
    %v380 = vld [vmem:[#allocation4 + $0x658] sm:$0xff]
    %v381 = vld [vmem:[#allocation4 + $0x660] sm:$0xff]
    %v382 = vld [vmem:[#allocation4 + $0x668] sm:$0xff]
    %v383 = vld [vmem:[#allocation4 + $0x670] sm:$0xff]
    %v384 = vld [vmem:[#allocation4 + $0x678] sm:$0xff]
    %v385 = vld [vmem:[#allocation4 + $0x680] sm:$0xff]
    %v386 = vld [vmem:[#allocation4 + $0x688] sm:$0xff]
    %v387 = vld [vmem:[#allocation4 + $0x690] sm:$0xff]
    %v388 = vld [vmem:[#allocation4 + $0x698] sm:$0xff]
    %v389 = vld [vmem:[#allocation4 + $0x6a0] sm:$0xff]
    %v390 = vld [vmem:[#allocation4 + $0x6a8] sm:$0xff]
    %v391 = vld [vmem:[#allocation4 + $0x6b0] sm:$0xff]
    %v392 = vld [vmem:[#allocation4 + $0x6b8] sm:$0xff]
    %v393 = vld [vmem:[#allocation4 + $0x6c0] sm:$0xff]
    %v394 = vld [vmem:[#allocation4 + $0x6c8] sm:$0xff]
    %v395 = vld [vmem:[#allocation4 + $0x6d0] sm:$0xff]
    %v396 = vld [vmem:[#allocation4 + $0x6d8] sm:$0xff]
    %v397 = vld [vmem:[#allocation4 + $0x6e0] sm:$0xff]
    %v398 = vld [vmem:[#allocation4 + $0x6e8] sm:$0xff]
    %v399 = vld [vmem:[#allocation4 + $0x6f0] sm:$0xff]
    %v400 = vld [vmem:[#allocation4 + $0x6f8] sm:$0xff]
    %v401 = vld [vmem:[#allocation4 + $0x700] sm:$0xff]
    %v402 = vld [vmem:[#allocation4 + $0x708] sm:$0xff]
    %v403 = vld [vmem:[#allocation4 + $0x710] sm:$0xff]
    %v404 = vld [vmem:[#allocation4 + $0x718] sm:$0xff]
    %v405 = vld [vmem:[#allocation4 + $0x720] sm:$0xff]
    %v406 = vld [vmem:[#allocation4 + $0x728] sm:$0xff]
    %v407 = vld [vmem:[#allocation4 + $0x730] sm:$0xff]
    %v408 = vld [vmem:[#allocation4 + $0x738] sm:$0xff]
    %v409 = vld [vmem:[#allocation4 + $0x740] sm:$0xff]
    %v410 = vld [vmem:[#allocation4 + $0x748] sm:$0xff]
    %v411 = vld [vmem:[#allocation4 + $0x750] sm:$0xff]
    %v412 = vld [vmem:[#allocation4 + $0x758] sm:$0xff]
    %v413 = vld [vmem:[#allocation4 + $0x760] sm:$0xff]
    %v414 = vld [vmem:[#allocation4 + $0x768] sm:$0xff]
    %v415 = vld [vmem:[#allocation4 + $0x770] sm:$0xff]
    %v416 = vld [vmem:[#allocation4 + $0x778] sm:$0xff]
    %v417 = vld [vmem:[#allocation4 + $0x780] sm:$0xff]
    %v418 = vld [vmem:[#allocation4 + $0x788] sm:$0xff]
    %v419 = vld [vmem:[#allocation4 + $0x790] sm:$0xff]
    %v420 = vld [vmem:[#allocation4 + $0x798] sm:$0xff]
    %v421 = vld [vmem:[#allocation4 + $0x7a0] sm:$0xff]
    %v422 = vld [vmem:[#allocation4 + $0x7a8] sm:$0xff]
    %v423 = vld [vmem:[#allocation4 + $0x7b0] sm:$0xff]
    %v424 = vld [vmem:[#allocation4 + $0x7b8] sm:$0xff]
    %v425 = vld [vmem:[#allocation4 + $0x7c0] sm:$0xff]
    %v426 = vld [vmem:[#allocation4 + $0x7c8] sm:$0xff]
    %v427 = vld [vmem:[#allocation4 + $0x7d0] sm:$0xff]
    %v428 = vld [vmem:[#allocation4 + $0x7d8] sm:$0xff]
    %v429 = vld [vmem:[#allocation4 + $0x7e0] sm:$0xff]
    %v430 = vld [vmem:[#allocation4 + $0x7e8] sm:$0xff]
    %v431 = vld [vmem:[#allocation4 + $0x7f0] sm:$0xff]
    %v432 = vld [vmem:[#allocation4 + $0x7f8] sm:$0xff]
    %v433 = vld [vmem:[#allocation4 + $0x800] sm:$0xff]
    %v434 = vld [vmem:[#allocation4 + $0x808] sm:$0xff]
    %v435 = vld [vmem:[#allocation4 + $0x810] sm:$0xff]
    %v436 = vld [vmem:[#allocation4 + $0x818] sm:$0xff]
    %v437 = vld [vmem:[#allocation4 + $0x820] sm:$0xff]
    %v438 = vld [vmem:[#allocation4 + $0x828] sm:$0xff]
    %v439 = vld [vmem:[#allocation4 + $0x830] sm:$0xff]
    %v440 = vld [vmem:[#allocation4 + $0x838] sm:$0xff]
    %v441 = vld [vmem:[#allocation4 + $0x840] sm:$0xff]
    %v442 = vld [vmem:[#allocation4 + $0x848] sm:$0xff]
    %v443 = vld [vmem:[#allocation4 + $0x850] sm:$0xff]
    %v444 = vld [vmem:[#allocation4 + $0x858] sm:$0xff]
    %v445 = vld [vmem:[#allocation4 + $0x860] sm:$0xff]
    %v446 = vld [vmem:[#allocation4 + $0x868] sm:$0xff]
    %v447 = vld [vmem:[#allocation4 + $0x870] sm:$0xff]
    %v448 = vld [vmem:[#allocation4 + $0x878] sm:$0xff]
    %v449 = vld [vmem:[#allocation4 + $0x880] sm:$0xff]
    %v450 = vld [vmem:[#allocation4 + $0x888] sm:$0xff]
    %v451 = vld [vmem:[#allocation4 + $0x890] sm:$0xff]
    %v452 = vld [vmem:[#allocation4 + $0x898] sm:$0xff]
    %v453 = vld [vmem:[#allocation4 + $0x8a0] sm:$0xff]
    %v454 = vld [vmem:[#allocation4 + $0x8a8] sm:$0xff]
    %v455 = vld [vmem:[#allocation4 + $0x8b0] sm:$0xff]
    %v456 = vld [vmem:[#allocation4 + $0x8b8] sm:$0xff]
    %v457 = vld [vmem:[#allocation4 + $0x8c0] sm:$0xff]
    %v458 = vld [vmem:[#allocation4 + $0x8c8] sm:$0xff]
    %v459 = vld [vmem:[#allocation4 + $0x8d0] sm:$0xff]
    %v460 = vld [vmem:[#allocation4 + $0x8d8] sm:$0xff]
    %v461 = vld [vmem:[#allocation4 + $0x8e0] sm:$0xff]
    %v462 = vld [vmem:[#allocation4 + $0x8e8] sm:$0xff]
    %v463 = vld [vmem:[#allocation4 + $0x8f0] sm:$0xff]
    %v464 = vld [vmem:[#allocation4 + $0x8f8] sm:$0xff]
    %v465 = vld [vmem:[#allocation4 + $0x900] sm:$0xff]
    %v466 = vld [vmem:[#allocation4 + $0x908] sm:$0xff]
    %v467 = vld [vmem:[#allocation4 + $0x910] sm:$0xff]
    %v468 = vld [vmem:[#allocation4 + $0x918] sm:$0xff]
    %v469 = vld [vmem:[#allocation4 + $0x920] sm:$0xff]
    %v470 = vld [vmem:[#allocation4 + $0x928] sm:$0xff]
    %v471 = vld [vmem:[#allocation4 + $0x930] sm:$0xff]
    %v472 = vld [vmem:[#allocation4 + $0x938] sm:$0xff]
    %v473 = vld [vmem:[#allocation4 + $0x940] sm:$0xff]
    %v474 = vld [vmem:[#allocation4 + $0x948] sm:$0xff]
    %v475 = vld [vmem:[#allocation4 + $0x950] sm:$0xff]
    %v476 = vld [vmem:[#allocation4 + $0x958] sm:$0xff]
    %v477 = vld [vmem:[#allocation4 + $0x960] sm:$0xff]
    %v478 = vld [vmem:[#allocation4 + $0x968] sm:$0xff]
    %v479 = vld [vmem:[#allocation4 + $0x970] sm:$0xff]
    %v480 = vld [vmem:[#allocation4 + $0x978] sm:$0xff]
    %v481 = vld [vmem:[#allocation4 + $0x980] sm:$0xff]
    %v482 = vld [vmem:[#allocation4 + $0x988] sm:$0xff]
    %v483 = vld [vmem:[#allocation4 + $0x990] sm:$0xff]
    %v484 = vld [vmem:[#allocation4 + $0x998] sm:$0xff]
    %v485 = vld [vmem:[#allocation4 + $0x9a0] sm:$0xff]
    %v486 = vld [vmem:[#allocation4 + $0x9a8] sm:$0xff]
    %v487 = vld [vmem:[#allocation4 + $0x9b0] sm:$0xff]
    %v488 = vld [vmem:[#allocation4 + $0x9b8] sm:$0xff]
    %v489 = vld [vmem:[#allocation4 + $0x9c0] sm:$0xff]
    %v490 = vld [vmem:[#allocation4 + $0x9c8] sm:$0xff]
    %v491 = vld [vmem:[#allocation4 + $0x9d0] sm:$0xff]
    %v492 = vld [vmem:[#allocation4 + $0x9d8] sm:$0xff]
    %v493 = vld [vmem:[#allocation4 + $0x9e0] sm:$0xff]
    %v494 = vld [vmem:[#allocation4 + $0x9e8] sm:$0xff]
    %v495 = vld [vmem:[#allocation4 + $0x9f0] sm:$0xff]
    %v496 = vld [vmem:[#allocation4 + $0x9f8] sm:$0xff]
    %v497 = vld [vmem:[#allocation4 + $0xa00] sm:$0xff]
    %v498 = vld [vmem:[#allocation4 + $0xa08] sm:$0xff]
    %v499 = vld [vmem:[#allocation4 + $0xa10] sm:$0xff]
    %v500 = vld [vmem:[#allocation4 + $0xa18] sm:$0xff]
    %v501 = vld [vmem:[#allocation4 + $0xa20] sm:$0xff]
    %v502 = vld [vmem:[#allocation4 + $0xa28] sm:$0xff]
    %v503 = vld [vmem:[#allocation4 + $0xa30] sm:$0xff]
    %v504 = vld [vmem:[#allocation4 + $0xa38] sm:$0xff]
    %v505 = vld [vmem:[#allocation4 + $0xa40] sm:$0xff]
    %v506 = vld [vmem:[#allocation4 + $0xa48] sm:$0xff]
    %v507 = vld [vmem:[#allocation4 + $0xa50] sm:$0xff]
    %v508 = vld [vmem:[#allocation4 + $0xa58] sm:$0xff]
    %v509 = vld [vmem:[#allocation4 + $0xa60] sm:$0xff]
    %v510 = vld [vmem:[#allocation4 + $0xa68] sm:$0xff]
    %v511 = vld [vmem:[#allocation4 + $0xa70] sm:$0xff]
    %v512 = vld [vmem:[#allocation4 + $0xa78] sm:$0xff]
    %v513 = vld [vmem:[#allocation4 + $0xa80] sm:$0xff]
    %v514 = vld [vmem:[#allocation4 + $0xa88] sm:$0xff]
    %v515 = vld [vmem:[#allocation4 + $0xa90] sm:$0xff]
    %v516 = vld [vmem:[#allocation4 + $0xa98] sm:$0xff]
    %v517 = vld [vmem:[#allocation4 + $0xaa0] sm:$0xff]
    %v518 = vld [vmem:[#allocation4 + $0xaa8] sm:$0xff]
    %v519 = vld [vmem:[#allocation4 + $0xab0] sm:$0xff]
    %v520 = vld [vmem:[#allocation4 + $0xab8] sm:$0xff]
    %v521 = vld [vmem:[#allocation4 + $0xac0] sm:$0xff]
    %v522 = vld [vmem:[#allocation4 + $0xac8] sm:$0xff]
    %v523 = vld [vmem:[#allocation4 + $0xad0] sm:$0xff]
    %v524 = vld [vmem:[#allocation4 + $0xad8] sm:$0xff]
    %v525 = vld [vmem:[#allocation4 + $0xae0] sm:$0xff]
    %v526 = vld [vmem:[#allocation4 + $0xae8] sm:$0xff]
    %v527 = vld [vmem:[#allocation4 + $0xaf0] sm:$0xff]
    %v528 = vld [vmem:[#allocation4 + $0xaf8] sm:$0xff]
    %v529 = vld [vmem:[#allocation4 + $0xb00] sm:$0xff]
    %v530 = vld [vmem:[#allocation4 + $0xb08] sm:$0xff]
    %v531 = vld [vmem:[#allocation4 + $0xb10] sm:$0xff]
    %v532 = vld [vmem:[#allocation4 + $0xb18] sm:$0xff]
    %v533 = vld [vmem:[#allocation4 + $0xb20] sm:$0xff]
    %v534 = vld [vmem:[#allocation4 + $0xb28] sm:$0xff]
    %v535 = vld [vmem:[#allocation4 + $0xb30] sm:$0xff]
    %v536 = vld [vmem:[#allocation4 + $0xb38] sm:$0xff]
    %v537 = vld [vmem:[#allocation4 + $0xb40] sm:$0xff]
    %v538 = vld [vmem:[#allocation4 + $0xb48] sm:$0xff]
    %v539 = vld [vmem:[#allocation4 + $0xb50] sm:$0xff]
    %v540 = vld [vmem:[#allocation4 + $0xb58] sm:$0xff]
    %v541 = vld [vmem:[#allocation4 + $0xb60] sm:$0xff]
    %v542 = vld [vmem:[#allocation4 + $0xb68] sm:$0xff]
    %v543 = vld [vmem:[#allocation4 + $0xb70] sm:$0xff]
    %v544 = vld [vmem:[#allocation4 + $0xb78] sm:$0xff]
    %v545 = vld [vmem:[#allocation4 + $0xb80] sm:$0xff]
    %v546 = vld [vmem:[#allocation4 + $0xb88] sm:$0xff]
    %v547 = vld [vmem:[#allocation4 + $0xb90] sm:$0xff]
    %v548 = vld [vmem:[#allocation4 + $0xb98] sm:$0xff]
    %v549 = vld [vmem:[#allocation4 + $0xba0] sm:$0xff]
    %v550 = vld [vmem:[#allocation4 + $0xba8] sm:$0xff]
    %v551 = vld [vmem:[#allocation4 + $0xbb0] sm:$0xff]
    %v552 = vld [vmem:[#allocation4 + $0xbb8] sm:$0xff]
    %v553 = vld [vmem:[#allocation4 + $0xbc0] sm:$0xff]
    %v554 = vld [vmem:[#allocation4 + $0xbc8] sm:$0xff]
    %v555 = vld [vmem:[#allocation4 + $0xbd0] sm:$0xff]
    %v556 = vld [vmem:[#allocation4 + $0xbd8] sm:$0xff]
    %v557 = vld [vmem:[#allocation4 + $0xbe0] sm:$0xff]
    %v558 = vld [vmem:[#allocation4 + $0xbe8] sm:$0xff]
    %v559 = vld [vmem:[#allocation4 + $0xbf0] sm:$0xff]
    %v560 = vld [vmem:[#allocation4 + $0xbf8] sm:$0xff]
    %v561 = vld [vmem:[#allocation4 + $0xc00] sm:$0xff]
    %v562 = vld [vmem:[#allocation4 + $0xc08] sm:$0xff]
    %v563 = vld [vmem:[#allocation4 + $0xc10] sm:$0xff]
    %v564 = vld [vmem:[#allocation4 + $0xc18] sm:$0xff]
    %v565 = vld [vmem:[#allocation4 + $0xc20] sm:$0xff]
    %v566 = vld [vmem:[#allocation4 + $0xc28] sm:$0xff]
    %v567 = vld [vmem:[#allocation4 + $0xc30] sm:$0xff]
    %v568 = vld [vmem:[#allocation4 + $0xc38] sm:$0xff]
    %v569 = vld [vmem:[#allocation6] sm:$0xff]
    %v571 = vperm.slane %v569, 0
    %v572 = vperm.slane %v569, 1
    %v573 = vperm.slane %v569, 2
    %v574 = vperm.slane %v569, 3
    %v575 = vperm.slane %v569, 4
    %v576 = vperm.slane %v569, 5
    %v577 = vperm.slane %v569, 6
    %v578 = vperm.slane %v569, 7
    %v979 = vunpack.c.l.b16 %v177
    %v980 = vunpack.c.h.b16 %v177
    %v981 = vunpack.c.l.b16 %v178
    %v982 = vunpack.c.h.b16 %v178
    %v983 = vunpack.c.l.b16 %v179
    %v984 = vunpack.c.h.b16 %v179
    %v985 = vunpack.c.l.b16 %v180
    %v986 = vunpack.c.h.b16 %v180
    %v987 = vunpack.c.l.b16 %v181
    %v988 = vunpack.c.h.b16 %v181
    %v989 = vunpack.c.l.b16 %v182
    %v990 = vunpack.c.h.b16 %v182
    %v991 = vunpack.c.l.b16 %v183
    %v992 = vunpack.c.h.b16 %v183
    %v993 = vunpack.c.l.b16 %v184
    %v994 = vunpack.c.h.b16 %v184
    %v995 = vunpack.c.l.b16 %v185
    %v996 = vunpack.c.h.b16 %v185
    %v997 = vunpack.c.l.b16 %v186
    %v998 = vunpack.c.h.b16 %v186
    %v999 = vunpack.c.l.b16 %v187
    %v1000 = vunpack.c.h.b16 %v187
    %v1001 = vunpack.c.l.b16 %v188
    %v1002 = vunpack.c.h.b16 %v188
    %v1003 = vunpack.c.l.b16 %v189
    %v1004 = vunpack.c.h.b16 %v189
    %v1005 = vunpack.c.l.b16 %v190
    %v1006 = vunpack.c.h.b16 %v190
    %v1007 = vunpack.c.l.b16 %v191
    %v1008 = vunpack.c.h.b16 %v191
    %v1009 = vunpack.c.l.b16 %v192
    %v1010 = vunpack.c.h.b16 %v192
    %v1011 = vunpack.c.l.b16 %v193
    %v1012 = vunpack.c.h.b16 %v193
    %v1013 = vunpack.c.l.b16 %v194
    %v1014 = vunpack.c.h.b16 %v194
    %v1015 = vunpack.c.l.b16 %v195
    %v1016 = vunpack.c.h.b16 %v195
    %v1017 = vunpack.c.l.b16 %v196
    %v1018 = vunpack.c.h.b16 %v196
    %v1019 = vunpack.c.l.b16 %v197
    %v1020 = vunpack.c.h.b16 %v197
    %v1021 = vunpack.c.l.b16 %v198
    %v1022 = vunpack.c.h.b16 %v198
    %v1023 = vunpack.c.l.b16 %v199
    %v1024 = vunpack.c.h.b16 %v199
    %v1025 = vunpack.c.l.b16 %v200
    %v1026 = vunpack.c.h.b16 %v200
    %v1027 = vunpack.c.l.b16 %v201
    %v1028 = vunpack.c.h.b16 %v201
    %v1029 = vunpack.c.l.b16 %v202
    %v1030 = vunpack.c.h.b16 %v202
    %v1031 = vunpack.c.l.b16 %v203
    %v1032 = vunpack.c.h.b16 %v203
    %v1033 = vunpack.c.l.b16 %v204
    %v1034 = vunpack.c.h.b16 %v204
    %v1035 = vunpack.c.l.b16 %v205
    %v1036 = vunpack.c.h.b16 %v205
    %v1037 = vunpack.c.l.b16 %v206
    %v1038 = vunpack.c.h.b16 %v206
    %v1039 = vunpack.c.l.b16 %v207
    %v1040 = vunpack.c.h.b16 %v207
    %v1041 = vunpack.c.l.b16 %v208
    %v1042 = vunpack.c.h.b16 %v208
    %v1043 = vunpack.c.l.b16 %v209
    %v1044 = vunpack.c.h.b16 %v209
    %v1045 = vunpack.c.l.b16 %v210
    %v1046 = vunpack.c.h.b16 %v210
    %v1047 = vunpack.c.l.b16 %v211
    %v1048 = vunpack.c.h.b16 %v211
    %v1049 = vunpack.c.l.b16 %v212
    %v1050 = vunpack.c.h.b16 %v212
    %v1051 = vunpack.c.l.b16 %v213
    %v1052 = vunpack.c.h.b16 %v213
    %v1053 = vunpack.c.l.b16 %v214
    %v1054 = vunpack.c.h.b16 %v214
    %v1055 = vunpack.c.l.b16 %v215
    %v1056 = vunpack.c.h.b16 %v215
    %v1057 = vunpack.c.l.b16 %v216
    %v1058 = vunpack.c.h.b16 %v216
    %v1059 = vunpack.c.l.b16 %v217
    %v1060 = vunpack.c.h.b16 %v217
    %v1061 = vunpack.c.l.b16 %v218
    %v1062 = vunpack.c.h.b16 %v218
    %v1063 = vunpack.c.l.b16 %v219
    %v1064 = vunpack.c.h.b16 %v219
    %v1065 = vunpack.c.l.b16 %v220
    %v1066 = vunpack.c.h.b16 %v220
    %v1067 = vunpack.c.l.b16 %v221
    %v1068 = vunpack.c.h.b16 %v221
    %v1069 = vunpack.c.l.b16 %v222
    %v1070 = vunpack.c.h.b16 %v222
    %v1071 = vunpack.c.l.b16 %v223
    %v1072 = vunpack.c.h.b16 %v223
    %v1073 = vunpack.c.l.b16 %v224
    %v1074 = vunpack.c.h.b16 %v224
    %v1075 = vunpack.c.l.b16 %v225
    %v1076 = vunpack.c.h.b16 %v225
    %v1077 = vunpack.c.l.b16 %v226
    %v1078 = vunpack.c.h.b16 %v226
    %v1079 = vunpack.c.l.b16 %v227
    %v1080 = vunpack.c.h.b16 %v227
    %v1081 = vunpack.c.l.b16 %v228
    %v1082 = vunpack.c.h.b16 %v228
    %v1083 = vunpack.c.l.b16 %v229
    %v1084 = vunpack.c.h.b16 %v229
    %v1085 = vunpack.c.l.b16 %v230
    %v1086 = vunpack.c.h.b16 %v230
    %v1087 = vunpack.c.l.b16 %v231
    %v1088 = vunpack.c.h.b16 %v231
    %v1089 = vunpack.c.l.b16 %v232
    %v1090 = vunpack.c.h.b16 %v232
    %v1091 = vunpack.c.l.b16 %v233
    %v1092 = vunpack.c.h.b16 %v233
    %v1093 = vunpack.c.l.b16 %v234
    %v1094 = vunpack.c.h.b16 %v234
    %v1095 = vunpack.c.l.b16 %v235
    %v1096 = vunpack.c.h.b16 %v235
    %v1097 = vunpack.c.l.b16 %v236
    %v1098 = vunpack.c.h.b16 %v236
    %v1099 = vunpack.c.l.b16 %v237
    %v1100 = vunpack.c.h.b16 %v237
    %v1101 = vunpack.c.l.b16 %v238
    %v1102 = vunpack.c.h.b16 %v238
    %v1103 = vunpack.c.l.b16 %v239
    %v1104 = vunpack.c.h.b16 %v239
    %v1105 = vunpack.c.l.b16 %v240
    %v1106 = vunpack.c.h.b16 %v240
    %v1107 = vunpack.c.l.b16 %v241
    %v1108 = vunpack.c.h.b16 %v241
    %v1109 = vunpack.c.l.b16 %v242
    %v1110 = vunpack.c.h.b16 %v242
    %v1111 = vunpack.c.l.b16 %v243
    %v1112 = vunpack.c.h.b16 %v243
    %v1113 = vunpack.c.l.b16 %v244
    %v1114 = vunpack.c.h.b16 %v244
    %v1115 = vunpack.c.l.b16 %v245
    %v1116 = vunpack.c.h.b16 %v245
    %v1117 = vunpack.c.l.b16 %v246
    %v1118 = vunpack.c.h.b16 %v246
    %v1119 = vunpack.c.l.b16 %v247
    %v1120 = vunpack.c.h.b16 %v247
    %v1121 = vunpack.c.l.b16 %v248
    %v1122 = vunpack.c.h.b16 %v248
    %v1123 = vunpack.c.l.b16 %v249
    %v1124 = vunpack.c.h.b16 %v249
    %v1125 = vunpack.c.l.b16 %v250
    %v1126 = vunpack.c.h.b16 %v250
    %v1127 = vunpack.c.l.b16 %v251
    %v1128 = vunpack.c.h.b16 %v251
    %v1129 = vunpack.c.l.b16 %v252
    %v1130 = vunpack.c.h.b16 %v252
    %v1131 = vunpack.c.l.b16 %v253
    %v1132 = vunpack.c.h.b16 %v253
    %v1133 = vunpack.c.l.b16 %v254
    %v1134 = vunpack.c.h.b16 %v254
    %v1135 = vunpack.c.l.b16 %v255
    %v1136 = vunpack.c.h.b16 %v255
    %v1137 = vunpack.c.l.b16 %v256
    %v1138 = vunpack.c.h.b16 %v256
    %v1139 = vunpack.c.l.b16 %v257
    %v1140 = vunpack.c.h.b16 %v257
    %v1141 = vunpack.c.l.b16 %v258
    %v1142 = vunpack.c.h.b16 %v258
    %v1143 = vunpack.c.l.b16 %v259
    %v1144 = vunpack.c.h.b16 %v259
    %v1145 = vunpack.c.l.b16 %v260
    %v1146 = vunpack.c.h.b16 %v260
    %v1147 = vunpack.c.l.b16 %v261
    %v1148 = vunpack.c.h.b16 %v261
    %v1149 = vunpack.c.l.b16 %v262
    %v1150 = vunpack.c.h.b16 %v262
    %v1151 = vunpack.c.l.b16 %v263
    %v1152 = vunpack.c.h.b16 %v263
    %v1153 = vunpack.c.l.b16 %v264
    %v1154 = vunpack.c.h.b16 %v264
    %v1155 = vunpack.c.l.b16 %v265
    %v1156 = vunpack.c.h.b16 %v265
    %v1157 = vunpack.c.l.b16 %v266
    %v1158 = vunpack.c.h.b16 %v266
    %v1159 = vunpack.c.l.b16 %v267
    %v1160 = vunpack.c.h.b16 %v267
    %v1161 = vunpack.c.l.b16 %v268
    %v1162 = vunpack.c.h.b16 %v268
    %v1163 = vunpack.c.l.b16 %v269
    %v1164 = vunpack.c.h.b16 %v269
    %v1165 = vunpack.c.l.b16 %v270
    %v1166 = vunpack.c.h.b16 %v270
    %v1167 = vunpack.c.l.b16 %v271
    %v1168 = vunpack.c.h.b16 %v271
    %v1169 = vunpack.c.l.b16 %v272
    %v1170 = vunpack.c.h.b16 %v272
    %v1171 = vunpack.c.l.b16 %v273
    %v1172 = vunpack.c.h.b16 %v273
    %v1173 = vunpack.c.l.b16 %v274
    %v1174 = vunpack.c.h.b16 %v274
    %v1175 = vunpack.c.l.b16 %v275
    %v1176 = vunpack.c.h.b16 %v275
    %v1177 = vunpack.c.l.b16 %v276
    %v1178 = vunpack.c.h.b16 %v276
    %v1179 = vunpack.c.l.b16 %v277
    %v1180 = vunpack.c.h.b16 %v277
    %v1181 = vunpack.c.l.b16 %v278
    %v1182 = vunpack.c.h.b16 %v278
    %v1183 = vunpack.c.l.b16 %v279
    %v1184 = vunpack.c.h.b16 %v279
    %v1185 = vunpack.c.l.b16 %v280
    %v1186 = vunpack.c.h.b16 %v280
    %v1187 = vunpack.c.l.b16 %v281
    %v1188 = vunpack.c.h.b16 %v281
    %v1189 = vunpack.c.l.b16 %v282
    %v1190 = vunpack.c.h.b16 %v282
    %v1191 = vunpack.c.l.b16 %v283
    %v1192 = vunpack.c.h.b16 %v283
    %v1193 = vunpack.c.l.b16 %v284
    %v1194 = vunpack.c.h.b16 %v284
    %v1195 = vunpack.c.l.b16 %v285
    %v1196 = vunpack.c.h.b16 %v285
    %v1197 = vunpack.c.l.b16 %v286
    %v1198 = vunpack.c.h.b16 %v286
    %v1199 = vunpack.c.l.b16 %v287
    %v1200 = vunpack.c.h.b16 %v287
    %v1201 = vunpack.c.l.b16 %v288
    %v1202 = vunpack.c.h.b16 %v288
    %v1203 = vunpack.c.l.b16 %v289
    %v1204 = vunpack.c.h.b16 %v289
    %v1205 = vunpack.c.l.b16 %v290
    %v1206 = vunpack.c.h.b16 %v290
    %v1207 = vunpack.c.l.b16 %v291
    %v1208 = vunpack.c.h.b16 %v291
    %v1209 = vunpack.c.l.b16 %v292
    %v1210 = vunpack.c.h.b16 %v292
    %v1211 = vunpack.c.l.b16 %v293
    %v1212 = vunpack.c.h.b16 %v293
    %v1213 = vunpack.c.l.b16 %v294
    %v1214 = vunpack.c.h.b16 %v294
    %v1215 = vunpack.c.l.b16 %v295
    %v1216 = vunpack.c.h.b16 %v295
    %v1217 = vunpack.c.l.b16 %v296
    %v1218 = vunpack.c.h.b16 %v296
    %v1219 = vunpack.c.l.b16 %v297
    %v1220 = vunpack.c.h.b16 %v297
    %v1221 = vunpack.c.l.b16 %v298
    %v1222 = vunpack.c.h.b16 %v298
    %v1223 = vunpack.c.l.b16 %v299
    %v1224 = vunpack.c.h.b16 %v299
    %v1225 = vunpack.c.l.b16 %v300
    %v1226 = vunpack.c.h.b16 %v300
    %v1227 = vunpack.c.l.b16 %v301
    %v1228 = vunpack.c.h.b16 %v301
    %v1229 = vunpack.c.l.b16 %v302
    %v1230 = vunpack.c.h.b16 %v302
    %v1231 = vunpack.c.l.b16 %v303
    %v1232 = vunpack.c.h.b16 %v303
    %v1233 = vunpack.c.l.b16 %v304
    %v1234 = vunpack.c.h.b16 %v304
    %v1235 = vunpack.c.l.b16 %v305
    %v1236 = vunpack.c.h.b16 %v305
    %v1237 = vunpack.c.l.b16 %v306
    %v1238 = vunpack.c.h.b16 %v306
    %v1239 = vunpack.c.l.b16 %v307
    %v1240 = vunpack.c.h.b16 %v307
    %v1241 = vunpack.c.l.b16 %v308
    %v1242 = vunpack.c.h.b16 %v308
    %v1243 = vunpack.c.l.b16 %v309
    %v1244 = vunpack.c.h.b16 %v309
    %v1245 = vunpack.c.l.b16 %v310
    %v1246 = vunpack.c.h.b16 %v310
    %v1247 = vunpack.c.l.b16 %v311
    %v1248 = vunpack.c.h.b16 %v311
    %v1249 = vunpack.c.l.b16 %v312
    %v1250 = vunpack.c.h.b16 %v312
    %v1251 = vunpack.c.l.b16 %v313
    %v1252 = vunpack.c.h.b16 %v313
    %v1253 = vunpack.c.l.b16 %v314
    %v1254 = vunpack.c.h.b16 %v314
    %v1255 = vunpack.c.l.b16 %v315
    %v1256 = vunpack.c.h.b16 %v315
    %v1257 = vunpack.c.l.b16 %v316
    %v1258 = vunpack.c.h.b16 %v316
    %v1259 = vunpack.c.l.b16 %v317
    %v1260 = vunpack.c.h.b16 %v317
    %v1261 = vunpack.c.l.b16 %v318
    %v1262 = vunpack.c.h.b16 %v318
    %v1263 = vunpack.c.l.b16 %v319
    %v1264 = vunpack.c.h.b16 %v319
    %v1265 = vunpack.c.l.b16 %v320
    %v1266 = vunpack.c.h.b16 %v320
    %v1267 = vunpack.c.l.b16 %v321
    %v1268 = vunpack.c.h.b16 %v321
    %v1269 = vunpack.c.l.b16 %v322
    %v1270 = vunpack.c.h.b16 %v322
    %v1271 = vunpack.c.l.b16 %v323
    %v1272 = vunpack.c.h.b16 %v323
    %v1273 = vunpack.c.l.b16 %v324
    %v1274 = vunpack.c.h.b16 %v324
    %v1275 = vunpack.c.l.b16 %v325
    %v1276 = vunpack.c.h.b16 %v325
    %v1277 = vunpack.c.l.b16 %v326
    %v1278 = vunpack.c.h.b16 %v326
    %v1279 = vunpack.c.l.b16 %v327
    %v1280 = vunpack.c.h.b16 %v327
    %v1281 = vunpack.c.l.b16 %v328
    %v1282 = vunpack.c.h.b16 %v328
    %v1283 = vunpack.c.l.b16 %v329
    %v1284 = vunpack.c.h.b16 %v329
    %v1285 = vunpack.c.l.b16 %v330
    %v1286 = vunpack.c.h.b16 %v330
    %v1287 = vunpack.c.l.b16 %v331
    %v1288 = vunpack.c.h.b16 %v331
    %v1289 = vunpack.c.l.b16 %v332
    %v1290 = vunpack.c.h.b16 %v332
    %v1291 = vunpack.c.l.b16 %v333
    %v1292 = vunpack.c.h.b16 %v333
    %v1293 = vunpack.c.l.b16 %v334
    %v1294 = vunpack.c.h.b16 %v334
    %v1295 = vunpack.c.l.b16 %v335
    %v1296 = vunpack.c.h.b16 %v335
    %v1297 = vunpack.c.l.b16 %v336
    %v1298 = vunpack.c.h.b16 %v336
    %v1299 = vunpack.c.l.b16 %v337
    %v1300 = vunpack.c.h.b16 %v337
    %v1301 = vunpack.c.l.b16 %v338
    %v1302 = vunpack.c.h.b16 %v338
    %v1303 = vunpack.c.l.b16 %v339
    %v1304 = vunpack.c.h.b16 %v339
    %v1305 = vunpack.c.l.b16 %v340
    %v1306 = vunpack.c.h.b16 %v340
    %v1307 = vunpack.c.l.b16 %v341
    %v1308 = vunpack.c.h.b16 %v341
    %v1309 = vunpack.c.l.b16 %v342
    %v1310 = vunpack.c.h.b16 %v342
    %v1311 = vunpack.c.l.b16 %v343
    %v1312 = vunpack.c.h.b16 %v343
    %v1313 = vunpack.c.l.b16 %v344
    %v1314 = vunpack.c.h.b16 %v344
    %v1315 = vunpack.c.l.b16 %v345
    %v1316 = vunpack.c.h.b16 %v345
    %v1317 = vunpack.c.l.b16 %v346
    %v1318 = vunpack.c.h.b16 %v346
    %v1319 = vunpack.c.l.b16 %v347
    %v1320 = vunpack.c.h.b16 %v347
    %v1321 = vunpack.c.l.b16 %v348
    %v1322 = vunpack.c.h.b16 %v348
    %v1323 = vunpack.c.l.b16 %v349
    %v1324 = vunpack.c.h.b16 %v349
    %v1325 = vunpack.c.l.b16 %v350
    %v1326 = vunpack.c.h.b16 %v350
    %v1327 = vunpack.c.l.b16 %v351
    %v1328 = vunpack.c.h.b16 %v351
    %v1329 = vunpack.c.l.b16 %v352
    %v1330 = vunpack.c.h.b16 %v352
    %v1331 = vunpack.c.l.b16 %v353
    %v1332 = vunpack.c.h.b16 %v353
    %v1333 = vunpack.c.l.b16 %v354
    %v1334 = vunpack.c.h.b16 %v354
    %v1335 = vunpack.c.l.b16 %v355
    %v1336 = vunpack.c.h.b16 %v355
    %v1337 = vunpack.c.l.b16 %v356
    %v1338 = vunpack.c.h.b16 %v356
    %v1339 = vunpack.c.l.b16 %v357
    %v1340 = vunpack.c.h.b16 %v357
    %v1341 = vunpack.c.l.b16 %v358
    %v1342 = vunpack.c.h.b16 %v358
    %v1343 = vunpack.c.l.b16 %v359
    %v1344 = vunpack.c.h.b16 %v359
    %v1345 = vunpack.c.l.b16 %v360
    %v1346 = vunpack.c.h.b16 %v360
    %v1347 = vunpack.c.l.b16 %v361
    %v1348 = vunpack.c.h.b16 %v361
    %v1349 = vunpack.c.l.b16 %v362
    %v1350 = vunpack.c.h.b16 %v362
    %v1351 = vunpack.c.l.b16 %v363
    %v1352 = vunpack.c.h.b16 %v363
    %v1353 = vunpack.c.l.b16 %v364
    %v1354 = vunpack.c.h.b16 %v364
    %v1355 = vunpack.c.l.b16 %v365
    %v1356 = vunpack.c.h.b16 %v365
    %v1357 = vunpack.c.l.b16 %v366
    %v1358 = vunpack.c.h.b16 %v366
    %v1359 = vunpack.c.l.b16 %v367
    %v1360 = vunpack.c.h.b16 %v367
    %v1361 = vunpack.c.l.b16 %v368
    %v1362 = vunpack.c.h.b16 %v368
    %v1363 = vunpack.c.l.b16 %v369
    %v1364 = vunpack.c.h.b16 %v369
    %v1365 = vunpack.c.l.b16 %v370
    %v1366 = vunpack.c.h.b16 %v370
    %v1367 = vunpack.c.l.b16 %v371
    %v1368 = vunpack.c.h.b16 %v371
    %v1369 = vunpack.c.l.b16 %v372
    %v1370 = vunpack.c.h.b16 %v372
    %v1371 = vunpack.c.l.b16 %v373
    %v1372 = vunpack.c.h.b16 %v373
    %v1373 = vunpack.c.l.b16 %v374
    %v1374 = vunpack.c.h.b16 %v374
    %v1375 = vunpack.c.l.b16 %v375
    %v1376 = vunpack.c.h.b16 %v375
    %v1377 = vunpack.c.l.b16 %v376
    %v1378 = vunpack.c.h.b16 %v376
    %v1379 = vunpack.c.l.b16 %v377
    %v1380 = vunpack.c.h.b16 %v377
    %v1381 = vunpack.c.l.b16 %v378
    %v1382 = vunpack.c.h.b16 %v378
    %v1383 = vunpack.c.l.b16 %v379
    %v1384 = vunpack.c.h.b16 %v379
    %v1385 = vunpack.c.l.b16 %v380
    %v1386 = vunpack.c.h.b16 %v380
    %v1387 = vunpack.c.l.b16 %v381
    %v1388 = vunpack.c.h.b16 %v381
    %v1389 = vunpack.c.l.b16 %v382
    %v1390 = vunpack.c.h.b16 %v382
    %v1391 = vunpack.c.l.b16 %v383
    %v1392 = vunpack.c.h.b16 %v383
    %v1393 = vunpack.c.l.b16 %v384
    %v1394 = vunpack.c.h.b16 %v384
    %v1395 = vunpack.c.l.b16 %v385
    %v1396 = vunpack.c.h.b16 %v385
    %v1397 = vunpack.c.l.b16 %v386
    %v1398 = vunpack.c.h.b16 %v386
    %v1399 = vunpack.c.l.b16 %v387
    %v1400 = vunpack.c.h.b16 %v387
    %v1401 = vunpack.c.l.b16 %v388
    %v1402 = vunpack.c.h.b16 %v388
    %v1403 = vunpack.c.l.b16 %v389
    %v1404 = vunpack.c.h.b16 %v389
    %v1405 = vunpack.c.l.b16 %v390
    %v1406 = vunpack.c.h.b16 %v390
    %v1407 = vunpack.c.l.b16 %v391
    %v1408 = vunpack.c.h.b16 %v391
    %v1409 = vunpack.c.l.b16 %v392
    %v1410 = vunpack.c.h.b16 %v392
    %v1411 = vunpack.c.l.b16 %v393
    %v1412 = vunpack.c.h.b16 %v393
    %v1413 = vunpack.c.l.b16 %v394
    %v1414 = vunpack.c.h.b16 %v394
    %v1415 = vunpack.c.l.b16 %v395
    %v1416 = vunpack.c.h.b16 %v395
    %v1417 = vunpack.c.l.b16 %v396
    %v1418 = vunpack.c.h.b16 %v396
    %v1419 = vunpack.c.l.b16 %v397
    %v1420 = vunpack.c.h.b16 %v397
    %v1421 = vunpack.c.l.b16 %v398
    %v1422 = vunpack.c.h.b16 %v398
    %v1423 = vunpack.c.l.b16 %v399
    %v1424 = vunpack.c.h.b16 %v399
    %v1425 = vunpack.c.l.b16 %v400
    %v1426 = vunpack.c.h.b16 %v400
    %v1427 = vunpack.c.l.b16 %v401
    %v1428 = vunpack.c.h.b16 %v401
    %v1429 = vunpack.c.l.b16 %v402
    %v1430 = vunpack.c.h.b16 %v402
    %v1431 = vunpack.c.l.b16 %v403
    %v1432 = vunpack.c.h.b16 %v403
    %v1433 = vunpack.c.l.b16 %v404
    %v1434 = vunpack.c.h.b16 %v404
    %v1435 = vunpack.c.l.b16 %v405
    %v1436 = vunpack.c.h.b16 %v405
    %v1437 = vunpack.c.l.b16 %v406
    %v1438 = vunpack.c.h.b16 %v406
    %v1439 = vunpack.c.l.b16 %v407
    %v1440 = vunpack.c.h.b16 %v407
    %v1441 = vunpack.c.l.b16 %v408
    %v1442 = vunpack.c.h.b16 %v408
    %v1443 = vunpack.c.l.b16 %v409
    %v1444 = vunpack.c.h.b16 %v409
    %v1445 = vunpack.c.l.b16 %v410
    %v1446 = vunpack.c.h.b16 %v410
    %v1447 = vunpack.c.l.b16 %v411
    %v1448 = vunpack.c.h.b16 %v411
    %v1449 = vunpack.c.l.b16 %v412
    %v1450 = vunpack.c.h.b16 %v412
    %v1451 = vunpack.c.l.b16 %v413
    %v1452 = vunpack.c.h.b16 %v413
    %v1453 = vunpack.c.l.b16 %v414
    %v1454 = vunpack.c.h.b16 %v414
    %v1455 = vunpack.c.l.b16 %v415
    %v1456 = vunpack.c.h.b16 %v415
    %v1457 = vunpack.c.l.b16 %v416
    %v1458 = vunpack.c.h.b16 %v416
    %v1459 = vunpack.c.l.b16 %v417
    %v1460 = vunpack.c.h.b16 %v417
    %v1461 = vunpack.c.l.b16 %v418
    %v1462 = vunpack.c.h.b16 %v418
    %v1463 = vunpack.c.l.b16 %v419
    %v1464 = vunpack.c.h.b16 %v419
    %v1465 = vunpack.c.l.b16 %v420
    %v1466 = vunpack.c.h.b16 %v420
    %v1467 = vunpack.c.l.b16 %v421
    %v1468 = vunpack.c.h.b16 %v421
    %v1469 = vunpack.c.l.b16 %v422
    %v1470 = vunpack.c.h.b16 %v422
    %v1471 = vunpack.c.l.b16 %v423
    %v1472 = vunpack.c.h.b16 %v423
    %v1473 = vunpack.c.l.b16 %v424
    %v1474 = vunpack.c.h.b16 %v424
    %v1475 = vunpack.c.l.b16 %v425
    %v1476 = vunpack.c.h.b16 %v425
    %v1477 = vunpack.c.l.b16 %v426
    %v1478 = vunpack.c.h.b16 %v426
    %v1479 = vunpack.c.l.b16 %v427
    %v1480 = vunpack.c.h.b16 %v427
    %v1481 = vunpack.c.l.b16 %v428
    %v1482 = vunpack.c.h.b16 %v428
    %v1483 = vunpack.c.l.b16 %v429
    %v1484 = vunpack.c.h.b16 %v429
    %v1485 = vunpack.c.l.b16 %v430
    %v1486 = vunpack.c.h.b16 %v430
    %v1487 = vunpack.c.l.b16 %v431
    %v1488 = vunpack.c.h.b16 %v431
    %v1489 = vunpack.c.l.b16 %v432
    %v1490 = vunpack.c.h.b16 %v432
    %v1491 = vunpack.c.l.b16 %v433
    %v1492 = vunpack.c.h.b16 %v433
    %v1493 = vunpack.c.l.b16 %v434
    %v1494 = vunpack.c.h.b16 %v434
    %v1495 = vunpack.c.l.b16 %v435
    %v1496 = vunpack.c.h.b16 %v435
    %v1497 = vunpack.c.l.b16 %v436
    %v1498 = vunpack.c.h.b16 %v436
    %v1499 = vunpack.c.l.b16 %v437
    %v1500 = vunpack.c.h.b16 %v437
    %v1501 = vunpack.c.l.b16 %v438
    %v1502 = vunpack.c.h.b16 %v438
    %v1503 = vunpack.c.l.b16 %v439
    %v1504 = vunpack.c.h.b16 %v439
    %v1505 = vunpack.c.l.b16 %v440
    %v1506 = vunpack.c.h.b16 %v440
    %v1507 = vunpack.c.l.b16 %v441
    %v1508 = vunpack.c.h.b16 %v441
    %v1509 = vunpack.c.l.b16 %v442
    %v1510 = vunpack.c.h.b16 %v442
    %v1511 = vunpack.c.l.b16 %v443
    %v1512 = vunpack.c.h.b16 %v443
    %v1513 = vunpack.c.l.b16 %v444
    %v1514 = vunpack.c.h.b16 %v444
    %v1515 = vunpack.c.l.b16 %v445
    %v1516 = vunpack.c.h.b16 %v445
    %v1517 = vunpack.c.l.b16 %v446
    %v1518 = vunpack.c.h.b16 %v446
    %v1519 = vunpack.c.l.b16 %v447
    %v1520 = vunpack.c.h.b16 %v447
    %v1521 = vunpack.c.l.b16 %v448
    %v1522 = vunpack.c.h.b16 %v448
    %v1523 = vunpack.c.l.b16 %v449
    %v1524 = vunpack.c.h.b16 %v449
    %v1525 = vunpack.c.l.b16 %v450
    %v1526 = vunpack.c.h.b16 %v450
    %v1527 = vunpack.c.l.b16 %v451
    %v1528 = vunpack.c.h.b16 %v451
    %v1529 = vunpack.c.l.b16 %v452
    %v1530 = vunpack.c.h.b16 %v452
    %v1531 = vunpack.c.l.b16 %v453
    %v1532 = vunpack.c.h.b16 %v453
    %v1533 = vunpack.c.l.b16 %v454
    %v1534 = vunpack.c.h.b16 %v454
    %v1535 = vunpack.c.l.b16 %v455
    %v1536 = vunpack.c.h.b16 %v455
    %v1537 = vunpack.c.l.b16 %v456
    %v1538 = vunpack.c.h.b16 %v456
    %v1539 = vunpack.c.l.b16 %v457
    %v1540 = vunpack.c.h.b16 %v457
    %v1541 = vunpack.c.l.b16 %v458
    %v1542 = vunpack.c.h.b16 %v458
    %v1543 = vunpack.c.l.b16 %v459
    %v1544 = vunpack.c.h.b16 %v459
    %v1545 = vunpack.c.l.b16 %v460
    %v1546 = vunpack.c.h.b16 %v460
    %v1547 = vunpack.c.l.b16 %v461
    %v1548 = vunpack.c.h.b16 %v461
    %v1549 = vunpack.c.l.b16 %v462
    %v1550 = vunpack.c.h.b16 %v462
    %v1551 = vunpack.c.l.b16 %v463
    %v1552 = vunpack.c.h.b16 %v463
    %v1553 = vunpack.c.l.b16 %v464
    %v1554 = vunpack.c.h.b16 %v464
    %v1555 = vunpack.c.l.b16 %v465
    %v1556 = vunpack.c.h.b16 %v465
    %v1557 = vunpack.c.l.b16 %v466
    %v1558 = vunpack.c.h.b16 %v466
    %v1559 = vunpack.c.l.b16 %v467
    %v1560 = vunpack.c.h.b16 %v467
    %v1561 = vunpack.c.l.b16 %v468
    %v1562 = vunpack.c.h.b16 %v468
    %v1563 = vunpack.c.l.b16 %v469
    %v1564 = vunpack.c.h.b16 %v469
    %v1565 = vunpack.c.l.b16 %v470
    %v1566 = vunpack.c.h.b16 %v470
    %v1567 = vunpack.c.l.b16 %v471
    %v1568 = vunpack.c.h.b16 %v471
    %v1569 = vunpack.c.l.b16 %v472
    %v1570 = vunpack.c.h.b16 %v472
    %v1571 = vunpack.c.l.b16 %v473
    %v1572 = vunpack.c.h.b16 %v473
    %v1573 = vunpack.c.l.b16 %v474
    %v1574 = vunpack.c.h.b16 %v474
    %v1575 = vunpack.c.l.b16 %v475
    %v1576 = vunpack.c.h.b16 %v475
    %v1577 = vunpack.c.l.b16 %v476
    %v1578 = vunpack.c.h.b16 %v476
    %v1579 = vunpack.c.l.b16 %v477
    %v1580 = vunpack.c.h.b16 %v477
    %v1581 = vunpack.c.l.b16 %v478
    %v1582 = vunpack.c.h.b16 %v478
    %v1583 = vunpack.c.l.b16 %v479
    %v1584 = vunpack.c.h.b16 %v479
    %v1585 = vunpack.c.l.b16 %v480
    %v1586 = vunpack.c.h.b16 %v480
    %v1587 = vunpack.c.l.b16 %v481
    %v1588 = vunpack.c.h.b16 %v481
    %v1589 = vunpack.c.l.b16 %v482
    %v1590 = vunpack.c.h.b16 %v482
    %v1591 = vunpack.c.l.b16 %v483
    %v1592 = vunpack.c.h.b16 %v483
    %v1593 = vunpack.c.l.b16 %v484
    %v1594 = vunpack.c.h.b16 %v484
    %v1595 = vunpack.c.l.b16 %v485
    %v1596 = vunpack.c.h.b16 %v485
    %v1597 = vunpack.c.l.b16 %v486
    %v1598 = vunpack.c.h.b16 %v486
    %v1599 = vunpack.c.l.b16 %v487
    %v1600 = vunpack.c.h.b16 %v487
    %v1601 = vunpack.c.l.b16 %v488
    %v1602 = vunpack.c.h.b16 %v488
    %v1603 = vunpack.c.l.b16 %v489
    %v1604 = vunpack.c.h.b16 %v489
    %v1605 = vunpack.c.l.b16 %v490
    %v1606 = vunpack.c.h.b16 %v490
    %v1607 = vunpack.c.l.b16 %v491
    %v1608 = vunpack.c.h.b16 %v491
    %v1609 = vunpack.c.l.b16 %v492
    %v1610 = vunpack.c.h.b16 %v492
    %v1611 = vunpack.c.l.b16 %v493
    %v1612 = vunpack.c.h.b16 %v493
    %v1613 = vunpack.c.l.b16 %v494
    %v1614 = vunpack.c.h.b16 %v494
    %v1615 = vunpack.c.l.b16 %v495
    %v1616 = vunpack.c.h.b16 %v495
    %v1617 = vunpack.c.l.b16 %v496
    %v1618 = vunpack.c.h.b16 %v496
    %v1619 = vunpack.c.l.b16 %v497
    %v1620 = vunpack.c.h.b16 %v497
    %v1621 = vunpack.c.l.b16 %v498
    %v1622 = vunpack.c.h.b16 %v498
    %v1623 = vunpack.c.l.b16 %v499
    %v1624 = vunpack.c.h.b16 %v499
    %v1625 = vunpack.c.l.b16 %v500
    %v1626 = vunpack.c.h.b16 %v500
    %v1627 = vunpack.c.l.b16 %v501
    %v1628 = vunpack.c.h.b16 %v501
    %v1629 = vunpack.c.l.b16 %v502
    %v1630 = vunpack.c.h.b16 %v502
    %v1631 = vunpack.c.l.b16 %v503
    %v1632 = vunpack.c.h.b16 %v503
    %v1633 = vunpack.c.l.b16 %v504
    %v1634 = vunpack.c.h.b16 %v504
    %v1635 = vunpack.c.l.b16 %v505
    %v1636 = vunpack.c.h.b16 %v505
    %v1637 = vunpack.c.l.b16 %v506
    %v1638 = vunpack.c.h.b16 %v506
    %v1639 = vunpack.c.l.b16 %v507
    %v1640 = vunpack.c.h.b16 %v507
    %v1641 = vunpack.c.l.b16 %v508
    %v1642 = vunpack.c.h.b16 %v508
    %v1643 = vunpack.c.l.b16 %v509
    %v1644 = vunpack.c.h.b16 %v509
    %v1645 = vunpack.c.l.b16 %v510
    %v1646 = vunpack.c.h.b16 %v510
    %v1647 = vunpack.c.l.b16 %v511
    %v1648 = vunpack.c.h.b16 %v511
    %v1649 = vunpack.c.l.b16 %v512
    %v1650 = vunpack.c.h.b16 %v512
    %v1651 = vunpack.c.l.b16 %v513
    %v1652 = vunpack.c.h.b16 %v513
    %v1653 = vunpack.c.l.b16 %v514
    %v1654 = vunpack.c.h.b16 %v514
    %v1655 = vunpack.c.l.b16 %v515
    %v1656 = vunpack.c.h.b16 %v515
    %v1657 = vunpack.c.l.b16 %v516
    %v1658 = vunpack.c.h.b16 %v516
    %v1659 = vunpack.c.l.b16 %v517
    %v1660 = vunpack.c.h.b16 %v517
    %v1661 = vunpack.c.l.b16 %v518
    %v1662 = vunpack.c.h.b16 %v518
    %v1663 = vunpack.c.l.b16 %v519
    %v1664 = vunpack.c.h.b16 %v519
    %v1665 = vunpack.c.l.b16 %v520
    %v1666 = vunpack.c.h.b16 %v520
    %v1667 = vunpack.c.l.b16 %v521
    %v1668 = vunpack.c.h.b16 %v521
    %v1669 = vunpack.c.l.b16 %v522
    %v1670 = vunpack.c.h.b16 %v522
    %v1671 = vunpack.c.l.b16 %v523
    %v1672 = vunpack.c.h.b16 %v523
    %v1673 = vunpack.c.l.b16 %v524
    %v1674 = vunpack.c.h.b16 %v524
    %v1675 = vunpack.c.l.b16 %v525
    %v1676 = vunpack.c.h.b16 %v525
    %v1677 = vunpack.c.l.b16 %v526
    %v1678 = vunpack.c.h.b16 %v526
    %v1679 = vunpack.c.l.b16 %v527
    %v1680 = vunpack.c.h.b16 %v527
    %v1681 = vunpack.c.l.b16 %v528
    %v1682 = vunpack.c.h.b16 %v528
    %v1683 = vunpack.c.l.b16 %v529
    %v1684 = vunpack.c.h.b16 %v529
    %v1685 = vunpack.c.l.b16 %v530
    %v1686 = vunpack.c.h.b16 %v530
    %v1687 = vunpack.c.l.b16 %v531
    %v1688 = vunpack.c.h.b16 %v531
    %v1689 = vunpack.c.l.b16 %v532
    %v1690 = vunpack.c.h.b16 %v532
    %v1691 = vunpack.c.l.b16 %v533
    %v1692 = vunpack.c.h.b16 %v533
    %v1693 = vunpack.c.l.b16 %v534
    %v1694 = vunpack.c.h.b16 %v534
    %v1695 = vunpack.c.l.b16 %v535
    %v1696 = vunpack.c.h.b16 %v535
    %v1697 = vunpack.c.l.b16 %v536
    %v1698 = vunpack.c.h.b16 %v536
    %v1699 = vunpack.c.l.b16 %v537
    %v1700 = vunpack.c.h.b16 %v537
    %v1701 = vunpack.c.l.b16 %v538
    %v1702 = vunpack.c.h.b16 %v538
    %v1703 = vunpack.c.l.b16 %v539
    %v1704 = vunpack.c.h.b16 %v539
    %v1705 = vunpack.c.l.b16 %v540
    %v1706 = vunpack.c.h.b16 %v540
    %v1707 = vunpack.c.l.b16 %v541
    %v1708 = vunpack.c.h.b16 %v541
    %v1709 = vunpack.c.l.b16 %v542
    %v1710 = vunpack.c.h.b16 %v542
    %v1711 = vunpack.c.l.b16 %v543
    %v1712 = vunpack.c.h.b16 %v543
    %v1713 = vunpack.c.l.b16 %v544
    %v1714 = vunpack.c.h.b16 %v544
    %v1715 = vunpack.c.l.b16 %v545
    %v1716 = vunpack.c.h.b16 %v545
    %v1717 = vunpack.c.l.b16 %v546
    %v1718 = vunpack.c.h.b16 %v546
    %v1719 = vunpack.c.l.b16 %v547
    %v1720 = vunpack.c.h.b16 %v547
    %v1721 = vunpack.c.l.b16 %v548
    %v1722 = vunpack.c.h.b16 %v548
    %v1723 = vunpack.c.l.b16 %v549
    %v1724 = vunpack.c.h.b16 %v549
    %v1725 = vunpack.c.l.b16 %v550
    %v1726 = vunpack.c.h.b16 %v550
    %v1727 = vunpack.c.l.b16 %v551
    %v1728 = vunpack.c.h.b16 %v551
    %v1729 = vunpack.c.l.b16 %v552
    %v1730 = vunpack.c.h.b16 %v552
    %v1731 = vunpack.c.l.b16 %v553
    %v1732 = vunpack.c.h.b16 %v553
    %v1733 = vunpack.c.l.b16 %v554
    %v1734 = vunpack.c.h.b16 %v554
    %v1735 = vunpack.c.l.b16 %v555
    %v1736 = vunpack.c.h.b16 %v555
    %v1737 = vunpack.c.l.b16 %v556
    %v1738 = vunpack.c.h.b16 %v556
    %v1739 = vunpack.c.l.b16 %v557
    %v1740 = vunpack.c.h.b16 %v557
    %v1741 = vunpack.c.l.b16 %v558
    %v1742 = vunpack.c.h.b16 %v558
    %v1743 = vunpack.c.l.b16 %v559
    %v1744 = vunpack.c.h.b16 %v559
    %v1745 = vunpack.c.l.b16 %v560
    %v1746 = vunpack.c.h.b16 %v560
    %v1747 = vunpack.c.l.b16 %v561
    %v1748 = vunpack.c.h.b16 %v561
    %v1749 = vunpack.c.l.b16 %v562
    %v1750 = vunpack.c.h.b16 %v562
    %v1751 = vunpack.c.l.b16 %v563
    %v1752 = vunpack.c.h.b16 %v563
    %v1753 = vunpack.c.l.b16 %v564
    %v1754 = vunpack.c.h.b16 %v564
    %v1755 = vunpack.c.l.b16 %v565
    %v1756 = vunpack.c.h.b16 %v565
    %v1757 = vunpack.c.l.b16 %v566
    %v1758 = vunpack.c.h.b16 %v566
    %v1759 = vunpack.c.l.b16 %v567
    %v1760 = vunpack.c.h.b16 %v567
    %v1761 = vunpack.c.l.b16 %v568
    %v1762 = vunpack.c.h.b16 %v568
    %v1763 = vpack.c.b16 %v987, %v979
    %v1764 = vpack.c.b16 %v988, %v980
    %v1765 = vpack.c.b16 %v989, %v981
    %v1766 = vpack.c.b16 %v990, %v982
    %v1767 = vpack.c.b16 %v991, %v983
    %v1768 = vpack.c.b16 %v992, %v984
    %v1769 = vpack.c.b16 %v993, %v985
    %v1770 = vpack.c.b16 %v994, %v986
    %v1771 = vpack.c.b16 %v1003, %v995
    %v1772 = vpack.c.b16 %v1004, %v996
    %v1773 = vpack.c.b16 %v1005, %v997
    %v1774 = vpack.c.b16 %v1006, %v998
    %v1775 = vpack.c.b16 %v1007, %v999
    %v1776 = vpack.c.b16 %v1008, %v1000
    %v1777 = vpack.c.b16 %v1009, %v1001
    %v1778 = vpack.c.b16 %v1010, %v1002
    %v1779 = vpack.c.b16 %v1019, %v1011
    %v1780 = vpack.c.b16 %v1020, %v1012
    %v1781 = vpack.c.b16 %v1021, %v1013
    %v1782 = vpack.c.b16 %v1022, %v1014
    %v1783 = vpack.c.b16 %v1023, %v1015
    %v1784 = vpack.c.b16 %v1024, %v1016
    %v1785 = vpack.c.b16 %v1025, %v1017
    %v1786 = vpack.c.b16 %v1026, %v1018
    %v1787 = vpack.c.b16 %v1035, %v1027
    %v1788 = vpack.c.b16 %v1036, %v1028
    %v1789 = vpack.c.b16 %v1037, %v1029
    %v1790 = vpack.c.b16 %v1038, %v1030
    %v1791 = vpack.c.b16 %v1039, %v1031
    %v1792 = vpack.c.b16 %v1040, %v1032
    %v1793 = vpack.c.b16 %v1041, %v1033
    %v1794 = vpack.c.b16 %v1042, %v1034
    %v1795 = vpack.c.b16 %v1051, %v1043
    %v1796 = vpack.c.b16 %v1052, %v1044
    %v1797 = vpack.c.b16 %v1053, %v1045
    %v1798 = vpack.c.b16 %v1054, %v1046
    %v1799 = vpack.c.b16 %v1055, %v1047
    %v1800 = vpack.c.b16 %v1056, %v1048
    %v1801 = vpack.c.b16 %v1057, %v1049
    %v1802 = vpack.c.b16 %v1058, %v1050
    %v1803 = vpack.c.b16 %v1067, %v1059
    %v1804 = vpack.c.b16 %v1068, %v1060
    %v1805 = vpack.c.b16 %v1069, %v1061
    %v1806 = vpack.c.b16 %v1070, %v1062
    %v1807 = vpack.c.b16 %v1071, %v1063
    %v1808 = vpack.c.b16 %v1072, %v1064
    %v1809 = vpack.c.b16 %v1073, %v1065
    %v1810 = vpack.c.b16 %v1074, %v1066
    %v1811 = vpack.c.b16 %v1083, %v1075
    %v1812 = vpack.c.b16 %v1084, %v1076
    %v1813 = vpack.c.b16 %v1085, %v1077
    %v1814 = vpack.c.b16 %v1086, %v1078
    %v1815 = vpack.c.b16 %v1087, %v1079
    %v1816 = vpack.c.b16 %v1088, %v1080
    %v1817 = vpack.c.b16 %v1089, %v1081
    %v1818 = vpack.c.b16 %v1090, %v1082
    %v1819 = vpack.c.b16 %v1099, %v1091
    %v1820 = vpack.c.b16 %v1100, %v1092
    %v1821 = vpack.c.b16 %v1101, %v1093
    %v1822 = vpack.c.b16 %v1102, %v1094
    %v1823 = vpack.c.b16 %v1103, %v1095
    %v1824 = vpack.c.b16 %v1104, %v1096
    %v1825 = vpack.c.b16 %v1105, %v1097
    %v1826 = vpack.c.b16 %v1106, %v1098
    %v1827 = vpack.c.b16 %v1115, %v1107
    %v1828 = vpack.c.b16 %v1116, %v1108
    %v1829 = vpack.c.b16 %v1117, %v1109
    %v1830 = vpack.c.b16 %v1118, %v1110
    %v1831 = vpack.c.b16 %v1119, %v1111
    %v1832 = vpack.c.b16 %v1120, %v1112
    %v1833 = vpack.c.b16 %v1121, %v1113
    %v1834 = vpack.c.b16 %v1122, %v1114
    %v1835 = vpack.c.b16 %v1131, %v1123
    %v1836 = vpack.c.b16 %v1132, %v1124
    %v1837 = vpack.c.b16 %v1133, %v1125
    %v1838 = vpack.c.b16 %v1134, %v1126
    %v1839 = vpack.c.b16 %v1135, %v1127
    %v1840 = vpack.c.b16 %v1136, %v1128
    %v1841 = vpack.c.b16 %v1137, %v1129
    %v1842 = vpack.c.b16 %v1138, %v1130
    %v1843 = vpack.c.b16 %v1147, %v1139
    %v1844 = vpack.c.b16 %v1148, %v1140
    %v1845 = vpack.c.b16 %v1149, %v1141
    %v1846 = vpack.c.b16 %v1150, %v1142
    %v1847 = vpack.c.b16 %v1151, %v1143
    %v1848 = vpack.c.b16 %v1152, %v1144
    %v1849 = vpack.c.b16 %v1153, %v1145
    %v1850 = vpack.c.b16 %v1154, %v1146
    %v1851 = vpack.c.b16 %v1163, %v1155
    %v1852 = vpack.c.b16 %v1164, %v1156
    %v1853 = vpack.c.b16 %v1165, %v1157
    %v1854 = vpack.c.b16 %v1166, %v1158
    %v1855 = vpack.c.b16 %v1167, %v1159
    %v1856 = vpack.c.b16 %v1168, %v1160
    %v1857 = vpack.c.b16 %v1169, %v1161
    %v1858 = vpack.c.b16 %v1170, %v1162
    %v1859 = vpack.c.b16 %v1179, %v1171
    %v1860 = vpack.c.b16 %v1180, %v1172
    %v1861 = vpack.c.b16 %v1181, %v1173
    %v1862 = vpack.c.b16 %v1182, %v1174
    %v1863 = vpack.c.b16 %v1183, %v1175
    %v1864 = vpack.c.b16 %v1184, %v1176
    %v1865 = vpack.c.b16 %v1185, %v1177
    %v1866 = vpack.c.b16 %v1186, %v1178
    %v1867 = vpack.c.b16 %v1195, %v1187
    %v1868 = vpack.c.b16 %v1196, %v1188
    %v1869 = vpack.c.b16 %v1197, %v1189
    %v1870 = vpack.c.b16 %v1198, %v1190
    %v1871 = vpack.c.b16 %v1199, %v1191
    %v1872 = vpack.c.b16 %v1200, %v1192
    %v1873 = vpack.c.b16 %v1201, %v1193
    %v1874 = vpack.c.b16 %v1202, %v1194
    %v1875 = vpack.c.b16 %v1211, %v1203
    %v1876 = vpack.c.b16 %v1212, %v1204
    %v1877 = vpack.c.b16 %v1213, %v1205
    %v1878 = vpack.c.b16 %v1214, %v1206
    %v1879 = vpack.c.b16 %v1215, %v1207
    %v1880 = vpack.c.b16 %v1216, %v1208
    %v1881 = vpack.c.b16 %v1217, %v1209
    %v1882 = vpack.c.b16 %v1218, %v1210
    %v1883 = vpack.c.b16 %v1227, %v1219
    %v1884 = vpack.c.b16 %v1228, %v1220
    %v1885 = vpack.c.b16 %v1229, %v1221
    %v1886 = vpack.c.b16 %v1230, %v1222
    %v1887 = vpack.c.b16 %v1231, %v1223
    %v1888 = vpack.c.b16 %v1232, %v1224
    %v1889 = vpack.c.b16 %v1233, %v1225
    %v1890 = vpack.c.b16 %v1234, %v1226
    %v1891 = vpack.c.b16 %v1243, %v1235
    %v1892 = vpack.c.b16 %v1244, %v1236
    %v1893 = vpack.c.b16 %v1245, %v1237
    %v1894 = vpack.c.b16 %v1246, %v1238
    %v1895 = vpack.c.b16 %v1247, %v1239
    %v1896 = vpack.c.b16 %v1248, %v1240
    %v1897 = vpack.c.b16 %v1249, %v1241
    %v1898 = vpack.c.b16 %v1250, %v1242
    %v1899 = vpack.c.b16 %v1259, %v1251
    %v1900 = vpack.c.b16 %v1260, %v1252
    %v1901 = vpack.c.b16 %v1261, %v1253
    %v1902 = vpack.c.b16 %v1262, %v1254
    %v1903 = vpack.c.b16 %v1263, %v1255
    %v1904 = vpack.c.b16 %v1264, %v1256
    %v1905 = vpack.c.b16 %v1265, %v1257
    %v1906 = vpack.c.b16 %v1266, %v1258
    %v1907 = vpack.c.b16 %v1275, %v1267
    %v1908 = vpack.c.b16 %v1276, %v1268
    %v1909 = vpack.c.b16 %v1277, %v1269
    %v1910 = vpack.c.b16 %v1278, %v1270
    %v1911 = vpack.c.b16 %v1279, %v1271
    %v1912 = vpack.c.b16 %v1280, %v1272
    %v1913 = vpack.c.b16 %v1281, %v1273
    %v1914 = vpack.c.b16 %v1282, %v1274
    %v1915 = vpack.c.b16 %v1291, %v1283
    %v1916 = vpack.c.b16 %v1292, %v1284
    %v1917 = vpack.c.b16 %v1293, %v1285
    %v1918 = vpack.c.b16 %v1294, %v1286
    %v1919 = vpack.c.b16 %v1295, %v1287
    %v1920 = vpack.c.b16 %v1296, %v1288
    %v1921 = vpack.c.b16 %v1297, %v1289
    %v1922 = vpack.c.b16 %v1298, %v1290
    %v1923 = vpack.c.b16 %v1307, %v1299
    %v1924 = vpack.c.b16 %v1308, %v1300
    %v1925 = vpack.c.b16 %v1309, %v1301
    %v1926 = vpack.c.b16 %v1310, %v1302
    %v1927 = vpack.c.b16 %v1311, %v1303
    %v1928 = vpack.c.b16 %v1312, %v1304
    %v1929 = vpack.c.b16 %v1313, %v1305
    %v1930 = vpack.c.b16 %v1314, %v1306
    %v1931 = vpack.c.b16 %v1323, %v1315
    %v1932 = vpack.c.b16 %v1324, %v1316
    %v1933 = vpack.c.b16 %v1325, %v1317
    %v1934 = vpack.c.b16 %v1326, %v1318
    %v1935 = vpack.c.b16 %v1327, %v1319
    %v1936 = vpack.c.b16 %v1328, %v1320
    %v1937 = vpack.c.b16 %v1329, %v1321
    %v1938 = vpack.c.b16 %v1330, %v1322
    %v1939 = vpack.c.b16 %v1339, %v1331
    %v1940 = vpack.c.b16 %v1340, %v1332
    %v1941 = vpack.c.b16 %v1341, %v1333
    %v1942 = vpack.c.b16 %v1342, %v1334
    %v1943 = vpack.c.b16 %v1343, %v1335
    %v1944 = vpack.c.b16 %v1344, %v1336
    %v1945 = vpack.c.b16 %v1345, %v1337
    %v1946 = vpack.c.b16 %v1346, %v1338
    %v1947 = vpack.c.b16 %v1355, %v1347
    %v1948 = vpack.c.b16 %v1356, %v1348
    %v1949 = vpack.c.b16 %v1357, %v1349
    %v1950 = vpack.c.b16 %v1358, %v1350
    %v1951 = vpack.c.b16 %v1359, %v1351
    %v1952 = vpack.c.b16 %v1360, %v1352
    %v1953 = vpack.c.b16 %v1361, %v1353
    %v1954 = vpack.c.b16 %v1362, %v1354
    %v1955 = vpack.c.b16 %v1371, %v1363
    %v1956 = vpack.c.b16 %v1372, %v1364
    %v1957 = vpack.c.b16 %v1373, %v1365
    %v1958 = vpack.c.b16 %v1374, %v1366
    %v1959 = vpack.c.b16 %v1375, %v1367
    %v1960 = vpack.c.b16 %v1376, %v1368
    %v1961 = vpack.c.b16 %v1377, %v1369
    %v1962 = vpack.c.b16 %v1378, %v1370
    %v1963 = vpack.c.b16 %v1387, %v1379
    %v1964 = vpack.c.b16 %v1388, %v1380
    %v1965 = vpack.c.b16 %v1389, %v1381
    %v1966 = vpack.c.b16 %v1390, %v1382
    %v1967 = vpack.c.b16 %v1391, %v1383
    %v1968 = vpack.c.b16 %v1392, %v1384
    %v1969 = vpack.c.b16 %v1393, %v1385
    %v1970 = vpack.c.b16 %v1394, %v1386
    %v1971 = vpack.c.b16 %v1403, %v1395
    %v1972 = vpack.c.b16 %v1404, %v1396
    %v1973 = vpack.c.b16 %v1405, %v1397
    %v1974 = vpack.c.b16 %v1406, %v1398
    %v1975 = vpack.c.b16 %v1407, %v1399
    %v1976 = vpack.c.b16 %v1408, %v1400
    %v1977 = vpack.c.b16 %v1409, %v1401
    %v1978 = vpack.c.b16 %v1410, %v1402
    %v1979 = vpack.c.b16 %v1419, %v1411
    %v1980 = vpack.c.b16 %v1420, %v1412
    %v1981 = vpack.c.b16 %v1421, %v1413
    %v1982 = vpack.c.b16 %v1422, %v1414
    %v1983 = vpack.c.b16 %v1423, %v1415
    %v1984 = vpack.c.b16 %v1424, %v1416
    %v1985 = vpack.c.b16 %v1425, %v1417
    %v1986 = vpack.c.b16 %v1426, %v1418
    %v1987 = vpack.c.b16 %v1435, %v1427
    %v1988 = vpack.c.b16 %v1436, %v1428
    %v1989 = vpack.c.b16 %v1437, %v1429
    %v1990 = vpack.c.b16 %v1438, %v1430
    %v1991 = vpack.c.b16 %v1439, %v1431
    %v1992 = vpack.c.b16 %v1440, %v1432
    %v1993 = vpack.c.b16 %v1441, %v1433
    %v1994 = vpack.c.b16 %v1442, %v1434
    %v1995 = vpack.c.b16 %v1451, %v1443
    %v1996 = vpack.c.b16 %v1452, %v1444
    %v1997 = vpack.c.b16 %v1453, %v1445
    %v1998 = vpack.c.b16 %v1454, %v1446
    %v1999 = vpack.c.b16 %v1455, %v1447
    %v2000 = vpack.c.b16 %v1456, %v1448
    %v2001 = vpack.c.b16 %v1457, %v1449
    %v2002 = vpack.c.b16 %v1458, %v1450
    %v2003 = vpack.c.b16 %v1467, %v1459
    %v2004 = vpack.c.b16 %v1468, %v1460
    %v2005 = vpack.c.b16 %v1469, %v1461
    %v2006 = vpack.c.b16 %v1470, %v1462
    %v2007 = vpack.c.b16 %v1471, %v1463
    %v2008 = vpack.c.b16 %v1472, %v1464
    %v2009 = vpack.c.b16 %v1473, %v1465
    %v2010 = vpack.c.b16 %v1474, %v1466
    %v2011 = vpack.c.b16 %v1483, %v1475
    %v2012 = vpack.c.b16 %v1484, %v1476
    %v2013 = vpack.c.b16 %v1485, %v1477
    %v2014 = vpack.c.b16 %v1486, %v1478
    %v2015 = vpack.c.b16 %v1487, %v1479
    %v2016 = vpack.c.b16 %v1488, %v1480
    %v2017 = vpack.c.b16 %v1489, %v1481
    %v2018 = vpack.c.b16 %v1490, %v1482
    %v2019 = vpack.c.b16 %v1499, %v1491
    %v2020 = vpack.c.b16 %v1500, %v1492
    %v2021 = vpack.c.b16 %v1501, %v1493
    %v2022 = vpack.c.b16 %v1502, %v1494
    %v2023 = vpack.c.b16 %v1503, %v1495
    %v2024 = vpack.c.b16 %v1504, %v1496
    %v2025 = vpack.c.b16 %v1505, %v1497
    %v2026 = vpack.c.b16 %v1506, %v1498
    %v2027 = vpack.c.b16 %v1515, %v1507
    %v2028 = vpack.c.b16 %v1516, %v1508
    %v2029 = vpack.c.b16 %v1517, %v1509
    %v2030 = vpack.c.b16 %v1518, %v1510
    %v2031 = vpack.c.b16 %v1519, %v1511
    %v2032 = vpack.c.b16 %v1520, %v1512
    %v2033 = vpack.c.b16 %v1521, %v1513
    %v2034 = vpack.c.b16 %v1522, %v1514
    %v2035 = vpack.c.b16 %v1531, %v1523
    %v2036 = vpack.c.b16 %v1532, %v1524
    %v2037 = vpack.c.b16 %v1533, %v1525
    %v2038 = vpack.c.b16 %v1534, %v1526
    %v2039 = vpack.c.b16 %v1535, %v1527
    %v2040 = vpack.c.b16 %v1536, %v1528
    %v2041 = vpack.c.b16 %v1537, %v1529
    %v2042 = vpack.c.b16 %v1538, %v1530
    %v2043 = vpack.c.b16 %v1547, %v1539
    %v2044 = vpack.c.b16 %v1548, %v1540
    %v2045 = vpack.c.b16 %v1549, %v1541
    %v2046 = vpack.c.b16 %v1550, %v1542
    %v2047 = vpack.c.b16 %v1551, %v1543
    %v2048 = vpack.c.b16 %v1552, %v1544
    %v2049 = vpack.c.b16 %v1553, %v1545
    %v2050 = vpack.c.b16 %v1554, %v1546
    %v2051 = vpack.c.b16 %v1563, %v1555
    %v2052 = vpack.c.b16 %v1564, %v1556
    %v2053 = vpack.c.b16 %v1565, %v1557
    %v2054 = vpack.c.b16 %v1566, %v1558
    %v2055 = vpack.c.b16 %v1567, %v1559
    %v2056 = vpack.c.b16 %v1568, %v1560
    %v2057 = vpack.c.b16 %v1569, %v1561
    %v2058 = vpack.c.b16 %v1570, %v1562
    %v2059 = vpack.c.b16 %v1579, %v1571
    %v2060 = vpack.c.b16 %v1580, %v1572
    %v2061 = vpack.c.b16 %v1581, %v1573
    %v2062 = vpack.c.b16 %v1582, %v1574
    %v2063 = vpack.c.b16 %v1583, %v1575
    %v2064 = vpack.c.b16 %v1584, %v1576
    %v2065 = vpack.c.b16 %v1585, %v1577
    %v2066 = vpack.c.b16 %v1586, %v1578
    %v2067 = vpack.c.b16 %v1595, %v1587
    %v2068 = vpack.c.b16 %v1596, %v1588
    %v2069 = vpack.c.b16 %v1597, %v1589
    %v2070 = vpack.c.b16 %v1598, %v1590
    %v2071 = vpack.c.b16 %v1599, %v1591
    %v2072 = vpack.c.b16 %v1600, %v1592
    %v2073 = vpack.c.b16 %v1601, %v1593
    %v2074 = vpack.c.b16 %v1602, %v1594
    %v2075 = vpack.c.b16 %v1611, %v1603
    %v2076 = vpack.c.b16 %v1612, %v1604
    %v2077 = vpack.c.b16 %v1613, %v1605
    %v2078 = vpack.c.b16 %v1614, %v1606
    %v2079 = vpack.c.b16 %v1615, %v1607
    %v2080 = vpack.c.b16 %v1616, %v1608
    %v2081 = vpack.c.b16 %v1617, %v1609
    %v2082 = vpack.c.b16 %v1618, %v1610
    %v2083 = vpack.c.b16 %v1627, %v1619
    %v2084 = vpack.c.b16 %v1628, %v1620
    %v2085 = vpack.c.b16 %v1629, %v1621
    %v2086 = vpack.c.b16 %v1630, %v1622
    %v2087 = vpack.c.b16 %v1631, %v1623
    %v2088 = vpack.c.b16 %v1632, %v1624
    %v2089 = vpack.c.b16 %v1633, %v1625
    %v2090 = vpack.c.b16 %v1634, %v1626
    %v2091 = vpack.c.b16 %v1643, %v1635
    %v2092 = vpack.c.b16 %v1644, %v1636
    %v2093 = vpack.c.b16 %v1645, %v1637
    %v2094 = vpack.c.b16 %v1646, %v1638
    %v2095 = vpack.c.b16 %v1647, %v1639
    %v2096 = vpack.c.b16 %v1648, %v1640
    %v2097 = vpack.c.b16 %v1649, %v1641
    %v2098 = vpack.c.b16 %v1650, %v1642
    %v2099 = vpack.c.b16 %v1659, %v1651
    %v2100 = vpack.c.b16 %v1660, %v1652
    %v2101 = vpack.c.b16 %v1661, %v1653
    %v2102 = vpack.c.b16 %v1662, %v1654
    %v2103 = vpack.c.b16 %v1663, %v1655
    %v2104 = vpack.c.b16 %v1664, %v1656
    %v2105 = vpack.c.b16 %v1665, %v1657
    %v2106 = vpack.c.b16 %v1666, %v1658
    %v2107 = vpack.c.b16 %v1675, %v1667
    %v2108 = vpack.c.b16 %v1676, %v1668
    %v2109 = vpack.c.b16 %v1677, %v1669
    %v2110 = vpack.c.b16 %v1678, %v1670
    %v2111 = vpack.c.b16 %v1679, %v1671
    %v2112 = vpack.c.b16 %v1680, %v1672
    %v2113 = vpack.c.b16 %v1681, %v1673
    %v2114 = vpack.c.b16 %v1682, %v1674
    %v2115 = vpack.c.b16 %v1691, %v1683
    %v2116 = vpack.c.b16 %v1692, %v1684
    %v2117 = vpack.c.b16 %v1693, %v1685
    %v2118 = vpack.c.b16 %v1694, %v1686
    %v2119 = vpack.c.b16 %v1695, %v1687
    %v2120 = vpack.c.b16 %v1696, %v1688
    %v2121 = vpack.c.b16 %v1697, %v1689
    %v2122 = vpack.c.b16 %v1698, %v1690
    %v2123 = vpack.c.b16 %v1707, %v1699
    %v2124 = vpack.c.b16 %v1708, %v1700
    %v2125 = vpack.c.b16 %v1709, %v1701
    %v2126 = vpack.c.b16 %v1710, %v1702
    %v2127 = vpack.c.b16 %v1711, %v1703
    %v2128 = vpack.c.b16 %v1712, %v1704
    %v2129 = vpack.c.b16 %v1713, %v1705
    %v2130 = vpack.c.b16 %v1714, %v1706
    %v2131 = vpack.c.b16 %v1723, %v1715
    %v2132 = vpack.c.b16 %v1724, %v1716
    %v2133 = vpack.c.b16 %v1725, %v1717
    %v2134 = vpack.c.b16 %v1726, %v1718
    %v2135 = vpack.c.b16 %v1727, %v1719
    %v2136 = vpack.c.b16 %v1728, %v1720
    %v2137 = vpack.c.b16 %v1729, %v1721
    %v2138 = vpack.c.b16 %v1730, %v1722
    %v2139 = vpack.c.b16 %v1739, %v1731
    %v2140 = vpack.c.b16 %v1740, %v1732
    %v2141 = vpack.c.b16 %v1741, %v1733
    %v2142 = vpack.c.b16 %v1742, %v1734
    %v2143 = vpack.c.b16 %v1743, %v1735
    %v2144 = vpack.c.b16 %v1744, %v1736
    %v2145 = vpack.c.b16 %v1745, %v1737
    %v2146 = vpack.c.b16 %v1746, %v1738
    %v2147 = vpack.c.b16 %v1755, %v1747
    %v2148 = vpack.c.b16 %v1756, %v1748
    %v2149 = vpack.c.b16 %v1757, %v1749
    %v2150 = vpack.c.b16 %v1758, %v1750
    %v2151 = vpack.c.b16 %v1759, %v1751
    %v2152 = vpack.c.b16 %v1760, %v1752
    %v2153 = vpack.c.b16 %v1761, %v1753
    %v2154 = vpack.c.b16 %v1762, %v1754
    %vm2547 = vcmask 130048
    %v2549 = vsel %vm2547, %v176, 0
    %2551 = vmatpush.bf16.msra.mxu0 %v1819
    %2552 = vmatpush.bf16.msra.mxu0 %v1811
    %2553 = vmatpush.bf16.msra.mxu0 %v1803
    %2554 = vmatpush.bf16.msra.mxu0 %v1795
    %2555 = vmatpush.bf16.msra.mxu0 %v1787
    %2556 = vmatpush.bf16.msra.mxu0 %v1779
    %2557 = vmatpush.bf16.msra.mxu0 %v1771
    %2558 = vmatpush.bf16.msra.mxu0 %v1763
    %2559 = vmatmul.bf16.gmra.mxu0 %v170
    %v2560 = vpop.f32.mrf.mxu0
    %v2561 = vadd.f32 %v571, %v2560
    %v2562 = vpop.f32.mrf.mxu0
    %2563 = vdwg.mxu0
    %2564 = vmatpush.bf16.msra.mxu0 %v1883
    %2565 = vmatpush.bf16.msra.mxu0 %v1875
    %2566 = vmatpush.bf16.msra.mxu0 %v1867
    %2567 = vmatpush.bf16.msra.mxu0 %v1859
    %2568 = vmatpush.bf16.msra.mxu0 %v1851
    %2569 = vmatpush.bf16.msra.mxu0 %v1843
    %2570 = vmatpush.bf16.msra.mxu0 %v1835
    %2571 = vmatpush.bf16.msra.mxu0 %v1827
    %2572 = vmatmul.bf16.gmra.mxu0 %v171
    %v2573 = vpop.f32.mrf.mxu0
    %v2574 = vadd.f32 %v2561, %v2573
    %v2575 = vpop.f32.mrf.mxu0
    %2576 = vdwg.mxu0
    %2577 = vmatpush.bf16.msra.mxu0 %v1947
    %2578 = vmatpush.bf16.msra.mxu0 %v1939
    %2579 = vmatpush.bf16.msra.mxu0 %v1931
    %2580 = vmatpush.bf16.msra.mxu0 %v1923
    %2581 = vmatpush.bf16.msra.mxu0 %v1915
    %2582 = vmatpush.bf16.msra.mxu0 %v1907
    %2583 = vmatpush.bf16.msra.mxu0 %v1899
    %2584 = vmatpush.bf16.msra.mxu0 %v1891
    %2585 = vmatmul.bf16.gmra.mxu0 %v172
    %v2586 = vpop.f32.mrf.mxu0
    %v2587 = vadd.f32 %v2574, %v2586
    %v2588 = vpop.f32.mrf.mxu0
    %2589 = vdwg.mxu0
    %2590 = vmatpush.bf16.msra.mxu0 %v2011
    %2591 = vmatpush.bf16.msra.mxu0 %v2003
    %2592 = vmatpush.bf16.msra.mxu0 %v1995
    %2593 = vmatpush.bf16.msra.mxu0 %v1987
    %2594 = vmatpush.bf16.msra.mxu0 %v1979
    %2595 = vmatpush.bf16.msra.mxu0 %v1971
    %2596 = vmatpush.bf16.msra.mxu0 %v1963
    %2597 = vmatpush.bf16.msra.mxu0 %v1955
    %2598 = vmatmul.bf16.gmra.mxu0 %v173
    %v2599 = vpop.f32.mrf.mxu0
    %v2600 = vadd.f32 %v2587, %v2599
    %v2601 = vpop.f32.mrf.mxu0
    %2602 = vdwg.mxu0
    %2603 = vmatpush.bf16.msra.mxu0 %v2075
    %2604 = vmatpush.bf16.msra.mxu0 %v2067
    %2605 = vmatpush.bf16.msra.mxu0 %v2059
    %2606 = vmatpush.bf16.msra.mxu0 %v2051
    %2607 = vmatpush.bf16.msra.mxu0 %v2043
    %2608 = vmatpush.bf16.msra.mxu0 %v2035
    %2609 = vmatpush.bf16.msra.mxu0 %v2027
    %2610 = vmatpush.bf16.msra.mxu0 %v2019
    %2611 = vmatmul.bf16.gmra.mxu0 %v174
    %v2612 = vpop.f32.mrf.mxu0
    %v2613 = vadd.f32 %v2600, %v2612
    %v2614 = vpop.f32.mrf.mxu0
    %2615 = vdwg.mxu0
    %2616 = vmatpush.bf16.msra.mxu0 %v2139
    %2617 = vmatpush.bf16.msra.mxu0 %v2131
    %2618 = vmatpush.bf16.msra.mxu0 %v2123
    %2619 = vmatpush.bf16.msra.mxu0 %v2115
    %2620 = vmatpush.bf16.msra.mxu0 %v2107
    %2621 = vmatpush.bf16.msra.mxu0 %v2099
    %2622 = vmatpush.bf16.msra.mxu0 %v2091
    %2623 = vmatpush.bf16.msra.mxu0 %v2083
    %2624 = vmatmul.bf16.gmra.mxu0 %v175
    %v2625 = vpop.f32.mrf.mxu0
    %v2626 = vadd.f32 %v2613, %v2625
    %v2627 = vpop.f32.mrf.mxu0
    %2628 = vdwg.mxu0
    %2629 = vmatpush.bf16.msra.mxu0 0
    %2630 = vmatpush.bf16.msra.mxu0 0
    %2631 = vmatpush.bf16.msra.mxu0 0
    %2632 = vmatpush.bf16.msra.mxu0 0
    %2633 = vmatpush.bf16.msra.mxu0 0
    %2634 = vmatpush.bf16.msra.mxu0 0
    %2635 = vmatpush.bf16.msra.mxu0 0
    %2636 = vmatpush.bf16.msra.mxu0 %v2147
    %2637 = vmatmul.bf16.gmra.mxu0 %v2549
    %v2638 = vpop.f32.mrf.mxu0
    %v2639 = vadd.f32 %v2626, %v2638
    %v2640 = vpop.f32.mrf.mxu0
    %2641 = vdwg.mxu0
    %2642 = vmatpush.bf16.msra.mxu0 %v1820
    %2643 = vmatpush.bf16.msra.mxu0 %v1812
    %2644 = vmatpush.bf16.msra.mxu0 %v1804
    %2645 = vmatpush.bf16.msra.mxu0 %v1796
    %2646 = vmatpush.bf16.msra.mxu0 %v1788
    %2647 = vmatpush.bf16.msra.mxu0 %v1780
    %2648 = vmatpush.bf16.msra.mxu0 %v1772
    %2649 = vmatpush.bf16.msra.mxu0 %v1764
    %2650 = vmatmul.bf16.gmra.mxu0 %v170
    %v2651 = vpop.f32.mrf.mxu0
    %v2652 = vadd.f32 %v572, %v2651
    %v2653 = vpop.f32.mrf.mxu0
    %2654 = vdwg.mxu0
    %2655 = vmatpush.bf16.msra.mxu0 %v1884
    %2656 = vmatpush.bf16.msra.mxu0 %v1876
    %2657 = vmatpush.bf16.msra.mxu0 %v1868
    %2658 = vmatpush.bf16.msra.mxu0 %v1860
    %2659 = vmatpush.bf16.msra.mxu0 %v1852
    %2660 = vmatpush.bf16.msra.mxu0 %v1844
    %2661 = vmatpush.bf16.msra.mxu0 %v1836
    %2662 = vmatpush.bf16.msra.mxu0 %v1828
    %2663 = vmatmul.bf16.gmra.mxu0 %v171
    %v2664 = vpop.f32.mrf.mxu0
    %v2665 = vadd.f32 %v2652, %v2664
    %v2666 = vpop.f32.mrf.mxu0
    %2667 = vdwg.mxu0
    %2668 = vmatpush.bf16.msra.mxu0 %v1948
    %2669 = vmatpush.bf16.msra.mxu0 %v1940
    %2670 = vmatpush.bf16.msra.mxu0 %v1932
    %2671 = vmatpush.bf16.msra.mxu0 %v1924
    %2672 = vmatpush.bf16.msra.mxu0 %v1916
    %2673 = vmatpush.bf16.msra.mxu0 %v1908
    %2674 = vmatpush.bf16.msra.mxu0 %v1900
    %2675 = vmatpush.bf16.msra.mxu0 %v1892
    %2676 = vmatmul.bf16.gmra.mxu0 %v172
    %v2677 = vpop.f32.mrf.mxu0
    %v2678 = vadd.f32 %v2665, %v2677
    %v2679 = vpop.f32.mrf.mxu0
    %2680 = vdwg.mxu0
    %2681 = vmatpush.bf16.msra.mxu0 %v2012
    %2682 = vmatpush.bf16.msra.mxu0 %v2004
    %2683 = vmatpush.bf16.msra.mxu0 %v1996
    %2684 = vmatpush.bf16.msra.mxu0 %v1988
    %2685 = vmatpush.bf16.msra.mxu0 %v1980
    %2686 = vmatpush.bf16.msra.mxu0 %v1972
    %2687 = vmatpush.bf16.msra.mxu0 %v1964
    %2688 = vmatpush.bf16.msra.mxu0 %v1956
    %2689 = vmatmul.bf16.gmra.mxu0 %v173
    %v2690 = vpop.f32.mrf.mxu0
    %v2691 = vadd.f32 %v2678, %v2690
    %v2692 = vpop.f32.mrf.mxu0
    %2693 = vdwg.mxu0
    %2694 = vmatpush.bf16.msra.mxu0 %v2076
    %2695 = vmatpush.bf16.msra.mxu0 %v2068
    %2696 = vmatpush.bf16.msra.mxu0 %v2060
    %2697 = vmatpush.bf16.msra.mxu0 %v2052
    %2698 = vmatpush.bf16.msra.mxu0 %v2044
    %2699 = vmatpush.bf16.msra.mxu0 %v2036
    %2700 = vmatpush.bf16.msra.mxu0 %v2028
    %2701 = vmatpush.bf16.msra.mxu0 %v2020
    %2702 = vmatmul.bf16.gmra.mxu0 %v174
    %v2703 = vpop.f32.mrf.mxu0
    %v2704 = vadd.f32 %v2691, %v2703
    %v2705 = vpop.f32.mrf.mxu0
    %2706 = vdwg.mxu0
    %2707 = vmatpush.bf16.msra.mxu0 %v2140
    %2708 = vmatpush.bf16.msra.mxu0 %v2132
    %2709 = vmatpush.bf16.msra.mxu0 %v2124
    %2710 = vmatpush.bf16.msra.mxu0 %v2116
    %2711 = vmatpush.bf16.msra.mxu0 %v2108
    %2712 = vmatpush.bf16.msra.mxu0 %v2100
    %2713 = vmatpush.bf16.msra.mxu0 %v2092
    %2714 = vmatpush.bf16.msra.mxu0 %v2084
    %2715 = vmatmul.bf16.gmra.mxu0 %v175
    %v2716 = vpop.f32.mrf.mxu0
    %v2717 = vadd.f32 %v2704, %v2716
    %v2718 = vpop.f32.mrf.mxu0
    %2719 = vdwg.mxu0
    %2720 = vmatpush.bf16.msra.mxu0 0
    %2721 = vmatpush.bf16.msra.mxu0 0
    %2722 = vmatpush.bf16.msra.mxu0 0
    %2723 = vmatpush.bf16.msra.mxu0 0
    %2724 = vmatpush.bf16.msra.mxu0 0
    %2725 = vmatpush.bf16.msra.mxu0 0
    %2726 = vmatpush.bf16.msra.mxu0 0
    %2727 = vmatpush.bf16.msra.mxu0 %v2148
    %2728 = vmatmul.bf16.gmra.mxu0 %v2549
    %v2729 = vpop.f32.mrf.mxu0
    %v2730 = vadd.f32 %v2717, %v2729
    %v2731 = vpop.f32.mrf.mxu0
    %2732 = vdwg.mxu0
    %2733 = vmatpush.bf16.msra.mxu0 %v1821
    %2734 = vmatpush.bf16.msra.mxu0 %v1813
    %2735 = vmatpush.bf16.msra.mxu0 %v1805
    %2736 = vmatpush.bf16.msra.mxu0 %v1797
    %2737 = vmatpush.bf16.msra.mxu0 %v1789
    %2738 = vmatpush.bf16.msra.mxu0 %v1781
    %2739 = vmatpush.bf16.msra.mxu0 %v1773
    %2740 = vmatpush.bf16.msra.mxu0 %v1765
    %2741 = vmatmul.bf16.gmra.mxu0 %v170
    %v2742 = vpop.f32.mrf.mxu0
    %v2743 = vadd.f32 %v573, %v2742
    %v2744 = vpop.f32.mrf.mxu0
    %2745 = vdwg.mxu0
    %2746 = vmatpush.bf16.msra.mxu0 %v1885
    %2747 = vmatpush.bf16.msra.mxu0 %v1877
    %2748 = vmatpush.bf16.msra.mxu0 %v1869
    %2749 = vmatpush.bf16.msra.mxu0 %v1861
    %2750 = vmatpush.bf16.msra.mxu0 %v1853
    %2751 = vmatpush.bf16.msra.mxu0 %v1845
    %2752 = vmatpush.bf16.msra.mxu0 %v1837
    %2753 = vmatpush.bf16.msra.mxu0 %v1829
    %2754 = vmatmul.bf16.gmra.mxu0 %v171
    %v2755 = vpop.f32.mrf.mxu0
    %v2756 = vadd.f32 %v2743, %v2755
    %v2757 = vpop.f32.mrf.mxu0
    %2758 = vdwg.mxu0
    %2759 = vmatpush.bf16.msra.mxu0 %v1949
    %2760 = vmatpush.bf16.msra.mxu0 %v1941
    %2761 = vmatpush.bf16.msra.mxu0 %v1933
    %2762 = vmatpush.bf16.msra.mxu0 %v1925
    %2763 = vmatpush.bf16.msra.mxu0 %v1917
    %2764 = vmatpush.bf16.msra.mxu0 %v1909
    %2765 = vmatpush.bf16.msra.mxu0 %v1901
    %2766 = vmatpush.bf16.msra.mxu0 %v1893
    %2767 = vmatmul.bf16.gmra.mxu0 %v172
    %v2768 = vpop.f32.mrf.mxu0
    %v2769 = vadd.f32 %v2756, %v2768
    %v2770 = vpop.f32.mrf.mxu0
    %2771 = vdwg.mxu0
    %2772 = vmatpush.bf16.msra.mxu0 %v2013
    %2773 = vmatpush.bf16.msra.mxu0 %v2005
    %2774 = vmatpush.bf16.msra.mxu0 %v1997
    %2775 = vmatpush.bf16.msra.mxu0 %v1989
    %2776 = vmatpush.bf16.msra.mxu0 %v1981
    %2777 = vmatpush.bf16.msra.mxu0 %v1973
    %2778 = vmatpush.bf16.msra.mxu0 %v1965
    %2779 = vmatpush.bf16.msra.mxu0 %v1957
    %2780 = vmatmul.bf16.gmra.mxu0 %v173
    %v2781 = vpop.f32.mrf.mxu0
    %v2782 = vadd.f32 %v2769, %v2781
    %v2783 = vpop.f32.mrf.mxu0
    %2784 = vdwg.mxu0
    %2785 = vmatpush.bf16.msra.mxu0 %v2077
    %2786 = vmatpush.bf16.msra.mxu0 %v2069
    %2787 = vmatpush.bf16.msra.mxu0 %v2061
    %2788 = vmatpush.bf16.msra.mxu0 %v2053
    %2789 = vmatpush.bf16.msra.mxu0 %v2045
    %2790 = vmatpush.bf16.msra.mxu0 %v2037
    %2791 = vmatpush.bf16.msra.mxu0 %v2029
    %2792 = vmatpush.bf16.msra.mxu0 %v2021
    %2793 = vmatmul.bf16.gmra.mxu0 %v174
    %v2794 = vpop.f32.mrf.mxu0
    %v2795 = vadd.f32 %v2782, %v2794
    %v2796 = vpop.f32.mrf.mxu0
    %2797 = vdwg.mxu0
    %2798 = vmatpush.bf16.msra.mxu0 %v2141
    %2799 = vmatpush.bf16.msra.mxu0 %v2133
    %2800 = vmatpush.bf16.msra.mxu0 %v2125
    %2801 = vmatpush.bf16.msra.mxu0 %v2117
    %2802 = vmatpush.bf16.msra.mxu0 %v2109
    %2803 = vmatpush.bf16.msra.mxu0 %v2101
    %2804 = vmatpush.bf16.msra.mxu0 %v2093
    %2805 = vmatpush.bf16.msra.mxu0 %v2085
    %2806 = vmatmul.bf16.gmra.mxu0 %v175
    %v2807 = vpop.f32.mrf.mxu0
    %v2808 = vadd.f32 %v2795, %v2807
    %v2809 = vpop.f32.mrf.mxu0
    %2810 = vdwg.mxu0
    %2811 = vmatpush.bf16.msra.mxu0 0
    %2812 = vmatpush.bf16.msra.mxu0 0
    %2813 = vmatpush.bf16.msra.mxu0 0
    %2814 = vmatpush.bf16.msra.mxu0 0
    %2815 = vmatpush.bf16.msra.mxu0 0
    %2816 = vmatpush.bf16.msra.mxu0 0
    %2817 = vmatpush.bf16.msra.mxu0 0
    %2818 = vmatpush.bf16.msra.mxu0 %v2149
    %2819 = vmatmul.bf16.gmra.mxu0 %v2549
    %v2820 = vpop.f32.mrf.mxu0
    %v2821 = vadd.f32 %v2808, %v2820
    %v2822 = vpop.f32.mrf.mxu0
    %2823 = vdwg.mxu0
    %2824 = vmatpush.bf16.msra.mxu0 %v1822
    %2825 = vmatpush.bf16.msra.mxu0 %v1814
    %2826 = vmatpush.bf16.msra.mxu0 %v1806
    %2827 = vmatpush.bf16.msra.mxu0 %v1798
    %2828 = vmatpush.bf16.msra.mxu0 %v1790
    %2829 = vmatpush.bf16.msra.mxu0 %v1782
    %2830 = vmatpush.bf16.msra.mxu0 %v1774
    %2831 = vmatpush.bf16.msra.mxu0 %v1766
    %2832 = vmatmul.bf16.gmra.mxu0 %v170
    %v2833 = vpop.f32.mrf.mxu0
    %v2834 = vadd.f32 %v574, %v2833
    %v2835 = vpop.f32.mrf.mxu0
    %2836 = vdwg.mxu0
    %2837 = vmatpush.bf16.msra.mxu0 %v1886
    %2838 = vmatpush.bf16.msra.mxu0 %v1878
    %2839 = vmatpush.bf16.msra.mxu0 %v1870
    %2840 = vmatpush.bf16.msra.mxu0 %v1862
    %2841 = vmatpush.bf16.msra.mxu0 %v1854
    %2842 = vmatpush.bf16.msra.mxu0 %v1846
    %2843 = vmatpush.bf16.msra.mxu0 %v1838
    %2844 = vmatpush.bf16.msra.mxu0 %v1830
    %2845 = vmatmul.bf16.gmra.mxu0 %v171
    %v2846 = vpop.f32.mrf.mxu0
    %v2847 = vadd.f32 %v2834, %v2846
    %v2848 = vpop.f32.mrf.mxu0
    %2849 = vdwg.mxu0
    %2850 = vmatpush.bf16.msra.mxu0 %v1950
    %2851 = vmatpush.bf16.msra.mxu0 %v1942
    %2852 = vmatpush.bf16.msra.mxu0 %v1934
    %2853 = vmatpush.bf16.msra.mxu0 %v1926
    %2854 = vmatpush.bf16.msra.mxu0 %v1918
    %2855 = vmatpush.bf16.msra.mxu0 %v1910
    %2856 = vmatpush.bf16.msra.mxu0 %v1902
    %2857 = vmatpush.bf16.msra.mxu0 %v1894
    %2858 = vmatmul.bf16.gmra.mxu0 %v172
    %v2859 = vpop.f32.mrf.mxu0
    %v2860 = vadd.f32 %v2847, %v2859
    %v2861 = vpop.f32.mrf.mxu0
    %2862 = vdwg.mxu0
    %2863 = vmatpush.bf16.msra.mxu0 %v2014
    %2864 = vmatpush.bf16.msra.mxu0 %v2006
    %2865 = vmatpush.bf16.msra.mxu0 %v1998
    %2866 = vmatpush.bf16.msra.mxu0 %v1990
    %2867 = vmatpush.bf16.msra.mxu0 %v1982
    %2868 = vmatpush.bf16.msra.mxu0 %v1974
    %2869 = vmatpush.bf16.msra.mxu0 %v1966
    %2870 = vmatpush.bf16.msra.mxu0 %v1958
    %2871 = vmatmul.bf16.gmra.mxu0 %v173
    %v2872 = vpop.f32.mrf.mxu0
    %v2873 = vadd.f32 %v2860, %v2872
    %v2874 = vpop.f32.mrf.mxu0
    %2875 = vdwg.mxu0
    %2876 = vmatpush.bf16.msra.mxu0 %v2078
    %2877 = vmatpush.bf16.msra.mxu0 %v2070
    %2878 = vmatpush.bf16.msra.mxu0 %v2062
    %2879 = vmatpush.bf16.msra.mxu0 %v2054
    %2880 = vmatpush.bf16.msra.mxu0 %v2046
    %2881 = vmatpush.bf16.msra.mxu0 %v2038
    %2882 = vmatpush.bf16.msra.mxu0 %v2030
    %2883 = vmatpush.bf16.msra.mxu0 %v2022
    %2884 = vmatmul.bf16.gmra.mxu0 %v174
    %v2885 = vpop.f32.mrf.mxu0
    %v2886 = vadd.f32 %v2873, %v2885
    %v2887 = vpop.f32.mrf.mxu0
    %2888 = vdwg.mxu0
    %2889 = vmatpush.bf16.msra.mxu0 %v2142
    %2890 = vmatpush.bf16.msra.mxu0 %v2134
    %2891 = vmatpush.bf16.msra.mxu0 %v2126
    %2892 = vmatpush.bf16.msra.mxu0 %v2118
    %2893 = vmatpush.bf16.msra.mxu0 %v2110
    %2894 = vmatpush.bf16.msra.mxu0 %v2102
    %2895 = vmatpush.bf16.msra.mxu0 %v2094
    %2896 = vmatpush.bf16.msra.mxu0 %v2086
    %2897 = vmatmul.bf16.gmra.mxu0 %v175
    %v2898 = vpop.f32.mrf.mxu0
    %v2899 = vadd.f32 %v2886, %v2898
    %v2900 = vpop.f32.mrf.mxu0
    %2901 = vdwg.mxu0
    %2902 = vmatpush.bf16.msra.mxu0 0
    %2903 = vmatpush.bf16.msra.mxu0 0
    %2904 = vmatpush.bf16.msra.mxu0 0
    %2905 = vmatpush.bf16.msra.mxu0 0
    %2906 = vmatpush.bf16.msra.mxu0 0
    %2907 = vmatpush.bf16.msra.mxu0 0
    %2908 = vmatpush.bf16.msra.mxu0 0
    %2909 = vmatpush.bf16.msra.mxu0 %v2150
    %2910 = vmatmul.bf16.gmra.mxu0 %v2549
    %v2911 = vpop.f32.mrf.mxu0
    %v2912 = vadd.f32 %v2899, %v2911
    %v2913 = vpop.f32.mrf.mxu0
    %2914 = vdwg.mxu0
    %2915 = vmatpush.bf16.msra.mxu0 %v1823
    %2916 = vmatpush.bf16.msra.mxu0 %v1815
    %2917 = vmatpush.bf16.msra.mxu0 %v1807
    %2918 = vmatpush.bf16.msra.mxu0 %v1799
    %2919 = vmatpush.bf16.msra.mxu0 %v1791
    %2920 = vmatpush.bf16.msra.mxu0 %v1783
    %2921 = vmatpush.bf16.msra.mxu0 %v1775
    %2922 = vmatpush.bf16.msra.mxu0 %v1767
    %2923 = vmatmul.bf16.gmra.mxu0 %v170
    %v2924 = vpop.f32.mrf.mxu0
    %v2925 = vadd.f32 %v575, %v2924
    %v2926 = vpop.f32.mrf.mxu0
    %2927 = vdwg.mxu0
    %2928 = vmatpush.bf16.msra.mxu0 %v1887
    %2929 = vmatpush.bf16.msra.mxu0 %v1879
    %2930 = vmatpush.bf16.msra.mxu0 %v1871
    %2931 = vmatpush.bf16.msra.mxu0 %v1863
    %2932 = vmatpush.bf16.msra.mxu0 %v1855
    %2933 = vmatpush.bf16.msra.mxu0 %v1847
    %2934 = vmatpush.bf16.msra.mxu0 %v1839
    %2935 = vmatpush.bf16.msra.mxu0 %v1831
    %2936 = vmatmul.bf16.gmra.mxu0 %v171
    %v2937 = vpop.f32.mrf.mxu0
    %v2938 = vadd.f32 %v2925, %v2937
    %v2939 = vpop.f32.mrf.mxu0
    %2940 = vdwg.mxu0
    %2941 = vmatpush.bf16.msra.mxu0 %v1951
    %2942 = vmatpush.bf16.msra.mxu0 %v1943
    %2943 = vmatpush.bf16.msra.mxu0 %v1935
    %2944 = vmatpush.bf16.msra.mxu0 %v1927
    %2945 = vmatpush.bf16.msra.mxu0 %v1919
    %2946 = vmatpush.bf16.msra.mxu0 %v1911
    %2947 = vmatpush.bf16.msra.mxu0 %v1903
    %2948 = vmatpush.bf16.msra.mxu0 %v1895
    %2949 = vmatmul.bf16.gmra.mxu0 %v172
    %v2950 = vpop.f32.mrf.mxu0
    %v2951 = vadd.f32 %v2938, %v2950
    %v2952 = vpop.f32.mrf.mxu0
    %2953 = vdwg.mxu0
    %2954 = vmatpush.bf16.msra.mxu0 %v2015
    %2955 = vmatpush.bf16.msra.mxu0 %v2007
    %2956 = vmatpush.bf16.msra.mxu0 %v1999
    %2957 = vmatpush.bf16.msra.mxu0 %v1991
    %2958 = vmatpush.bf16.msra.mxu0 %v1983
    %2959 = vmatpush.bf16.msra.mxu0 %v1975
    %2960 = vmatpush.bf16.msra.mxu0 %v1967
    %2961 = vmatpush.bf16.msra.mxu0 %v1959
    %2962 = vmatmul.bf16.gmra.mxu0 %v173
    %v2963 = vpop.f32.mrf.mxu0
    %v2964 = vadd.f32 %v2951, %v2963
    %v2965 = vpop.f32.mrf.mxu0
    %2966 = vdwg.mxu0
    %2967 = vmatpush.bf16.msra.mxu0 %v2079
    %2968 = vmatpush.bf16.msra.mxu0 %v2071
    %2969 = vmatpush.bf16.msra.mxu0 %v2063
    %2970 = vmatpush.bf16.msra.mxu0 %v2055
    %2971 = vmatpush.bf16.msra.mxu0 %v2047
    %2972 = vmatpush.bf16.msra.mxu0 %v2039
    %2973 = vmatpush.bf16.msra.mxu0 %v2031
    %2974 = vmatpush.bf16.msra.mxu0 %v2023
    %2975 = vmatmul.bf16.gmra.mxu0 %v174
    %v2976 = vpop.f32.mrf.mxu0
    %v2977 = vadd.f32 %v2964, %v2976
    %v2978 = vpop.f32.mrf.mxu0
    %2979 = vdwg.mxu0
    %2980 = vmatpush.bf16.msra.mxu0 %v2143
    %2981 = vmatpush.bf16.msra.mxu0 %v2135
    %2982 = vmatpush.bf16.msra.mxu0 %v2127
    %2983 = vmatpush.bf16.msra.mxu0 %v2119
    %2984 = vmatpush.bf16.msra.mxu0 %v2111
    %2985 = vmatpush.bf16.msra.mxu0 %v2103
    %2986 = vmatpush.bf16.msra.mxu0 %v2095
    %2987 = vmatpush.bf16.msra.mxu0 %v2087
    %2988 = vmatmul.bf16.gmra.mxu0 %v175
    %v2989 = vpop.f32.mrf.mxu0
    %v2990 = vadd.f32 %v2977, %v2989
    %v2991 = vpop.f32.mrf.mxu0
    %2992 = vdwg.mxu0
    %2993 = vmatpush.bf16.msra.mxu0 0
    %2994 = vmatpush.bf16.msra.mxu0 0
    %2995 = vmatpush.bf16.msra.mxu0 0
    %2996 = vmatpush.bf16.msra.mxu0 0
    %2997 = vmatpush.bf16.msra.mxu0 0
    %2998 = vmatpush.bf16.msra.mxu0 0
    %2999 = vmatpush.bf16.msra.mxu0 0
    %3000 = vmatpush.bf16.msra.mxu0 %v2151
    %3001 = vmatmul.bf16.gmra.mxu0 %v2549
    %v3002 = vpop.f32.mrf.mxu0
    %v3003 = vadd.f32 %v2990, %v3002
    %v3004 = vpop.f32.mrf.mxu0
    %3005 = vdwg.mxu0
    %3006 = vmatpush.bf16.msra.mxu0 %v1824
    %3007 = vmatpush.bf16.msra.mxu0 %v1816
    %3008 = vmatpush.bf16.msra.mxu0 %v1808
    %3009 = vmatpush.bf16.msra.mxu0 %v1800
    %3010 = vmatpush.bf16.msra.mxu0 %v1792
    %3011 = vmatpush.bf16.msra.mxu0 %v1784
    %3012 = vmatpush.bf16.msra.mxu0 %v1776
    %3013 = vmatpush.bf16.msra.mxu0 %v1768
    %3014 = vmatmul.bf16.gmra.mxu0 %v170
    %v3015 = vpop.f32.mrf.mxu0
    %v3016 = vadd.f32 %v576, %v3015
    %v3017 = vpop.f32.mrf.mxu0
    %3018 = vdwg.mxu0
    %3019 = vmatpush.bf16.msra.mxu0 %v1888
    %3020 = vmatpush.bf16.msra.mxu0 %v1880
    %3021 = vmatpush.bf16.msra.mxu0 %v1872
    %3022 = vmatpush.bf16.msra.mxu0 %v1864
    %3023 = vmatpush.bf16.msra.mxu0 %v1856
    %3024 = vmatpush.bf16.msra.mxu0 %v1848
    %3025 = vmatpush.bf16.msra.mxu0 %v1840
    %3026 = vmatpush.bf16.msra.mxu0 %v1832
    %3027 = vmatmul.bf16.gmra.mxu0 %v171
    %v3028 = vpop.f32.mrf.mxu0
    %v3029 = vadd.f32 %v3016, %v3028
    %v3030 = vpop.f32.mrf.mxu0
    %3031 = vdwg.mxu0
    %3032 = vmatpush.bf16.msra.mxu0 %v1952
    %3033 = vmatpush.bf16.msra.mxu0 %v1944
    %3034 = vmatpush.bf16.msra.mxu0 %v1936
    %3035 = vmatpush.bf16.msra.mxu0 %v1928
    %3036 = vmatpush.bf16.msra.mxu0 %v1920
    %3037 = vmatpush.bf16.msra.mxu0 %v1912
    %3038 = vmatpush.bf16.msra.mxu0 %v1904
    %3039 = vmatpush.bf16.msra.mxu0 %v1896
    %3040 = vmatmul.bf16.gmra.mxu0 %v172
    %v3041 = vpop.f32.mrf.mxu0
    %v3042 = vadd.f32 %v3029, %v3041
    %v3043 = vpop.f32.mrf.mxu0
    %3044 = vdwg.mxu0
    %3045 = vmatpush.bf16.msra.mxu0 %v2016
    %3046 = vmatpush.bf16.msra.mxu0 %v2008
    %3047 = vmatpush.bf16.msra.mxu0 %v2000
    %3048 = vmatpush.bf16.msra.mxu0 %v1992
    %3049 = vmatpush.bf16.msra.mxu0 %v1984
    %3050 = vmatpush.bf16.msra.mxu0 %v1976
    %3051 = vmatpush.bf16.msra.mxu0 %v1968
    %3052 = vmatpush.bf16.msra.mxu0 %v1960
    %3053 = vmatmul.bf16.gmra.mxu0 %v173
    %v3054 = vpop.f32.mrf.mxu0
    %v3055 = vadd.f32 %v3042, %v3054
    %v3056 = vpop.f32.mrf.mxu0
    %3057 = vdwg.mxu0
    %3058 = vmatpush.bf16.msra.mxu0 %v2080
    %3059 = vmatpush.bf16.msra.mxu0 %v2072
    %3060 = vmatpush.bf16.msra.mxu0 %v2064
    %3061 = vmatpush.bf16.msra.mxu0 %v2056
    %3062 = vmatpush.bf16.msra.mxu0 %v2048
    %3063 = vmatpush.bf16.msra.mxu0 %v2040
    %3064 = vmatpush.bf16.msra.mxu0 %v2032
    %3065 = vmatpush.bf16.msra.mxu0 %v2024
    %3066 = vmatmul.bf16.gmra.mxu0 %v174
    %v3067 = vpop.f32.mrf.mxu0
    %v3068 = vadd.f32 %v3055, %v3067
    %v3069 = vpop.f32.mrf.mxu0
    %3070 = vdwg.mxu0
    %3071 = vmatpush.bf16.msra.mxu0 %v2144
    %3072 = vmatpush.bf16.msra.mxu0 %v2136
    %3073 = vmatpush.bf16.msra.mxu0 %v2128
    %3074 = vmatpush.bf16.msra.mxu0 %v2120
    %3075 = vmatpush.bf16.msra.mxu0 %v2112
    %3076 = vmatpush.bf16.msra.mxu0 %v2104
    %3077 = vmatpush.bf16.msra.mxu0 %v2096
    %3078 = vmatpush.bf16.msra.mxu0 %v2088
    %3079 = vmatmul.bf16.gmra.mxu0 %v175
    %v3080 = vpop.f32.mrf.mxu0
    %v3081 = vadd.f32 %v3068, %v3080
    %v3082 = vpop.f32.mrf.mxu0
    %3083 = vdwg.mxu0
    %3084 = vmatpush.bf16.msra.mxu0 0
    %3085 = vmatpush.bf16.msra.mxu0 0
    %3086 = vmatpush.bf16.msra.mxu0 0
    %3087 = vmatpush.bf16.msra.mxu0 0
    %3088 = vmatpush.bf16.msra.mxu0 0
    %3089 = vmatpush.bf16.msra.mxu0 0
    %3090 = vmatpush.bf16.msra.mxu0 0
    %3091 = vmatpush.bf16.msra.mxu0 %v2152
    %3092 = vmatmul.bf16.gmra.mxu0 %v2549
    %v3093 = vpop.f32.mrf.mxu0
    %v3094 = vadd.f32 %v3081, %v3093
    %v3095 = vpop.f32.mrf.mxu0
    %3096 = vdwg.mxu0
    %3097 = vmatpush.bf16.msra.mxu0 %v1825
    %3098 = vmatpush.bf16.msra.mxu0 %v1817
    %3099 = vmatpush.bf16.msra.mxu0 %v1809
    %3100 = vmatpush.bf16.msra.mxu0 %v1801
    %3101 = vmatpush.bf16.msra.mxu0 %v1793
    %3102 = vmatpush.bf16.msra.mxu0 %v1785
    %3103 = vmatpush.bf16.msra.mxu0 %v1777
    %3104 = vmatpush.bf16.msra.mxu0 %v1769
    %3105 = vmatmul.bf16.gmra.mxu0 %v170
    %v3106 = vpop.f32.mrf.mxu0
    %v3107 = vadd.f32 %v577, %v3106
    %v3108 = vpop.f32.mrf.mxu0
    %3109 = vdwg.mxu0
    %3110 = vmatpush.bf16.msra.mxu0 %v1889
    %3111 = vmatpush.bf16.msra.mxu0 %v1881
    %3112 = vmatpush.bf16.msra.mxu0 %v1873
    %3113 = vmatpush.bf16.msra.mxu0 %v1865
    %3114 = vmatpush.bf16.msra.mxu0 %v1857
    %3115 = vmatpush.bf16.msra.mxu0 %v1849
    %3116 = vmatpush.bf16.msra.mxu0 %v1841
    %3117 = vmatpush.bf16.msra.mxu0 %v1833
    %3118 = vmatmul.bf16.gmra.mxu0 %v171
    %v3119 = vpop.f32.mrf.mxu0
    %v3120 = vadd.f32 %v3107, %v3119
    %v3121 = vpop.f32.mrf.mxu0
    %3122 = vdwg.mxu0
    %3123 = vmatpush.bf16.msra.mxu0 %v1953
    %3124 = vmatpush.bf16.msra.mxu0 %v1945
    %3125 = vmatpush.bf16.msra.mxu0 %v1937
    %3126 = vmatpush.bf16.msra.mxu0 %v1929
    %3127 = vmatpush.bf16.msra.mxu0 %v1921
    %3128 = vmatpush.bf16.msra.mxu0 %v1913
    %3129 = vmatpush.bf16.msra.mxu0 %v1905
    %3130 = vmatpush.bf16.msra.mxu0 %v1897
    %3131 = vmatmul.bf16.gmra.mxu0 %v172
    %v3132 = vpop.f32.mrf.mxu0
    %v3133 = vadd.f32 %v3120, %v3132
    %v3134 = vpop.f32.mrf.mxu0
    %3135 = vdwg.mxu0
    %3136 = vmatpush.bf16.msra.mxu0 %v2017
    %3137 = vmatpush.bf16.msra.mxu0 %v2009
    %3138 = vmatpush.bf16.msra.mxu0 %v2001
    %3139 = vmatpush.bf16.msra.mxu0 %v1993
    %3140 = vmatpush.bf16.msra.mxu0 %v1985
    %3141 = vmatpush.bf16.msra.mxu0 %v1977
    %3142 = vmatpush.bf16.msra.mxu0 %v1969
    %3143 = vmatpush.bf16.msra.mxu0 %v1961
    %3144 = vmatmul.bf16.gmra.mxu0 %v173
    %v3145 = vpop.f32.mrf.mxu0
    %v3146 = vadd.f32 %v3133, %v3145
    %v3147 = vpop.f32.mrf.mxu0
    %3148 = vdwg.mxu0
    %3149 = vmatpush.bf16.msra.mxu0 %v2081
    %3150 = vmatpush.bf16.msra.mxu0 %v2073
    %3151 = vmatpush.bf16.msra.mxu0 %v2065
    %3152 = vmatpush.bf16.msra.mxu0 %v2057
    %3153 = vmatpush.bf16.msra.mxu0 %v2049
    %3154 = vmatpush.bf16.msra.mxu0 %v2041
    %3155 = vmatpush.bf16.msra.mxu0 %v2033
    %3156 = vmatpush.bf16.msra.mxu0 %v2025
    %3157 = vmatmul.bf16.gmra.mxu0 %v174
    %v3158 = vpop.f32.mrf.mxu0
    %v3159 = vadd.f32 %v3146, %v3158
    %v3160 = vpop.f32.mrf.mxu0
    %3161 = vdwg.mxu0
    %3162 = vmatpush.bf16.msra.mxu0 %v2145
    %3163 = vmatpush.bf16.msra.mxu0 %v2137
    %3164 = vmatpush.bf16.msra.mxu0 %v2129
    %3165 = vmatpush.bf16.msra.mxu0 %v2121
    %3166 = vmatpush.bf16.msra.mxu0 %v2113
    %3167 = vmatpush.bf16.msra.mxu0 %v2105
    %3168 = vmatpush.bf16.msra.mxu0 %v2097
    %3169 = vmatpush.bf16.msra.mxu0 %v2089
    %3170 = vmatmul.bf16.gmra.mxu0 %v175
    %v3171 = vpop.f32.mrf.mxu0
    %v3172 = vadd.f32 %v3159, %v3171
    %v3173 = vpop.f32.mrf.mxu0
    %3174 = vdwg.mxu0
    %3175 = vmatpush.bf16.msra.mxu0 0
    %3176 = vmatpush.bf16.msra.mxu0 0
    %3177 = vmatpush.bf16.msra.mxu0 0
    %3178 = vmatpush.bf16.msra.mxu0 0
    %3179 = vmatpush.bf16.msra.mxu0 0
    %3180 = vmatpush.bf16.msra.mxu0 0
    %3181 = vmatpush.bf16.msra.mxu0 0
    %3182 = vmatpush.bf16.msra.mxu0 %v2153
    %3183 = vmatmul.bf16.gmra.mxu0 %v2549
    %v3184 = vpop.f32.mrf.mxu0
    %v3185 = vadd.f32 %v3172, %v3184
    %v3186 = vpop.f32.mrf.mxu0
    %3187 = vdwg.mxu0
    %3188 = vmatpush.bf16.msra.mxu0 %v1826
    %3189 = vmatpush.bf16.msra.mxu0 %v1818
    %3190 = vmatpush.bf16.msra.mxu0 %v1810
    %3191 = vmatpush.bf16.msra.mxu0 %v1802
    %3192 = vmatpush.bf16.msra.mxu0 %v1794
    %3193 = vmatpush.bf16.msra.mxu0 %v1786
    %3194 = vmatpush.bf16.msra.mxu0 %v1778
    %3195 = vmatpush.bf16.msra.mxu0 %v1770
    %3196 = vmatmul.bf16.gmra.mxu0 %v170
    %v3197 = vpop.f32.mrf.mxu0
    %v3198 = vadd.f32 %v578, %v3197
    %v3199 = vpop.f32.mrf.mxu0
    %3200 = vdwg.mxu0
    %3201 = vmatpush.bf16.msra.mxu0 %v1890
    %3202 = vmatpush.bf16.msra.mxu0 %v1882
    %3203 = vmatpush.bf16.msra.mxu0 %v1874
    %3204 = vmatpush.bf16.msra.mxu0 %v1866
    %3205 = vmatpush.bf16.msra.mxu0 %v1858
    %3206 = vmatpush.bf16.msra.mxu0 %v1850
    %3207 = vmatpush.bf16.msra.mxu0 %v1842
    %3208 = vmatpush.bf16.msra.mxu0 %v1834
    %3209 = vmatmul.bf16.gmra.mxu0 %v171
    %v3210 = vpop.f32.mrf.mxu0
    %v3211 = vadd.f32 %v3198, %v3210
    %v3212 = vpop.f32.mrf.mxu0
    %3213 = vdwg.mxu0
    %3214 = vmatpush.bf16.msra.mxu0 %v1954
    %3215 = vmatpush.bf16.msra.mxu0 %v1946
    %3216 = vmatpush.bf16.msra.mxu0 %v1938
    %3217 = vmatpush.bf16.msra.mxu0 %v1930
    %3218 = vmatpush.bf16.msra.mxu0 %v1922
    %3219 = vmatpush.bf16.msra.mxu0 %v1914
    %3220 = vmatpush.bf16.msra.mxu0 %v1906
    %3221 = vmatpush.bf16.msra.mxu0 %v1898
    %3222 = vmatmul.bf16.gmra.mxu0 %v172
    %v3223 = vpop.f32.mrf.mxu0
    %v3224 = vadd.f32 %v3211, %v3223
    %v3225 = vpop.f32.mrf.mxu0
    %3226 = vdwg.mxu0
    %3227 = vmatpush.bf16.msra.mxu0 %v2018
    %3228 = vmatpush.bf16.msra.mxu0 %v2010
    %3229 = vmatpush.bf16.msra.mxu0 %v2002
    %3230 = vmatpush.bf16.msra.mxu0 %v1994
    %3231 = vmatpush.bf16.msra.mxu0 %v1986
    %3232 = vmatpush.bf16.msra.mxu0 %v1978
    %3233 = vmatpush.bf16.msra.mxu0 %v1970
    %3234 = vmatpush.bf16.msra.mxu0 %v1962
    %3235 = vmatmul.bf16.gmra.mxu0 %v173
    %v3236 = vpop.f32.mrf.mxu0
    %v3237 = vadd.f32 %v3224, %v3236
    %v3238 = vpop.f32.mrf.mxu0
    %3239 = vdwg.mxu0
    %3240 = vmatpush.bf16.msra.mxu0 %v2082
    %3241 = vmatpush.bf16.msra.mxu0 %v2074
    %3242 = vmatpush.bf16.msra.mxu0 %v2066
    %3243 = vmatpush.bf16.msra.mxu0 %v2058
    %3244 = vmatpush.bf16.msra.mxu0 %v2050
    %3245 = vmatpush.bf16.msra.mxu0 %v2042
    %3246 = vmatpush.bf16.msra.mxu0 %v2034
    %3247 = vmatpush.bf16.msra.mxu0 %v2026
    %3248 = vmatmul.bf16.gmra.mxu0 %v174
    %v3249 = vpop.f32.mrf.mxu0
    %v3250 = vadd.f32 %v3237, %v3249
    %v3251 = vpop.f32.mrf.mxu0
    %3252 = vdwg.mxu0
    %3253 = vmatpush.bf16.msra.mxu0 %v2146
    %3254 = vmatpush.bf16.msra.mxu0 %v2138
    %3255 = vmatpush.bf16.msra.mxu0 %v2130
    %3256 = vmatpush.bf16.msra.mxu0 %v2122
    %3257 = vmatpush.bf16.msra.mxu0 %v2114
    %3258 = vmatpush.bf16.msra.mxu0 %v2106
    %3259 = vmatpush.bf16.msra.mxu0 %v2098
    %3260 = vmatpush.bf16.msra.mxu0 %v2090
    %3261 = vmatmul.bf16.gmra.mxu0 %v175
    %v3262 = vpop.f32.mrf.mxu0
    %v3263 = vadd.f32 %v3250, %v3262
    %v3264 = vpop.f32.mrf.mxu0
    %3265 = vdwg.mxu0
    %3266 = vmatpush.bf16.msra.mxu0 0
    %3267 = vmatpush.bf16.msra.mxu0 0
    %3268 = vmatpush.bf16.msra.mxu0 0
    %3269 = vmatpush.bf16.msra.mxu0 0
    %3270 = vmatpush.bf16.msra.mxu0 0
    %3271 = vmatpush.bf16.msra.mxu0 0
    %3272 = vmatpush.bf16.msra.mxu0 0
    %3273 = vmatpush.bf16.msra.mxu0 %v2154
    %3274 = vmatmul.bf16.gmra.mxu0 %v2549
    %v3275 = vpop.f32.mrf.mxu0
    %v3276 = vadd.f32 %v3263, %v3275
    %v3277 = vpop.f32.mrf.mxu0
    %3278 = vdwg.mxu0
    %v3279 = vmul.f32 %v2639, 0.2
    %v3280 = vmul.f32 %v2730, 0.2
    %v3281 = vmul.f32 %v2821, 0.2
    %v3282 = vmul.f32 %v2912, 0.2
    %v3283 = vmul.f32 %v3003, 0.2
    %v3284 = vmul.f32 %v3094, 0.2
    %v3285 = vmul.f32 %v3185, 0.2
    %v3286 = vmul.f32 %v3276, 0.2
    %v3287 = vmax.f32 %v2639, %v3279
    %v3288 = vmax.f32 %v2730, %v3280
    %v3289 = vmax.f32 %v2821, %v3281
    %v3290 = vmax.f32 %v2912, %v3282
    %v3291 = vmax.f32 %v3003, %v3283
    %v3292 = vmax.f32 %v3094, %v3284
    %v3293 = vmax.f32 %v3185, %v3285
    %v3294 = vmax.f32 %v3276, %v3286
    %v3295 = vpack.c.bf16 %v3287, %v3287
    %v3296 = vpack.c.bf16 %v3288, %v3288
    %v3297 = vpack.c.bf16 %v3289, %v3289
    %v3298 = vpack.c.bf16 %v3290, %v3290
    %v3299 = vpack.c.bf16 %v3291, %v3291
    %v3300 = vpack.c.bf16 %v3292, %v3292
    %v3301 = vpack.c.bf16 %v3293, %v3293
    %v3302 = vpack.c.bf16 %v3294, %v3294
    %v3303 = vld [vmem:[#allocation7] sm:$0xff]
    %v3304 = vld [vmem:[#allocation7 + $0x8] sm:$0xff]
    %v3305 = vld [vmem:[#allocation7 + $0x10] sm:$0xff]
    %v3306 = vld [vmem:[#allocation7 + $0x18] sm:$0xff]
    %v3307 = vld [vmem:[#allocation7 + $0x20] sm:$0xff]
    %v3308 = vld [vmem:[#allocation7 + $0x28] sm:$0xff]
    %v3309 = vld [vmem:[#allocation7 + $0x30] sm:$0xff]
    %v3310 = vld [vmem:[#allocation7 + $0x38] sm:$0xff]
    %v3311 = vld [vmem:[#allocation7 + $0x40] sm:$0xff]
    %v3312 = vld [vmem:[#allocation7 + $0x48] sm:$0xff]
    %v3313 = vld [vmem:[#allocation7 + $0x50] sm:$0xff]
    %v3314 = vld [vmem:[#allocation7 + $0x58] sm:$0xff]
    %v3315 = vld [vmem:[#allocation7 + $0x60] sm:$0xff]
    %v3316 = vld [vmem:[#allocation7 + $0x68] sm:$0xff]
    %v3317 = vld [vmem:[#allocation7 + $0x70] sm:$0xff]
    %v3318 = vld [vmem:[#allocation7 + $0x78] sm:$0xff]
    %v3319 = vld [vmem:[#allocation7 + $0x80] sm:$0xff]
    %v3320 = vld [vmem:[#allocation7 + $0x88] sm:$0xff]
    %v3321 = vld [vmem:[#allocation7 + $0x90] sm:$0xff]
    %v3322 = vld [vmem:[#allocation7 + $0x98] sm:$0xff]
    %v3323 = vld [vmem:[#allocation7 + $0xa0] sm:$0xff]
    %v3324 = vld [vmem:[#allocation7 + $0xa8] sm:$0xff]
    %v3325 = vld [vmem:[#allocation7 + $0xb0] sm:$0xff]
    %v3326 = vld [vmem:[#allocation7 + $0xb8] sm:$0xff]
    %v3327 = vld [vmem:[#allocation7 + $0xc0] sm:$0xff]
    %v3328 = vld [vmem:[#allocation7 + $0xc8] sm:$0xff]
    %v3329 = vld [vmem:[#allocation7 + $0xd0] sm:$0xff]
    %v3330 = vld [vmem:[#allocation7 + $0xd8] sm:$0xff]
    %v3331 = vld [vmem:[#allocation7 + $0xe0] sm:$0xff]
    %v3332 = vld [vmem:[#allocation7 + $0xe8] sm:$0xff]
    %v3333 = vld [vmem:[#allocation7 + $0xf0] sm:$0xff]
    %v3334 = vld [vmem:[#allocation7 + $0xf8] sm:$0xff]
    %v3335 = vld [vmem:[#allocation7 + $0x100] sm:$0xff]
    %v3336 = vld [vmem:[#allocation7 + $0x108] sm:$0xff]
    %v3337 = vld [vmem:[#allocation7 + $0x110] sm:$0xff]
    %v3338 = vld [vmem:[#allocation7 + $0x118] sm:$0xff]
    %v3339 = vld [vmem:[#allocation7 + $0x120] sm:$0xff]
    %v3340 = vld [vmem:[#allocation7 + $0x128] sm:$0xff]
    %v3341 = vld [vmem:[#allocation7 + $0x130] sm:$0xff]
    %v3342 = vld [vmem:[#allocation7 + $0x138] sm:$0xff]
    %v3343 = vld [vmem:[#allocation7 + $0x140] sm:$0xff]
    %v3344 = vld [vmem:[#allocation7 + $0x148] sm:$0xff]
    %v3345 = vld [vmem:[#allocation7 + $0x150] sm:$0xff]
    %v3346 = vld [vmem:[#allocation7 + $0x158] sm:$0xff]
    %v3347 = vld [vmem:[#allocation7 + $0x160] sm:$0xff]
    %v3348 = vld [vmem:[#allocation7 + $0x168] sm:$0xff]
    %v3349 = vld [vmem:[#allocation7 + $0x170] sm:$0xff]
    %v3350 = vld [vmem:[#allocation7 + $0x178] sm:$0xff]
    %v3351 = vld [vmem:[#allocation7 + $0x180] sm:$0xff]
    %v3352 = vld [vmem:[#allocation7 + $0x188] sm:$0xff]
    %v3353 = vld [vmem:[#allocation7 + $0x190] sm:$0xff]
    %v3354 = vld [vmem:[#allocation7 + $0x198] sm:$0xff]
    %v3355 = vld [vmem:[#allocation7 + $0x1a0] sm:$0xff]
    %v3356 = vld [vmem:[#allocation7 + $0x1a8] sm:$0xff]
    %v3357 = vld [vmem:[#allocation7 + $0x1b0] sm:$0xff]
    %v3358 = vld [vmem:[#allocation7 + $0x1b8] sm:$0xff]
    %v3359 = vld [vmem:[#allocation7 + $0x1c0] sm:$0xff]
    %v3360 = vld [vmem:[#allocation7 + $0x1c8] sm:$0xff]
    %v3361 = vld [vmem:[#allocation7 + $0x1d0] sm:$0xff]
    %v3362 = vld [vmem:[#allocation7 + $0x1d8] sm:$0xff]
    %v3363 = vld [vmem:[#allocation7 + $0x1e0] sm:$0xff]
    %v3364 = vld [vmem:[#allocation7 + $0x1e8] sm:$0xff]
    %v3365 = vld [vmem:[#allocation7 + $0x1f0] sm:$0xff]
    %v3366 = vld [vmem:[#allocation7 + $0x1f8] sm:$0xff]
    %v3367 = vld [vmem:[#allocation7 + $0x200] sm:$0xff]
    %v3368 = vld [vmem:[#allocation7 + $0x208] sm:$0xff]
    %v3369 = vld [vmem:[#allocation7 + $0x210] sm:$0xff]
    %v3370 = vld [vmem:[#allocation7 + $0x218] sm:$0xff]
    %v3371 = vld [vmem:[#allocation7 + $0x220] sm:$0xff]
    %v3372 = vld [vmem:[#allocation7 + $0x228] sm:$0xff]
    %v3373 = vld [vmem:[#allocation7 + $0x230] sm:$0xff]
    %v3374 = vld [vmem:[#allocation7 + $0x238] sm:$0xff]
    %v3375 = vld [vmem:[#allocation7 + $0x240] sm:$0xff]
    %v3376 = vld [vmem:[#allocation7 + $0x248] sm:$0xff]
    %v3377 = vld [vmem:[#allocation7 + $0x250] sm:$0xff]
    %v3378 = vld [vmem:[#allocation7 + $0x258] sm:$0xff]
    %v3379 = vld [vmem:[#allocation7 + $0x260] sm:$0xff]
    %v3380 = vld [vmem:[#allocation7 + $0x268] sm:$0xff]
    %v3381 = vld [vmem:[#allocation7 + $0x270] sm:$0xff]
    %v3382 = vld [vmem:[#allocation7 + $0x278] sm:$0xff]
    %v3383 = vld [vmem:[#allocation7 + $0x280] sm:$0xff]
    %v3384 = vld [vmem:[#allocation7 + $0x288] sm:$0xff]
    %v3385 = vld [vmem:[#allocation7 + $0x290] sm:$0xff]
    %v3386 = vld [vmem:[#allocation7 + $0x298] sm:$0xff]
    %v3387 = vld [vmem:[#allocation7 + $0x2a0] sm:$0xff]
    %v3388 = vld [vmem:[#allocation7 + $0x2a8] sm:$0xff]
    %v3389 = vld [vmem:[#allocation7 + $0x2b0] sm:$0xff]
    %v3390 = vld [vmem:[#allocation7 + $0x2b8] sm:$0xff]
    %v3391 = vld [vmem:[#allocation7 + $0x2c0] sm:$0xff]
    %v3392 = vld [vmem:[#allocation7 + $0x2c8] sm:$0xff]
    %v3393 = vld [vmem:[#allocation7 + $0x2d0] sm:$0xff]
    %v3394 = vld [vmem:[#allocation7 + $0x2d8] sm:$0xff]
    %v3395 = vld [vmem:[#allocation7 + $0x2e0] sm:$0xff]
    %v3396 = vld [vmem:[#allocation7 + $0x2e8] sm:$0xff]
    %v3397 = vld [vmem:[#allocation7 + $0x2f0] sm:$0xff]
    %v3398 = vld [vmem:[#allocation7 + $0x2f8] sm:$0xff]
    %v3399 = vld [vmem:[#allocation7 + $0x300] sm:$0xff]
    %v3400 = vld [vmem:[#allocation7 + $0x308] sm:$0xff]
    %v3401 = vld [vmem:[#allocation7 + $0x310] sm:$0xff]
    %v3402 = vld [vmem:[#allocation7 + $0x318] sm:$0xff]
    %v3403 = vld [vmem:[#allocation7 + $0x320] sm:$0xff]
    %v3404 = vld [vmem:[#allocation7 + $0x328] sm:$0xff]
    %v3405 = vld [vmem:[#allocation7 + $0x330] sm:$0xff]
    %v3406 = vld [vmem:[#allocation7 + $0x338] sm:$0xff]
    %v3407 = vld [vmem:[#allocation7 + $0x340] sm:$0xff]
    %v3408 = vld [vmem:[#allocation7 + $0x348] sm:$0xff]
    %v3409 = vld [vmem:[#allocation7 + $0x350] sm:$0xff]
    %v3410 = vld [vmem:[#allocation7 + $0x358] sm:$0xff]
    %v3411 = vld [vmem:[#allocation7 + $0x360] sm:$0xff]
    %v3412 = vld [vmem:[#allocation7 + $0x368] sm:$0xff]
    %v3413 = vld [vmem:[#allocation7 + $0x370] sm:$0xff]
    %v3414 = vld [vmem:[#allocation7 + $0x378] sm:$0xff]
    %v3415 = vld [vmem:[#allocation7 + $0x380] sm:$0xff]
    %v3416 = vld [vmem:[#allocation7 + $0x388] sm:$0xff]
    %v3417 = vld [vmem:[#allocation7 + $0x390] sm:$0xff]
    %v3418 = vld [vmem:[#allocation7 + $0x398] sm:$0xff]
    %v3419 = vld [vmem:[#allocation7 + $0x3a0] sm:$0xff]
    %v3420 = vld [vmem:[#allocation7 + $0x3a8] sm:$0xff]
    %v3421 = vld [vmem:[#allocation7 + $0x3b0] sm:$0xff]
    %v3422 = vld [vmem:[#allocation7 + $0x3b8] sm:$0xff]
    %v3423 = vld [vmem:[#allocation7 + $0x3c0] sm:$0xff]
    %v3424 = vld [vmem:[#allocation7 + $0x3c8] sm:$0xff]
    %v3425 = vld [vmem:[#allocation7 + $0x3d0] sm:$0xff]
    %v3426 = vld [vmem:[#allocation7 + $0x3d8] sm:$0xff]
    %v3427 = vld [vmem:[#allocation7 + $0x3e0] sm:$0xff]
    %v3428 = vld [vmem:[#allocation7 + $0x3e8] sm:$0xff]
    %v3429 = vld [vmem:[#allocation7 + $0x3f0] sm:$0xff]
    %v3430 = vld [vmem:[#allocation7 + $0x3f8] sm:$0xff]
    %v3431 = vld [vmem:[#allocation7 + $0x400] sm:$0xff]
    %v3432 = vld [vmem:[#allocation7 + $0x408] sm:$0xff]
    %v3433 = vld [vmem:[#allocation7 + $0x410] sm:$0xff]
    %v3434 = vld [vmem:[#allocation7 + $0x418] sm:$0xff]
    %v3435 = vld [vmem:[#allocation7 + $0x420] sm:$0xff]
    %v3436 = vld [vmem:[#allocation7 + $0x428] sm:$0xff]
    %v3437 = vld [vmem:[#allocation7 + $0x430] sm:$0xff]
    %v3438 = vld [vmem:[#allocation7 + $0x438] sm:$0xff]
    %v3439 = vld [vmem:[#allocation7 + $0x440] sm:$0xff]
    %v3440 = vld [vmem:[#allocation7 + $0x448] sm:$0xff]
    %v3441 = vld [vmem:[#allocation7 + $0x450] sm:$0xff]
    %v3442 = vld [vmem:[#allocation7 + $0x458] sm:$0xff]
    %v3443 = vld [vmem:[#allocation7 + $0x460] sm:$0xff]
    %v3444 = vld [vmem:[#allocation7 + $0x468] sm:$0xff]
    %v3445 = vld [vmem:[#allocation7 + $0x470] sm:$0xff]
    %v3446 = vld [vmem:[#allocation7 + $0x478] sm:$0xff]
    %v3447 = vld [vmem:[#allocation7 + $0x480] sm:$0xff]
    %v3448 = vld [vmem:[#allocation7 + $0x488] sm:$0xff]
    %v3449 = vld [vmem:[#allocation7 + $0x490] sm:$0xff]
    %v3450 = vld [vmem:[#allocation7 + $0x498] sm:$0xff]
    %v3451 = vld [vmem:[#allocation7 + $0x4a0] sm:$0xff]
    %v3452 = vld [vmem:[#allocation7 + $0x4a8] sm:$0xff]
    %v3453 = vld [vmem:[#allocation7 + $0x4b0] sm:$0xff]
    %v3454 = vld [vmem:[#allocation7 + $0x4b8] sm:$0xff]
    %v3455 = vld [vmem:[#allocation7 + $0x4c0] sm:$0xff]
    %v3456 = vld [vmem:[#allocation7 + $0x4c8] sm:$0xff]
    %v3457 = vld [vmem:[#allocation7 + $0x4d0] sm:$0xff]
    %v3458 = vld [vmem:[#allocation7 + $0x4d8] sm:$0xff]
    %v3459 = vld [vmem:[#allocation7 + $0x4e0] sm:$0xff]
    %v3460 = vld [vmem:[#allocation7 + $0x4e8] sm:$0xff]
    %v3461 = vld [vmem:[#allocation7 + $0x4f0] sm:$0xff]
    %v3462 = vld [vmem:[#allocation7 + $0x4f8] sm:$0xff]
    %v3463 = vld [vmem:[#allocation7 + $0x500] sm:$0xff]
    %v3464 = vld [vmem:[#allocation7 + $0x508] sm:$0xff]
    %v3465 = vld [vmem:[#allocation7 + $0x510] sm:$0xff]
    %v3466 = vld [vmem:[#allocation7 + $0x518] sm:$0xff]
    %v3467 = vld [vmem:[#allocation7 + $0x520] sm:$0xff]
    %v3468 = vld [vmem:[#allocation7 + $0x528] sm:$0xff]
    %v3469 = vld [vmem:[#allocation7 + $0x530] sm:$0xff]
    %v3470 = vld [vmem:[#allocation7 + $0x538] sm:$0xff]
    %v3471 = vld [vmem:[#allocation7 + $0x540] sm:$0xff]
    %v3472 = vld [vmem:[#allocation7 + $0x548] sm:$0xff]
    %v3473 = vld [vmem:[#allocation7 + $0x550] sm:$0xff]
    %v3474 = vld [vmem:[#allocation7 + $0x558] sm:$0xff]
    %v3475 = vld [vmem:[#allocation7 + $0x560] sm:$0xff]
    %v3476 = vld [vmem:[#allocation7 + $0x568] sm:$0xff]
    %v3477 = vld [vmem:[#allocation7 + $0x570] sm:$0xff]
    %v3478 = vld [vmem:[#allocation7 + $0x578] sm:$0xff]
    %v3479 = vld [vmem:[#allocation7 + $0x580] sm:$0xff]
    %v3480 = vld [vmem:[#allocation7 + $0x588] sm:$0xff]
    %v3481 = vld [vmem:[#allocation7 + $0x590] sm:$0xff]
    %v3482 = vld [vmem:[#allocation7 + $0x598] sm:$0xff]
    %v3483 = vld [vmem:[#allocation7 + $0x5a0] sm:$0xff]
    %v3484 = vld [vmem:[#allocation7 + $0x5a8] sm:$0xff]
    %v3485 = vld [vmem:[#allocation7 + $0x5b0] sm:$0xff]
    %v3486 = vld [vmem:[#allocation7 + $0x5b8] sm:$0xff]
    %v3487 = vld [vmem:[#allocation7 + $0x5c0] sm:$0xff]
    %v3488 = vld [vmem:[#allocation7 + $0x5c8] sm:$0xff]
    %v3489 = vld [vmem:[#allocation7 + $0x5d0] sm:$0xff]
    %v3490 = vld [vmem:[#allocation7 + $0x5d8] sm:$0xff]
    %v3491 = vld [vmem:[#allocation7 + $0x5e0] sm:$0xff]
    %v3492 = vld [vmem:[#allocation7 + $0x5e8] sm:$0xff]
    %v3493 = vld [vmem:[#allocation7 + $0x5f0] sm:$0xff]
    %v3494 = vld [vmem:[#allocation7 + $0x5f8] sm:$0xff]
    %v3495 = vld [vmem:[#allocation7 + $0x600] sm:$0xff]
    %v3496 = vld [vmem:[#allocation7 + $0x608] sm:$0xff]
    %v3497 = vld [vmem:[#allocation7 + $0x610] sm:$0xff]
    %v3498 = vld [vmem:[#allocation7 + $0x618] sm:$0xff]
    %v3499 = vld [vmem:[#allocation7 + $0x620] sm:$0xff]
    %v3500 = vld [vmem:[#allocation7 + $0x628] sm:$0xff]
    %v3501 = vld [vmem:[#allocation7 + $0x630] sm:$0xff]
    %v3502 = vld [vmem:[#allocation7 + $0x638] sm:$0xff]
    %v3503 = vld [vmem:[#allocation7 + $0x640] sm:$0xff]
    %v3504 = vld [vmem:[#allocation7 + $0x648] sm:$0xff]
    %v3505 = vld [vmem:[#allocation7 + $0x650] sm:$0xff]
    %v3506 = vld [vmem:[#allocation7 + $0x658] sm:$0xff]
    %v3507 = vld [vmem:[#allocation7 + $0x660] sm:$0xff]
    %v3508 = vld [vmem:[#allocation7 + $0x668] sm:$0xff]
    %v3509 = vld [vmem:[#allocation7 + $0x670] sm:$0xff]
    %v3510 = vld [vmem:[#allocation7 + $0x678] sm:$0xff]
    %v3511 = vld [vmem:[#allocation7 + $0x680] sm:$0xff]
    %v3512 = vld [vmem:[#allocation7 + $0x688] sm:$0xff]
    %v3513 = vld [vmem:[#allocation7 + $0x690] sm:$0xff]
    %v3514 = vld [vmem:[#allocation7 + $0x698] sm:$0xff]
    %v3515 = vld [vmem:[#allocation7 + $0x6a0] sm:$0xff]
    %v3516 = vld [vmem:[#allocation7 + $0x6a8] sm:$0xff]
    %v3517 = vld [vmem:[#allocation7 + $0x6b0] sm:$0xff]
    %v3518 = vld [vmem:[#allocation7 + $0x6b8] sm:$0xff]
    %v3519 = vld [vmem:[#allocation7 + $0x6c0] sm:$0xff]
    %v3520 = vld [vmem:[#allocation7 + $0x6c8] sm:$0xff]
    %v3521 = vld [vmem:[#allocation7 + $0x6d0] sm:$0xff]
    %v3522 = vld [vmem:[#allocation7 + $0x6d8] sm:$0xff]
    %v3523 = vld [vmem:[#allocation7 + $0x6e0] sm:$0xff]
    %v3524 = vld [vmem:[#allocation7 + $0x6e8] sm:$0xff]
    %v3525 = vld [vmem:[#allocation7 + $0x6f0] sm:$0xff]
    %v3526 = vld [vmem:[#allocation7 + $0x6f8] sm:$0xff]
    %v3527 = vld [vmem:[#allocation7 + $0x700] sm:$0xff]
    %v3528 = vld [vmem:[#allocation7 + $0x708] sm:$0xff]
    %v3529 = vld [vmem:[#allocation7 + $0x710] sm:$0xff]
    %v3530 = vld [vmem:[#allocation7 + $0x718] sm:$0xff]
    %v3531 = vld [vmem:[#allocation7 + $0x720] sm:$0xff]
    %v3532 = vld [vmem:[#allocation7 + $0x728] sm:$0xff]
    %v3533 = vld [vmem:[#allocation7 + $0x730] sm:$0xff]
    %v3534 = vld [vmem:[#allocation7 + $0x738] sm:$0xff]
    %v3535 = vld [vmem:[#allocation7 + $0x740] sm:$0xff]
    %v3536 = vld [vmem:[#allocation7 + $0x748] sm:$0xff]
    %v3537 = vld [vmem:[#allocation7 + $0x750] sm:$0xff]
    %v3538 = vld [vmem:[#allocation7 + $0x758] sm:$0xff]
    %v3539 = vld [vmem:[#allocation7 + $0x760] sm:$0xff]
    %v3540 = vld [vmem:[#allocation7 + $0x768] sm:$0xff]
    %v3541 = vld [vmem:[#allocation7 + $0x770] sm:$0xff]
    %v3542 = vld [vmem:[#allocation7 + $0x778] sm:$0xff]
    %v3543 = vld [vmem:[#allocation7 + $0x780] sm:$0xff]
    %v3544 = vld [vmem:[#allocation7 + $0x788] sm:$0xff]
    %v3545 = vld [vmem:[#allocation7 + $0x790] sm:$0xff]
    %v3546 = vld [vmem:[#allocation7 + $0x798] sm:$0xff]
    %v3547 = vld [vmem:[#allocation7 + $0x7a0] sm:$0xff]
    %v3548 = vld [vmem:[#allocation7 + $0x7a8] sm:$0xff]
    %v3549 = vld [vmem:[#allocation7 + $0x7b0] sm:$0xff]
    %v3550 = vld [vmem:[#allocation7 + $0x7b8] sm:$0xff]
    %v3551 = vld [vmem:[#allocation7 + $0x7c0] sm:$0xff]
    %v3552 = vld [vmem:[#allocation7 + $0x7c8] sm:$0xff]
    %v3553 = vld [vmem:[#allocation7 + $0x7d0] sm:$0xff]
    %v3554 = vld [vmem:[#allocation7 + $0x7d8] sm:$0xff]
    %v3555 = vld [vmem:[#allocation7 + $0x7e0] sm:$0xff]
    %v3556 = vld [vmem:[#allocation7 + $0x7e8] sm:$0xff]
    %v3557 = vld [vmem:[#allocation7 + $0x7f0] sm:$0xff]
    %v3558 = vld [vmem:[#allocation7 + $0x7f8] sm:$0xff]
    %v3559 = vld [vmem:[#allocation9] sm:$0xf]
    %v3561 = vperm.slane %v3559, 0
    %v3562 = vperm.slane %v3559, 1
    %v3563 = vperm.slane %v3559, 2
    %v3564 = vperm.slane %v3559, 3
    %v3825 = vunpack.c.l.b16 %v3303
    %v3826 = vunpack.c.h.b16 %v3303
    %v3827 = vunpack.c.l.b16 %v3304
    %v3828 = vunpack.c.h.b16 %v3304
    %v3829 = vunpack.c.l.b16 %v3305
    %v3830 = vunpack.c.h.b16 %v3305
    %v3831 = vunpack.c.l.b16 %v3306
    %v3832 = vunpack.c.h.b16 %v3306
    %v3833 = vunpack.c.l.b16 %v3307
    %v3834 = vunpack.c.h.b16 %v3307
    %v3835 = vunpack.c.l.b16 %v3308
    %v3836 = vunpack.c.h.b16 %v3308
    %v3837 = vunpack.c.l.b16 %v3309
    %v3838 = vunpack.c.h.b16 %v3309
    %v3839 = vunpack.c.l.b16 %v3310
    %v3840 = vunpack.c.h.b16 %v3310
    %v3841 = vunpack.c.l.b16 %v3311
    %v3842 = vunpack.c.h.b16 %v3311
    %v3843 = vunpack.c.l.b16 %v3312
    %v3844 = vunpack.c.h.b16 %v3312
    %v3845 = vunpack.c.l.b16 %v3313
    %v3846 = vunpack.c.h.b16 %v3313
    %v3847 = vunpack.c.l.b16 %v3314
    %v3848 = vunpack.c.h.b16 %v3314
    %v3849 = vunpack.c.l.b16 %v3315
    %v3850 = vunpack.c.h.b16 %v3315
    %v3851 = vunpack.c.l.b16 %v3316
    %v3852 = vunpack.c.h.b16 %v3316
    %v3853 = vunpack.c.l.b16 %v3317
    %v3854 = vunpack.c.h.b16 %v3317
    %v3855 = vunpack.c.l.b16 %v3318
    %v3856 = vunpack.c.h.b16 %v3318
    %v3857 = vunpack.c.l.b16 %v3319
    %v3858 = vunpack.c.h.b16 %v3319
    %v3859 = vunpack.c.l.b16 %v3320
    %v3860 = vunpack.c.h.b16 %v3320
    %v3861 = vunpack.c.l.b16 %v3321
    %v3862 = vunpack.c.h.b16 %v3321
    %v3863 = vunpack.c.l.b16 %v3322
    %v3864 = vunpack.c.h.b16 %v3322
    %v3865 = vunpack.c.l.b16 %v3323
    %v3866 = vunpack.c.h.b16 %v3323
    %v3867 = vunpack.c.l.b16 %v3324
    %v3868 = vunpack.c.h.b16 %v3324
    %v3869 = vunpack.c.l.b16 %v3325
    %v3870 = vunpack.c.h.b16 %v3325
    %v3871 = vunpack.c.l.b16 %v3326
    %v3872 = vunpack.c.h.b16 %v3326
    %v3873 = vunpack.c.l.b16 %v3327
    %v3874 = vunpack.c.h.b16 %v3327
    %v3875 = vunpack.c.l.b16 %v3328
    %v3876 = vunpack.c.h.b16 %v3328
    %v3877 = vunpack.c.l.b16 %v3329
    %v3878 = vunpack.c.h.b16 %v3329
    %v3879 = vunpack.c.l.b16 %v3330
    %v3880 = vunpack.c.h.b16 %v3330
    %v3881 = vunpack.c.l.b16 %v3331
    %v3882 = vunpack.c.h.b16 %v3331
    %v3883 = vunpack.c.l.b16 %v3332
    %v3884 = vunpack.c.h.b16 %v3332
    %v3885 = vunpack.c.l.b16 %v3333
    %v3886 = vunpack.c.h.b16 %v3333
    %v3887 = vunpack.c.l.b16 %v3334
    %v3888 = vunpack.c.h.b16 %v3334
    %v3889 = vunpack.c.l.b16 %v3335
    %v3890 = vunpack.c.h.b16 %v3335
    %v3891 = vunpack.c.l.b16 %v3336
    %v3892 = vunpack.c.h.b16 %v3336
    %v3893 = vunpack.c.l.b16 %v3337
    %v3894 = vunpack.c.h.b16 %v3337
    %v3895 = vunpack.c.l.b16 %v3338
    %v3896 = vunpack.c.h.b16 %v3338
    %v3897 = vunpack.c.l.b16 %v3339
    %v3898 = vunpack.c.h.b16 %v3339
    %v3899 = vunpack.c.l.b16 %v3340
    %v3900 = vunpack.c.h.b16 %v3340
    %v3901 = vunpack.c.l.b16 %v3341
    %v3902 = vunpack.c.h.b16 %v3341
    %v3903 = vunpack.c.l.b16 %v3342
    %v3904 = vunpack.c.h.b16 %v3342
    %v3905 = vunpack.c.l.b16 %v3343
    %v3906 = vunpack.c.h.b16 %v3343
    %v3907 = vunpack.c.l.b16 %v3344
    %v3908 = vunpack.c.h.b16 %v3344
    %v3909 = vunpack.c.l.b16 %v3345
    %v3910 = vunpack.c.h.b16 %v3345
    %v3911 = vunpack.c.l.b16 %v3346
    %v3912 = vunpack.c.h.b16 %v3346
    %v3913 = vunpack.c.l.b16 %v3347
    %v3914 = vunpack.c.h.b16 %v3347
    %v3915 = vunpack.c.l.b16 %v3348
    %v3916 = vunpack.c.h.b16 %v3348
    %v3917 = vunpack.c.l.b16 %v3349
    %v3918 = vunpack.c.h.b16 %v3349
    %v3919 = vunpack.c.l.b16 %v3350
    %v3920 = vunpack.c.h.b16 %v3350
    %v3921 = vunpack.c.l.b16 %v3351
    %v3922 = vunpack.c.h.b16 %v3351
    %v3923 = vunpack.c.l.b16 %v3352
    %v3924 = vunpack.c.h.b16 %v3352
    %v3925 = vunpack.c.l.b16 %v3353
    %v3926 = vunpack.c.h.b16 %v3353
    %v3927 = vunpack.c.l.b16 %v3354
    %v3928 = vunpack.c.h.b16 %v3354
    %v3929 = vunpack.c.l.b16 %v3355
    %v3930 = vunpack.c.h.b16 %v3355
    %v3931 = vunpack.c.l.b16 %v3356
    %v3932 = vunpack.c.h.b16 %v3356
    %v3933 = vunpack.c.l.b16 %v3357
    %v3934 = vunpack.c.h.b16 %v3357
    %v3935 = vunpack.c.l.b16 %v3358
    %v3936 = vunpack.c.h.b16 %v3358
    %v3937 = vunpack.c.l.b16 %v3359
    %v3938 = vunpack.c.h.b16 %v3359
    %v3939 = vunpack.c.l.b16 %v3360
    %v3940 = vunpack.c.h.b16 %v3360
    %v3941 = vunpack.c.l.b16 %v3361
    %v3942 = vunpack.c.h.b16 %v3361
    %v3943 = vunpack.c.l.b16 %v3362
    %v3944 = vunpack.c.h.b16 %v3362
    %v3945 = vunpack.c.l.b16 %v3363
    %v3946 = vunpack.c.h.b16 %v3363
    %v3947 = vunpack.c.l.b16 %v3364
    %v3948 = vunpack.c.h.b16 %v3364
    %v3949 = vunpack.c.l.b16 %v3365
    %v3950 = vunpack.c.h.b16 %v3365
    %v3951 = vunpack.c.l.b16 %v3366
    %v3952 = vunpack.c.h.b16 %v3366
    %v3953 = vunpack.c.l.b16 %v3367
    %v3954 = vunpack.c.h.b16 %v3367
    %v3955 = vunpack.c.l.b16 %v3368
    %v3956 = vunpack.c.h.b16 %v3368
    %v3957 = vunpack.c.l.b16 %v3369
    %v3958 = vunpack.c.h.b16 %v3369
    %v3959 = vunpack.c.l.b16 %v3370
    %v3960 = vunpack.c.h.b16 %v3370
    %v3961 = vunpack.c.l.b16 %v3371
    %v3962 = vunpack.c.h.b16 %v3371
    %v3963 = vunpack.c.l.b16 %v3372
    %v3964 = vunpack.c.h.b16 %v3372
    %v3965 = vunpack.c.l.b16 %v3373
    %v3966 = vunpack.c.h.b16 %v3373
    %v3967 = vunpack.c.l.b16 %v3374
    %v3968 = vunpack.c.h.b16 %v3374
    %v3969 = vunpack.c.l.b16 %v3375
    %v3970 = vunpack.c.h.b16 %v3375
    %v3971 = vunpack.c.l.b16 %v3376
    %v3972 = vunpack.c.h.b16 %v3376
    %v3973 = vunpack.c.l.b16 %v3377
    %v3974 = vunpack.c.h.b16 %v3377
    %v3975 = vunpack.c.l.b16 %v3378
    %v3976 = vunpack.c.h.b16 %v3378
    %v3977 = vunpack.c.l.b16 %v3379
    %v3978 = vunpack.c.h.b16 %v3379
    %v3979 = vunpack.c.l.b16 %v3380
    %v3980 = vunpack.c.h.b16 %v3380
    %v3981 = vunpack.c.l.b16 %v3381
    %v3982 = vunpack.c.h.b16 %v3381
    %v3983 = vunpack.c.l.b16 %v3382
    %v3984 = vunpack.c.h.b16 %v3382
    %v3985 = vunpack.c.l.b16 %v3383
    %v3986 = vunpack.c.h.b16 %v3383
    %v3987 = vunpack.c.l.b16 %v3384
    %v3988 = vunpack.c.h.b16 %v3384
    %v3989 = vunpack.c.l.b16 %v3385
    %v3990 = vunpack.c.h.b16 %v3385
    %v3991 = vunpack.c.l.b16 %v3386
    %v3992 = vunpack.c.h.b16 %v3386
    %v3993 = vunpack.c.l.b16 %v3387
    %v3994 = vunpack.c.h.b16 %v3387
    %v3995 = vunpack.c.l.b16 %v3388
    %v3996 = vunpack.c.h.b16 %v3388
    %v3997 = vunpack.c.l.b16 %v3389
    %v3998 = vunpack.c.h.b16 %v3389
    %v3999 = vunpack.c.l.b16 %v3390
    %v4000 = vunpack.c.h.b16 %v3390
    %v4001 = vunpack.c.l.b16 %v3391
    %v4002 = vunpack.c.h.b16 %v3391
    %v4003 = vunpack.c.l.b16 %v3392
    %v4004 = vunpack.c.h.b16 %v3392
    %v4005 = vunpack.c.l.b16 %v3393
    %v4006 = vunpack.c.h.b16 %v3393
    %v4007 = vunpack.c.l.b16 %v3394
    %v4008 = vunpack.c.h.b16 %v3394
    %v4009 = vunpack.c.l.b16 %v3395
    %v4010 = vunpack.c.h.b16 %v3395
    %v4011 = vunpack.c.l.b16 %v3396
    %v4012 = vunpack.c.h.b16 %v3396
    %v4013 = vunpack.c.l.b16 %v3397
    %v4014 = vunpack.c.h.b16 %v3397
    %v4015 = vunpack.c.l.b16 %v3398
    %v4016 = vunpack.c.h.b16 %v3398
    %v4017 = vunpack.c.l.b16 %v3399
    %v4018 = vunpack.c.h.b16 %v3399
    %v4019 = vunpack.c.l.b16 %v3400
    %v4020 = vunpack.c.h.b16 %v3400
    %v4021 = vunpack.c.l.b16 %v3401
    %v4022 = vunpack.c.h.b16 %v3401
    %v4023 = vunpack.c.l.b16 %v3402
    %v4024 = vunpack.c.h.b16 %v3402
    %v4025 = vunpack.c.l.b16 %v3403
    %v4026 = vunpack.c.h.b16 %v3403
    %v4027 = vunpack.c.l.b16 %v3404
    %v4028 = vunpack.c.h.b16 %v3404
    %v4029 = vunpack.c.l.b16 %v3405
    %v4030 = vunpack.c.h.b16 %v3405
    %v4031 = vunpack.c.l.b16 %v3406
    %v4032 = vunpack.c.h.b16 %v3406
    %v4033 = vunpack.c.l.b16 %v3407
    %v4034 = vunpack.c.h.b16 %v3407
    %v4035 = vunpack.c.l.b16 %v3408
    %v4036 = vunpack.c.h.b16 %v3408
    %v4037 = vunpack.c.l.b16 %v3409
    %v4038 = vunpack.c.h.b16 %v3409
    %v4039 = vunpack.c.l.b16 %v3410
    %v4040 = vunpack.c.h.b16 %v3410
    %v4041 = vunpack.c.l.b16 %v3411
    %v4042 = vunpack.c.h.b16 %v3411
    %v4043 = vunpack.c.l.b16 %v3412
    %v4044 = vunpack.c.h.b16 %v3412
    %v4045 = vunpack.c.l.b16 %v3413
    %v4046 = vunpack.c.h.b16 %v3413
    %v4047 = vunpack.c.l.b16 %v3414
    %v4048 = vunpack.c.h.b16 %v3414
    %v4049 = vunpack.c.l.b16 %v3415
    %v4050 = vunpack.c.h.b16 %v3415
    %v4051 = vunpack.c.l.b16 %v3416
    %v4052 = vunpack.c.h.b16 %v3416
    %v4053 = vunpack.c.l.b16 %v3417
    %v4054 = vunpack.c.h.b16 %v3417
    %v4055 = vunpack.c.l.b16 %v3418
    %v4056 = vunpack.c.h.b16 %v3418
    %v4057 = vunpack.c.l.b16 %v3419
    %v4058 = vunpack.c.h.b16 %v3419
    %v4059 = vunpack.c.l.b16 %v3420
    %v4060 = vunpack.c.h.b16 %v3420
    %v4061 = vunpack.c.l.b16 %v3421
    %v4062 = vunpack.c.h.b16 %v3421
    %v4063 = vunpack.c.l.b16 %v3422
    %v4064 = vunpack.c.h.b16 %v3422
    %v4065 = vunpack.c.l.b16 %v3423
    %v4066 = vunpack.c.h.b16 %v3423
    %v4067 = vunpack.c.l.b16 %v3424
    %v4068 = vunpack.c.h.b16 %v3424
    %v4069 = vunpack.c.l.b16 %v3425
    %v4070 = vunpack.c.h.b16 %v3425
    %v4071 = vunpack.c.l.b16 %v3426
    %v4072 = vunpack.c.h.b16 %v3426
    %v4073 = vunpack.c.l.b16 %v3427
    %v4074 = vunpack.c.h.b16 %v3427
    %v4075 = vunpack.c.l.b16 %v3428
    %v4076 = vunpack.c.h.b16 %v3428
    %v4077 = vunpack.c.l.b16 %v3429
    %v4078 = vunpack.c.h.b16 %v3429
    %v4079 = vunpack.c.l.b16 %v3430
    %v4080 = vunpack.c.h.b16 %v3430
    %v4081 = vunpack.c.l.b16 %v3431
    %v4082 = vunpack.c.h.b16 %v3431
    %v4083 = vunpack.c.l.b16 %v3432
    %v4084 = vunpack.c.h.b16 %v3432
    %v4085 = vunpack.c.l.b16 %v3433
    %v4086 = vunpack.c.h.b16 %v3433
    %v4087 = vunpack.c.l.b16 %v3434
    %v4088 = vunpack.c.h.b16 %v3434
    %v4089 = vunpack.c.l.b16 %v3435
    %v4090 = vunpack.c.h.b16 %v3435
    %v4091 = vunpack.c.l.b16 %v3436
    %v4092 = vunpack.c.h.b16 %v3436
    %v4093 = vunpack.c.l.b16 %v3437
    %v4094 = vunpack.c.h.b16 %v3437
    %v4095 = vunpack.c.l.b16 %v3438
    %v4096 = vunpack.c.h.b16 %v3438
    %v4097 = vunpack.c.l.b16 %v3439
    %v4098 = vunpack.c.h.b16 %v3439
    %v4099 = vunpack.c.l.b16 %v3440
    %v4100 = vunpack.c.h.b16 %v3440
    %v4101 = vunpack.c.l.b16 %v3441
    %v4102 = vunpack.c.h.b16 %v3441
    %v4103 = vunpack.c.l.b16 %v3442
    %v4104 = vunpack.c.h.b16 %v3442
    %v4105 = vunpack.c.l.b16 %v3443
    %v4106 = vunpack.c.h.b16 %v3443
    %v4107 = vunpack.c.l.b16 %v3444
    %v4108 = vunpack.c.h.b16 %v3444
    %v4109 = vunpack.c.l.b16 %v3445
    %v4110 = vunpack.c.h.b16 %v3445
    %v4111 = vunpack.c.l.b16 %v3446
    %v4112 = vunpack.c.h.b16 %v3446
    %v4113 = vunpack.c.l.b16 %v3447
    %v4114 = vunpack.c.h.b16 %v3447
    %v4115 = vunpack.c.l.b16 %v3448
    %v4116 = vunpack.c.h.b16 %v3448
    %v4117 = vunpack.c.l.b16 %v3449
    %v4118 = vunpack.c.h.b16 %v3449
    %v4119 = vunpack.c.l.b16 %v3450
    %v4120 = vunpack.c.h.b16 %v3450
    %v4121 = vunpack.c.l.b16 %v3451
    %v4122 = vunpack.c.h.b16 %v3451
    %v4123 = vunpack.c.l.b16 %v3452
    %v4124 = vunpack.c.h.b16 %v3452
    %v4125 = vunpack.c.l.b16 %v3453
    %v4126 = vunpack.c.h.b16 %v3453
    %v4127 = vunpack.c.l.b16 %v3454
    %v4128 = vunpack.c.h.b16 %v3454
    %v4129 = vunpack.c.l.b16 %v3455
    %v4130 = vunpack.c.h.b16 %v3455
    %v4131 = vunpack.c.l.b16 %v3456
    %v4132 = vunpack.c.h.b16 %v3456
    %v4133 = vunpack.c.l.b16 %v3457
    %v4134 = vunpack.c.h.b16 %v3457
    %v4135 = vunpack.c.l.b16 %v3458
    %v4136 = vunpack.c.h.b16 %v3458
    %v4137 = vunpack.c.l.b16 %v3459
    %v4138 = vunpack.c.h.b16 %v3459
    %v4139 = vunpack.c.l.b16 %v3460
    %v4140 = vunpack.c.h.b16 %v3460
    %v4141 = vunpack.c.l.b16 %v3461
    %v4142 = vunpack.c.h.b16 %v3461
    %v4143 = vunpack.c.l.b16 %v3462
    %v4144 = vunpack.c.h.b16 %v3462
    %v4145 = vunpack.c.l.b16 %v3463
    %v4146 = vunpack.c.h.b16 %v3463
    %v4147 = vunpack.c.l.b16 %v3464
    %v4148 = vunpack.c.h.b16 %v3464
    %v4149 = vunpack.c.l.b16 %v3465
    %v4150 = vunpack.c.h.b16 %v3465
    %v4151 = vunpack.c.l.b16 %v3466
    %v4152 = vunpack.c.h.b16 %v3466
    %v4153 = vunpack.c.l.b16 %v3467
    %v4154 = vunpack.c.h.b16 %v3467
    %v4155 = vunpack.c.l.b16 %v3468
    %v4156 = vunpack.c.h.b16 %v3468
    %v4157 = vunpack.c.l.b16 %v3469
    %v4158 = vunpack.c.h.b16 %v3469
    %v4159 = vunpack.c.l.b16 %v3470
    %v4160 = vunpack.c.h.b16 %v3470
    %v4161 = vunpack.c.l.b16 %v3471
    %v4162 = vunpack.c.h.b16 %v3471
    %v4163 = vunpack.c.l.b16 %v3472
    %v4164 = vunpack.c.h.b16 %v3472
    %v4165 = vunpack.c.l.b16 %v3473
    %v4166 = vunpack.c.h.b16 %v3473
    %v4167 = vunpack.c.l.b16 %v3474
    %v4168 = vunpack.c.h.b16 %v3474
    %v4169 = vunpack.c.l.b16 %v3475
    %v4170 = vunpack.c.h.b16 %v3475
    %v4171 = vunpack.c.l.b16 %v3476
    %v4172 = vunpack.c.h.b16 %v3476
    %v4173 = vunpack.c.l.b16 %v3477
    %v4174 = vunpack.c.h.b16 %v3477
    %v4175 = vunpack.c.l.b16 %v3478
    %v4176 = vunpack.c.h.b16 %v3478
    %v4177 = vunpack.c.l.b16 %v3479
    %v4178 = vunpack.c.h.b16 %v3479
    %v4179 = vunpack.c.l.b16 %v3480
    %v4180 = vunpack.c.h.b16 %v3480
    %v4181 = vunpack.c.l.b16 %v3481
    %v4182 = vunpack.c.h.b16 %v3481
    %v4183 = vunpack.c.l.b16 %v3482
    %v4184 = vunpack.c.h.b16 %v3482
    %v4185 = vunpack.c.l.b16 %v3483
    %v4186 = vunpack.c.h.b16 %v3483
    %v4187 = vunpack.c.l.b16 %v3484
    %v4188 = vunpack.c.h.b16 %v3484
    %v4189 = vunpack.c.l.b16 %v3485
    %v4190 = vunpack.c.h.b16 %v3485
    %v4191 = vunpack.c.l.b16 %v3486
    %v4192 = vunpack.c.h.b16 %v3486
    %v4193 = vunpack.c.l.b16 %v3487
    %v4194 = vunpack.c.h.b16 %v3487
    %v4195 = vunpack.c.l.b16 %v3488
    %v4196 = vunpack.c.h.b16 %v3488
    %v4197 = vunpack.c.l.b16 %v3489
    %v4198 = vunpack.c.h.b16 %v3489
    %v4199 = vunpack.c.l.b16 %v3490
    %v4200 = vunpack.c.h.b16 %v3490
    %v4201 = vunpack.c.l.b16 %v3491
    %v4202 = vunpack.c.h.b16 %v3491
    %v4203 = vunpack.c.l.b16 %v3492
    %v4204 = vunpack.c.h.b16 %v3492
    %v4205 = vunpack.c.l.b16 %v3493
    %v4206 = vunpack.c.h.b16 %v3493
    %v4207 = vunpack.c.l.b16 %v3494
    %v4208 = vunpack.c.h.b16 %v3494
    %v4209 = vunpack.c.l.b16 %v3495
    %v4210 = vunpack.c.h.b16 %v3495
    %v4211 = vunpack.c.l.b16 %v3496
    %v4212 = vunpack.c.h.b16 %v3496
    %v4213 = vunpack.c.l.b16 %v3497
    %v4214 = vunpack.c.h.b16 %v3497
    %v4215 = vunpack.c.l.b16 %v3498
    %v4216 = vunpack.c.h.b16 %v3498
    %v4217 = vunpack.c.l.b16 %v3499
    %v4218 = vunpack.c.h.b16 %v3499
    %v4219 = vunpack.c.l.b16 %v3500
    %v4220 = vunpack.c.h.b16 %v3500
    %v4221 = vunpack.c.l.b16 %v3501
    %v4222 = vunpack.c.h.b16 %v3501
    %v4223 = vunpack.c.l.b16 %v3502
    %v4224 = vunpack.c.h.b16 %v3502
    %v4225 = vunpack.c.l.b16 %v3503
    %v4226 = vunpack.c.h.b16 %v3503
    %v4227 = vunpack.c.l.b16 %v3504
    %v4228 = vunpack.c.h.b16 %v3504
    %v4229 = vunpack.c.l.b16 %v3505
    %v4230 = vunpack.c.h.b16 %v3505
    %v4231 = vunpack.c.l.b16 %v3506
    %v4232 = vunpack.c.h.b16 %v3506
    %v4233 = vunpack.c.l.b16 %v3507
    %v4234 = vunpack.c.h.b16 %v3507
    %v4235 = vunpack.c.l.b16 %v3508
    %v4236 = vunpack.c.h.b16 %v3508
    %v4237 = vunpack.c.l.b16 %v3509
    %v4238 = vunpack.c.h.b16 %v3509
    %v4239 = vunpack.c.l.b16 %v3510
    %v4240 = vunpack.c.h.b16 %v3510
    %v4241 = vunpack.c.l.b16 %v3511
    %v4242 = vunpack.c.h.b16 %v3511
    %v4243 = vunpack.c.l.b16 %v3512
    %v4244 = vunpack.c.h.b16 %v3512
    %v4245 = vunpack.c.l.b16 %v3513
    %v4246 = vunpack.c.h.b16 %v3513
    %v4247 = vunpack.c.l.b16 %v3514
    %v4248 = vunpack.c.h.b16 %v3514
    %v4249 = vunpack.c.l.b16 %v3515
    %v4250 = vunpack.c.h.b16 %v3515
    %v4251 = vunpack.c.l.b16 %v3516
    %v4252 = vunpack.c.h.b16 %v3516
    %v4253 = vunpack.c.l.b16 %v3517
    %v4254 = vunpack.c.h.b16 %v3517
    %v4255 = vunpack.c.l.b16 %v3518
    %v4256 = vunpack.c.h.b16 %v3518
    %v4257 = vunpack.c.l.b16 %v3519
    %v4258 = vunpack.c.h.b16 %v3519
    %v4259 = vunpack.c.l.b16 %v3520
    %v4260 = vunpack.c.h.b16 %v3520
    %v4261 = vunpack.c.l.b16 %v3521
    %v4262 = vunpack.c.h.b16 %v3521
    %v4263 = vunpack.c.l.b16 %v3522
    %v4264 = vunpack.c.h.b16 %v3522
    %v4265 = vunpack.c.l.b16 %v3523
    %v4266 = vunpack.c.h.b16 %v3523
    %v4267 = vunpack.c.l.b16 %v3524
    %v4268 = vunpack.c.h.b16 %v3524
    %v4269 = vunpack.c.l.b16 %v3525
    %v4270 = vunpack.c.h.b16 %v3525
    %v4271 = vunpack.c.l.b16 %v3526
    %v4272 = vunpack.c.h.b16 %v3526
    %v4273 = vunpack.c.l.b16 %v3527
    %v4274 = vunpack.c.h.b16 %v3527
    %v4275 = vunpack.c.l.b16 %v3528
    %v4276 = vunpack.c.h.b16 %v3528
    %v4277 = vunpack.c.l.b16 %v3529
    %v4278 = vunpack.c.h.b16 %v3529
    %v4279 = vunpack.c.l.b16 %v3530
    %v4280 = vunpack.c.h.b16 %v3530
    %v4281 = vunpack.c.l.b16 %v3531
    %v4282 = vunpack.c.h.b16 %v3531
    %v4283 = vunpack.c.l.b16 %v3532
    %v4284 = vunpack.c.h.b16 %v3532
    %v4285 = vunpack.c.l.b16 %v3533
    %v4286 = vunpack.c.h.b16 %v3533
    %v4287 = vunpack.c.l.b16 %v3534
    %v4288 = vunpack.c.h.b16 %v3534
    %v4289 = vunpack.c.l.b16 %v3535
    %v4290 = vunpack.c.h.b16 %v3535
    %v4291 = vunpack.c.l.b16 %v3536
    %v4292 = vunpack.c.h.b16 %v3536
    %v4293 = vunpack.c.l.b16 %v3537
    %v4294 = vunpack.c.h.b16 %v3537
    %v4295 = vunpack.c.l.b16 %v3538
    %v4296 = vunpack.c.h.b16 %v3538
    %v4297 = vunpack.c.l.b16 %v3539
    %v4298 = vunpack.c.h.b16 %v3539
    %v4299 = vunpack.c.l.b16 %v3540
    %v4300 = vunpack.c.h.b16 %v3540
    %v4301 = vunpack.c.l.b16 %v3541
    %v4302 = vunpack.c.h.b16 %v3541
    %v4303 = vunpack.c.l.b16 %v3542
    %v4304 = vunpack.c.h.b16 %v3542
    %v4305 = vunpack.c.l.b16 %v3543
    %v4306 = vunpack.c.h.b16 %v3543
    %v4307 = vunpack.c.l.b16 %v3544
    %v4308 = vunpack.c.h.b16 %v3544
    %v4309 = vunpack.c.l.b16 %v3545
    %v4310 = vunpack.c.h.b16 %v3545
    %v4311 = vunpack.c.l.b16 %v3546
    %v4312 = vunpack.c.h.b16 %v3546
    %v4313 = vunpack.c.l.b16 %v3547
    %v4314 = vunpack.c.h.b16 %v3547
    %v4315 = vunpack.c.l.b16 %v3548
    %v4316 = vunpack.c.h.b16 %v3548
    %v4317 = vunpack.c.l.b16 %v3549
    %v4318 = vunpack.c.h.b16 %v3549
    %v4319 = vunpack.c.l.b16 %v3550
    %v4320 = vunpack.c.h.b16 %v3550
    %v4321 = vunpack.c.l.b16 %v3551
    %v4322 = vunpack.c.h.b16 %v3551
    %v4323 = vunpack.c.l.b16 %v3552
    %v4324 = vunpack.c.h.b16 %v3552
    %v4325 = vunpack.c.l.b16 %v3553
    %v4326 = vunpack.c.h.b16 %v3553
    %v4327 = vunpack.c.l.b16 %v3554
    %v4328 = vunpack.c.h.b16 %v3554
    %v4329 = vunpack.c.l.b16 %v3555
    %v4330 = vunpack.c.h.b16 %v3555
    %v4331 = vunpack.c.l.b16 %v3556
    %v4332 = vunpack.c.h.b16 %v3556
    %v4333 = vunpack.c.l.b16 %v3557
    %v4334 = vunpack.c.h.b16 %v3557
    %v4335 = vunpack.c.l.b16 %v3558
    %v4336 = vunpack.c.h.b16 %v3558
    %v4337 = vpack.c.b16 %v3829, %v3825
    %v4338 = vpack.c.b16 %v3830, %v3826
    %v4339 = vpack.c.b16 %v3831, %v3827
    %v4340 = vpack.c.b16 %v3832, %v3828
    %v4341 = vpack.c.b16 %v3837, %v3833
    %v4342 = vpack.c.b16 %v3838, %v3834
    %v4343 = vpack.c.b16 %v3839, %v3835
    %v4344 = vpack.c.b16 %v3840, %v3836
    %v4345 = vpack.c.b16 %v3845, %v3841
    %v4346 = vpack.c.b16 %v3846, %v3842
    %v4347 = vpack.c.b16 %v3847, %v3843
    %v4348 = vpack.c.b16 %v3848, %v3844
    %v4349 = vpack.c.b16 %v3853, %v3849
    %v4350 = vpack.c.b16 %v3854, %v3850
    %v4351 = vpack.c.b16 %v3855, %v3851
    %v4352 = vpack.c.b16 %v3856, %v3852
    %v4353 = vpack.c.b16 %v3861, %v3857
    %v4354 = vpack.c.b16 %v3862, %v3858
    %v4355 = vpack.c.b16 %v3863, %v3859
    %v4356 = vpack.c.b16 %v3864, %v3860
    %v4357 = vpack.c.b16 %v3869, %v3865
    %v4358 = vpack.c.b16 %v3870, %v3866
    %v4359 = vpack.c.b16 %v3871, %v3867
    %v4360 = vpack.c.b16 %v3872, %v3868
    %v4361 = vpack.c.b16 %v3877, %v3873
    %v4362 = vpack.c.b16 %v3878, %v3874
    %v4363 = vpack.c.b16 %v3879, %v3875
    %v4364 = vpack.c.b16 %v3880, %v3876
    %v4365 = vpack.c.b16 %v3885, %v3881
    %v4366 = vpack.c.b16 %v3886, %v3882
    %v4367 = vpack.c.b16 %v3887, %v3883
    %v4368 = vpack.c.b16 %v3888, %v3884
    %v4369 = vpack.c.b16 %v3893, %v3889
    %v4370 = vpack.c.b16 %v3894, %v3890
    %v4371 = vpack.c.b16 %v3895, %v3891
    %v4372 = vpack.c.b16 %v3896, %v3892
    %v4373 = vpack.c.b16 %v3901, %v3897
    %v4374 = vpack.c.b16 %v3902, %v3898
    %v4375 = vpack.c.b16 %v3903, %v3899
    %v4376 = vpack.c.b16 %v3904, %v3900
    %v4377 = vpack.c.b16 %v3909, %v3905
    %v4378 = vpack.c.b16 %v3910, %v3906
    %v4379 = vpack.c.b16 %v3911, %v3907
    %v4380 = vpack.c.b16 %v3912, %v3908
    %v4381 = vpack.c.b16 %v3917, %v3913
    %v4382 = vpack.c.b16 %v3918, %v3914
    %v4383 = vpack.c.b16 %v3919, %v3915
    %v4384 = vpack.c.b16 %v3920, %v3916
    %v4385 = vpack.c.b16 %v3925, %v3921
    %v4386 = vpack.c.b16 %v3926, %v3922
    %v4387 = vpack.c.b16 %v3927, %v3923
    %v4388 = vpack.c.b16 %v3928, %v3924
    %v4389 = vpack.c.b16 %v3933, %v3929
    %v4390 = vpack.c.b16 %v3934, %v3930
    %v4391 = vpack.c.b16 %v3935, %v3931
    %v4392 = vpack.c.b16 %v3936, %v3932
    %v4393 = vpack.c.b16 %v3941, %v3937
    %v4394 = vpack.c.b16 %v3942, %v3938
    %v4395 = vpack.c.b16 %v3943, %v3939
    %v4396 = vpack.c.b16 %v3944, %v3940
    %v4397 = vpack.c.b16 %v3949, %v3945
    %v4398 = vpack.c.b16 %v3950, %v3946
    %v4399 = vpack.c.b16 %v3951, %v3947
    %v4400 = vpack.c.b16 %v3952, %v3948
    %v4401 = vpack.c.b16 %v3957, %v3953
    %v4402 = vpack.c.b16 %v3958, %v3954
    %v4403 = vpack.c.b16 %v3959, %v3955
    %v4404 = vpack.c.b16 %v3960, %v3956
    %v4405 = vpack.c.b16 %v3965, %v3961
    %v4406 = vpack.c.b16 %v3966, %v3962
    %v4407 = vpack.c.b16 %v3967, %v3963
    %v4408 = vpack.c.b16 %v3968, %v3964
    %v4409 = vpack.c.b16 %v3973, %v3969
    %v4410 = vpack.c.b16 %v3974, %v3970
    %v4411 = vpack.c.b16 %v3975, %v3971
    %v4412 = vpack.c.b16 %v3976, %v3972
    %v4413 = vpack.c.b16 %v3981, %v3977
    %v4414 = vpack.c.b16 %v3982, %v3978
    %v4415 = vpack.c.b16 %v3983, %v3979
    %v4416 = vpack.c.b16 %v3984, %v3980
    %v4417 = vpack.c.b16 %v3989, %v3985
    %v4418 = vpack.c.b16 %v3990, %v3986
    %v4419 = vpack.c.b16 %v3991, %v3987
    %v4420 = vpack.c.b16 %v3992, %v3988
    %v4421 = vpack.c.b16 %v3997, %v3993
    %v4422 = vpack.c.b16 %v3998, %v3994
    %v4423 = vpack.c.b16 %v3999, %v3995
    %v4424 = vpack.c.b16 %v4000, %v3996
    %v4425 = vpack.c.b16 %v4005, %v4001
    %v4426 = vpack.c.b16 %v4006, %v4002
    %v4427 = vpack.c.b16 %v4007, %v4003
    %v4428 = vpack.c.b16 %v4008, %v4004
    %v4429 = vpack.c.b16 %v4013, %v4009
    %v4430 = vpack.c.b16 %v4014, %v4010
    %v4431 = vpack.c.b16 %v4015, %v4011
    %v4432 = vpack.c.b16 %v4016, %v4012
    %v4433 = vpack.c.b16 %v4021, %v4017
    %v4434 = vpack.c.b16 %v4022, %v4018
    %v4435 = vpack.c.b16 %v4023, %v4019
    %v4436 = vpack.c.b16 %v4024, %v4020
    %v4437 = vpack.c.b16 %v4029, %v4025
    %v4438 = vpack.c.b16 %v4030, %v4026
    %v4439 = vpack.c.b16 %v4031, %v4027
    %v4440 = vpack.c.b16 %v4032, %v4028
    %v4441 = vpack.c.b16 %v4037, %v4033
    %v4442 = vpack.c.b16 %v4038, %v4034
    %v4443 = vpack.c.b16 %v4039, %v4035
    %v4444 = vpack.c.b16 %v4040, %v4036
    %v4445 = vpack.c.b16 %v4045, %v4041
    %v4446 = vpack.c.b16 %v4046, %v4042
    %v4447 = vpack.c.b16 %v4047, %v4043
    %v4448 = vpack.c.b16 %v4048, %v4044
    %v4449 = vpack.c.b16 %v4053, %v4049
    %v4450 = vpack.c.b16 %v4054, %v4050
    %v4451 = vpack.c.b16 %v4055, %v4051
    %v4452 = vpack.c.b16 %v4056, %v4052
    %v4453 = vpack.c.b16 %v4061, %v4057
    %v4454 = vpack.c.b16 %v4062, %v4058
    %v4455 = vpack.c.b16 %v4063, %v4059
    %v4456 = vpack.c.b16 %v4064, %v4060
    %v4457 = vpack.c.b16 %v4069, %v4065
    %v4458 = vpack.c.b16 %v4070, %v4066
    %v4459 = vpack.c.b16 %v4071, %v4067
    %v4460 = vpack.c.b16 %v4072, %v4068
    %v4461 = vpack.c.b16 %v4077, %v4073
    %v4462 = vpack.c.b16 %v4078, %v4074
    %v4463 = vpack.c.b16 %v4079, %v4075
    %v4464 = vpack.c.b16 %v4080, %v4076
    %v4465 = vpack.c.b16 %v4085, %v4081
    %v4466 = vpack.c.b16 %v4086, %v4082
    %v4467 = vpack.c.b16 %v4087, %v4083
    %v4468 = vpack.c.b16 %v4088, %v4084
    %v4469 = vpack.c.b16 %v4093, %v4089
    %v4470 = vpack.c.b16 %v4094, %v4090
    %v4471 = vpack.c.b16 %v4095, %v4091
    %v4472 = vpack.c.b16 %v4096, %v4092
    %v4473 = vpack.c.b16 %v4101, %v4097
    %v4474 = vpack.c.b16 %v4102, %v4098
    %v4475 = vpack.c.b16 %v4103, %v4099
    %v4476 = vpack.c.b16 %v4104, %v4100
    %v4477 = vpack.c.b16 %v4109, %v4105
    %v4478 = vpack.c.b16 %v4110, %v4106
    %v4479 = vpack.c.b16 %v4111, %v4107
    %v4480 = vpack.c.b16 %v4112, %v4108
    %v4481 = vpack.c.b16 %v4117, %v4113
    %v4482 = vpack.c.b16 %v4118, %v4114
    %v4483 = vpack.c.b16 %v4119, %v4115
    %v4484 = vpack.c.b16 %v4120, %v4116
    %v4485 = vpack.c.b16 %v4125, %v4121
    %v4486 = vpack.c.b16 %v4126, %v4122
    %v4487 = vpack.c.b16 %v4127, %v4123
    %v4488 = vpack.c.b16 %v4128, %v4124
    %v4489 = vpack.c.b16 %v4133, %v4129
    %v4490 = vpack.c.b16 %v4134, %v4130
    %v4491 = vpack.c.b16 %v4135, %v4131
    %v4492 = vpack.c.b16 %v4136, %v4132
    %v4493 = vpack.c.b16 %v4141, %v4137
    %v4494 = vpack.c.b16 %v4142, %v4138
    %v4495 = vpack.c.b16 %v4143, %v4139
    %v4496 = vpack.c.b16 %v4144, %v4140
    %v4497 = vpack.c.b16 %v4149, %v4145
    %v4498 = vpack.c.b16 %v4150, %v4146
    %v4499 = vpack.c.b16 %v4151, %v4147
    %v4500 = vpack.c.b16 %v4152, %v4148
    %v4501 = vpack.c.b16 %v4157, %v4153
    %v4502 = vpack.c.b16 %v4158, %v4154
    %v4503 = vpack.c.b16 %v4159, %v4155
    %v4504 = vpack.c.b16 %v4160, %v4156
    %v4505 = vpack.c.b16 %v4165, %v4161
    %v4506 = vpack.c.b16 %v4166, %v4162
    %v4507 = vpack.c.b16 %v4167, %v4163
    %v4508 = vpack.c.b16 %v4168, %v4164
    %v4509 = vpack.c.b16 %v4173, %v4169
    %v4510 = vpack.c.b16 %v4174, %v4170
    %v4511 = vpack.c.b16 %v4175, %v4171
    %v4512 = vpack.c.b16 %v4176, %v4172
    %v4513 = vpack.c.b16 %v4181, %v4177
    %v4514 = vpack.c.b16 %v4182, %v4178
    %v4515 = vpack.c.b16 %v4183, %v4179
    %v4516 = vpack.c.b16 %v4184, %v4180
    %v4517 = vpack.c.b16 %v4189, %v4185
    %v4518 = vpack.c.b16 %v4190, %v4186
    %v4519 = vpack.c.b16 %v4191, %v4187
    %v4520 = vpack.c.b16 %v4192, %v4188
    %v4521 = vpack.c.b16 %v4197, %v4193
    %v4522 = vpack.c.b16 %v4198, %v4194
    %v4523 = vpack.c.b16 %v4199, %v4195
    %v4524 = vpack.c.b16 %v4200, %v4196
    %v4525 = vpack.c.b16 %v4205, %v4201
    %v4526 = vpack.c.b16 %v4206, %v4202
    %v4527 = vpack.c.b16 %v4207, %v4203
    %v4528 = vpack.c.b16 %v4208, %v4204
    %v4529 = vpack.c.b16 %v4213, %v4209
    %v4530 = vpack.c.b16 %v4214, %v4210
    %v4531 = vpack.c.b16 %v4215, %v4211
    %v4532 = vpack.c.b16 %v4216, %v4212
    %v4533 = vpack.c.b16 %v4221, %v4217
    %v4534 = vpack.c.b16 %v4222, %v4218
    %v4535 = vpack.c.b16 %v4223, %v4219
    %v4536 = vpack.c.b16 %v4224, %v4220
    %v4537 = vpack.c.b16 %v4229, %v4225
    %v4538 = vpack.c.b16 %v4230, %v4226
    %v4539 = vpack.c.b16 %v4231, %v4227
    %v4540 = vpack.c.b16 %v4232, %v4228
    %v4541 = vpack.c.b16 %v4237, %v4233
    %v4542 = vpack.c.b16 %v4238, %v4234
    %v4543 = vpack.c.b16 %v4239, %v4235
    %v4544 = vpack.c.b16 %v4240, %v4236
    %v4545 = vpack.c.b16 %v4245, %v4241
    %v4546 = vpack.c.b16 %v4246, %v4242
    %v4547 = vpack.c.b16 %v4247, %v4243
    %v4548 = vpack.c.b16 %v4248, %v4244
    %v4549 = vpack.c.b16 %v4253, %v4249
    %v4550 = vpack.c.b16 %v4254, %v4250
    %v4551 = vpack.c.b16 %v4255, %v4251
    %v4552 = vpack.c.b16 %v4256, %v4252
    %v4553 = vpack.c.b16 %v4261, %v4257
    %v4554 = vpack.c.b16 %v4262, %v4258
    %v4555 = vpack.c.b16 %v4263, %v4259
    %v4556 = vpack.c.b16 %v4264, %v4260
    %v4557 = vpack.c.b16 %v4269, %v4265
    %v4558 = vpack.c.b16 %v4270, %v4266
    %v4559 = vpack.c.b16 %v4271, %v4267
    %v4560 = vpack.c.b16 %v4272, %v4268
    %v4561 = vpack.c.b16 %v4277, %v4273
    %v4562 = vpack.c.b16 %v4278, %v4274
    %v4563 = vpack.c.b16 %v4279, %v4275
    %v4564 = vpack.c.b16 %v4280, %v4276
    %v4565 = vpack.c.b16 %v4285, %v4281
    %v4566 = vpack.c.b16 %v4286, %v4282
    %v4567 = vpack.c.b16 %v4287, %v4283
    %v4568 = vpack.c.b16 %v4288, %v4284
    %v4569 = vpack.c.b16 %v4293, %v4289
    %v4570 = vpack.c.b16 %v4294, %v4290
    %v4571 = vpack.c.b16 %v4295, %v4291
    %v4572 = vpack.c.b16 %v4296, %v4292
    %v4573 = vpack.c.b16 %v4301, %v4297
    %v4574 = vpack.c.b16 %v4302, %v4298
    %v4575 = vpack.c.b16 %v4303, %v4299
    %v4576 = vpack.c.b16 %v4304, %v4300
    %v4577 = vpack.c.b16 %v4309, %v4305
    %v4578 = vpack.c.b16 %v4310, %v4306
    %v4579 = vpack.c.b16 %v4311, %v4307
    %v4580 = vpack.c.b16 %v4312, %v4308
    %v4581 = vpack.c.b16 %v4317, %v4313
    %v4582 = vpack.c.b16 %v4318, %v4314
    %v4583 = vpack.c.b16 %v4319, %v4315
    %v4584 = vpack.c.b16 %v4320, %v4316
    %v4585 = vpack.c.b16 %v4325, %v4321
    %v4586 = vpack.c.b16 %v4326, %v4322
    %v4587 = vpack.c.b16 %v4327, %v4323
    %v4588 = vpack.c.b16 %v4328, %v4324
    %v4589 = vpack.c.b16 %v4333, %v4329
    %v4590 = vpack.c.b16 %v4334, %v4330
    %v4591 = vpack.c.b16 %v4335, %v4331
    %v4592 = vpack.c.b16 %v4336, %v4332
    %4849 = vmatpush.bf16.msra.mxu0 %v4365
    %4850 = vmatpush.bf16.msra.mxu0 %v4361
    %4851 = vmatpush.bf16.msra.mxu0 %v4357
    %4852 = vmatpush.bf16.msra.mxu0 %v4353
    %4853 = vmatpush.bf16.msra.mxu0 %v4349
    %4854 = vmatpush.bf16.msra.mxu0 %v4345
    %4855 = vmatpush.bf16.msra.mxu0 %v4341
    %4856 = vmatpush.bf16.msra.mxu0 %v4337
    %4857 = vmatmul.bf16.gmra.mxu0 %v3295
    %v4858 = vpop.f32.mrf.mxu0
    %v4859 = vadd.f32 %v3561, %v4858
    %v4860 = vpop.f32.mrf.mxu0
    %4861 = vdwg.mxu0
    %4862 = vmatpush.bf16.msra.mxu0 %v4397
    %4863 = vmatpush.bf16.msra.mxu0 %v4393
    %4864 = vmatpush.bf16.msra.mxu0 %v4389
    %4865 = vmatpush.bf16.msra.mxu0 %v4385
    %4866 = vmatpush.bf16.msra.mxu0 %v4381
    %4867 = vmatpush.bf16.msra.mxu0 %v4377
    %4868 = vmatpush.bf16.msra.mxu0 %v4373
    %4869 = vmatpush.bf16.msra.mxu0 %v4369
    %4870 = vmatmul.bf16.gmra.mxu0 %v3296
    %v4871 = vpop.f32.mrf.mxu0
    %v4872 = vadd.f32 %v4859, %v4871
    %v4873 = vpop.f32.mrf.mxu0
    %4874 = vdwg.mxu0
    %4875 = vmatpush.bf16.msra.mxu0 %v4429
    %4876 = vmatpush.bf16.msra.mxu0 %v4425
    %4877 = vmatpush.bf16.msra.mxu0 %v4421
    %4878 = vmatpush.bf16.msra.mxu0 %v4417
    %4879 = vmatpush.bf16.msra.mxu0 %v4413
    %4880 = vmatpush.bf16.msra.mxu0 %v4409
    %4881 = vmatpush.bf16.msra.mxu0 %v4405
    %4882 = vmatpush.bf16.msra.mxu0 %v4401
    %4883 = vmatmul.bf16.gmra.mxu0 %v3297
    %v4884 = vpop.f32.mrf.mxu0
    %v4885 = vadd.f32 %v4872, %v4884
    %v4886 = vpop.f32.mrf.mxu0
    %4887 = vdwg.mxu0
    %4888 = vmatpush.bf16.msra.mxu0 %v4461
    %4889 = vmatpush.bf16.msra.mxu0 %v4457
    %4890 = vmatpush.bf16.msra.mxu0 %v4453
    %4891 = vmatpush.bf16.msra.mxu0 %v4449
    %4892 = vmatpush.bf16.msra.mxu0 %v4445
    %4893 = vmatpush.bf16.msra.mxu0 %v4441
    %4894 = vmatpush.bf16.msra.mxu0 %v4437
    %4895 = vmatpush.bf16.msra.mxu0 %v4433
    %4896 = vmatmul.bf16.gmra.mxu0 %v3298
    %v4897 = vpop.f32.mrf.mxu0
    %v4898 = vadd.f32 %v4885, %v4897
    %v4899 = vpop.f32.mrf.mxu0
    %4900 = vdwg.mxu0
    %4901 = vmatpush.bf16.msra.mxu0 %v4493
    %4902 = vmatpush.bf16.msra.mxu0 %v4489
    %4903 = vmatpush.bf16.msra.mxu0 %v4485
    %4904 = vmatpush.bf16.msra.mxu0 %v4481
    %4905 = vmatpush.bf16.msra.mxu0 %v4477
    %4906 = vmatpush.bf16.msra.mxu0 %v4473
    %4907 = vmatpush.bf16.msra.mxu0 %v4469
    %4908 = vmatpush.bf16.msra.mxu0 %v4465
    %4909 = vmatmul.bf16.gmra.mxu0 %v3299
    %v4910 = vpop.f32.mrf.mxu0
    %v4911 = vadd.f32 %v4898, %v4910
    %v4912 = vpop.f32.mrf.mxu0
    %4913 = vdwg.mxu0
    %4914 = vmatpush.bf16.msra.mxu0 %v4525
    %4915 = vmatpush.bf16.msra.mxu0 %v4521
    %4916 = vmatpush.bf16.msra.mxu0 %v4517
    %4917 = vmatpush.bf16.msra.mxu0 %v4513
    %4918 = vmatpush.bf16.msra.mxu0 %v4509
    %4919 = vmatpush.bf16.msra.mxu0 %v4505
    %4920 = vmatpush.bf16.msra.mxu0 %v4501
    %4921 = vmatpush.bf16.msra.mxu0 %v4497
    %4922 = vmatmul.bf16.gmra.mxu0 %v3300
    %v4923 = vpop.f32.mrf.mxu0
    %v4924 = vadd.f32 %v4911, %v4923
    %v4925 = vpop.f32.mrf.mxu0
    %4926 = vdwg.mxu0
    %4927 = vmatpush.bf16.msra.mxu0 %v4557
    %4928 = vmatpush.bf16.msra.mxu0 %v4553
    %4929 = vmatpush.bf16.msra.mxu0 %v4549
    %4930 = vmatpush.bf16.msra.mxu0 %v4545
    %4931 = vmatpush.bf16.msra.mxu0 %v4541
    %4932 = vmatpush.bf16.msra.mxu0 %v4537
    %4933 = vmatpush.bf16.msra.mxu0 %v4533
    %4934 = vmatpush.bf16.msra.mxu0 %v4529
    %4935 = vmatmul.bf16.gmra.mxu0 %v3301
    %v4936 = vpop.f32.mrf.mxu0
    %v4937 = vadd.f32 %v4924, %v4936
    %v4938 = vpop.f32.mrf.mxu0
    %4939 = vdwg.mxu0
    %4940 = vmatpush.bf16.msra.mxu0 %v4589
    %4941 = vmatpush.bf16.msra.mxu0 %v4585
    %4942 = vmatpush.bf16.msra.mxu0 %v4581
    %4943 = vmatpush.bf16.msra.mxu0 %v4577
    %4944 = vmatpush.bf16.msra.mxu0 %v4573
    %4945 = vmatpush.bf16.msra.mxu0 %v4569
    %4946 = vmatpush.bf16.msra.mxu0 %v4565
    %4947 = vmatpush.bf16.msra.mxu0 %v4561
    %4948 = vmatmul.bf16.gmra.mxu0 %v3302
    %v4949 = vpop.f32.mrf.mxu0
    %v4950 = vadd.f32 %v4937, %v4949
    %v4951 = vpop.f32.mrf.mxu0
    %4952 = vdwg.mxu0
    %4953 = vmatpush.bf16.msra.mxu0 %v4366
    %4954 = vmatpush.bf16.msra.mxu0 %v4362
    %4955 = vmatpush.bf16.msra.mxu0 %v4358
    %4956 = vmatpush.bf16.msra.mxu0 %v4354
    %4957 = vmatpush.bf16.msra.mxu0 %v4350
    %4958 = vmatpush.bf16.msra.mxu0 %v4346
    %4959 = vmatpush.bf16.msra.mxu0 %v4342
    %4960 = vmatpush.bf16.msra.mxu0 %v4338
    %4961 = vmatmul.bf16.gmra.mxu0 %v3295
    %v4962 = vpop.f32.mrf.mxu0
    %v4963 = vadd.f32 %v3562, %v4962
    %v4964 = vpop.f32.mrf.mxu0
    %4965 = vdwg.mxu0
    %4966 = vmatpush.bf16.msra.mxu0 %v4398
    %4967 = vmatpush.bf16.msra.mxu0 %v4394
    %4968 = vmatpush.bf16.msra.mxu0 %v4390
    %4969 = vmatpush.bf16.msra.mxu0 %v4386
    %4970 = vmatpush.bf16.msra.mxu0 %v4382
    %4971 = vmatpush.bf16.msra.mxu0 %v4378
    %4972 = vmatpush.bf16.msra.mxu0 %v4374
    %4973 = vmatpush.bf16.msra.mxu0 %v4370
    %4974 = vmatmul.bf16.gmra.mxu0 %v3296
    %v4975 = vpop.f32.mrf.mxu0
    %v4976 = vadd.f32 %v4963, %v4975
    %v4977 = vpop.f32.mrf.mxu0
    %4978 = vdwg.mxu0
    %4979 = vmatpush.bf16.msra.mxu0 %v4430
    %4980 = vmatpush.bf16.msra.mxu0 %v4426
    %4981 = vmatpush.bf16.msra.mxu0 %v4422
    %4982 = vmatpush.bf16.msra.mxu0 %v4418
    %4983 = vmatpush.bf16.msra.mxu0 %v4414
    %4984 = vmatpush.bf16.msra.mxu0 %v4410
    %4985 = vmatpush.bf16.msra.mxu0 %v4406
    %4986 = vmatpush.bf16.msra.mxu0 %v4402
    %4987 = vmatmul.bf16.gmra.mxu0 %v3297
    %v4988 = vpop.f32.mrf.mxu0
    %v4989 = vadd.f32 %v4976, %v4988
    %v4990 = vpop.f32.mrf.mxu0
    %4991 = vdwg.mxu0
    %4992 = vmatpush.bf16.msra.mxu0 %v4462
    %4993 = vmatpush.bf16.msra.mxu0 %v4458
    %4994 = vmatpush.bf16.msra.mxu0 %v4454
    %4995 = vmatpush.bf16.msra.mxu0 %v4450
    %4996 = vmatpush.bf16.msra.mxu0 %v4446
    %4997 = vmatpush.bf16.msra.mxu0 %v4442
    %4998 = vmatpush.bf16.msra.mxu0 %v4438
    %4999 = vmatpush.bf16.msra.mxu0 %v4434
    %5000 = vmatmul.bf16.gmra.mxu0 %v3298
    %v5001 = vpop.f32.mrf.mxu0
    %v5002 = vadd.f32 %v4989, %v5001
    %v5003 = vpop.f32.mrf.mxu0
    %5004 = vdwg.mxu0
    %5005 = vmatpush.bf16.msra.mxu0 %v4494
    %5006 = vmatpush.bf16.msra.mxu0 %v4490
    %5007 = vmatpush.bf16.msra.mxu0 %v4486
    %5008 = vmatpush.bf16.msra.mxu0 %v4482
    %5009 = vmatpush.bf16.msra.mxu0 %v4478
    %5010 = vmatpush.bf16.msra.mxu0 %v4474
    %5011 = vmatpush.bf16.msra.mxu0 %v4470
    %5012 = vmatpush.bf16.msra.mxu0 %v4466
    %5013 = vmatmul.bf16.gmra.mxu0 %v3299
    %v5014 = vpop.f32.mrf.mxu0
    %v5015 = vadd.f32 %v5002, %v5014
    %v5016 = vpop.f32.mrf.mxu0
    %5017 = vdwg.mxu0
    %5018 = vmatpush.bf16.msra.mxu0 %v4526
    %5019 = vmatpush.bf16.msra.mxu0 %v4522
    %5020 = vmatpush.bf16.msra.mxu0 %v4518
    %5021 = vmatpush.bf16.msra.mxu0 %v4514
    %5022 = vmatpush.bf16.msra.mxu0 %v4510
    %5023 = vmatpush.bf16.msra.mxu0 %v4506
    %5024 = vmatpush.bf16.msra.mxu0 %v4502
    %5025 = vmatpush.bf16.msra.mxu0 %v4498
    %5026 = vmatmul.bf16.gmra.mxu0 %v3300
    %v5027 = vpop.f32.mrf.mxu0
    %v5028 = vadd.f32 %v5015, %v5027
    %v5029 = vpop.f32.mrf.mxu0
    %5030 = vdwg.mxu0
    %5031 = vmatpush.bf16.msra.mxu0 %v4558
    %5032 = vmatpush.bf16.msra.mxu0 %v4554
    %5033 = vmatpush.bf16.msra.mxu0 %v4550
    %5034 = vmatpush.bf16.msra.mxu0 %v4546
    %5035 = vmatpush.bf16.msra.mxu0 %v4542
    %5036 = vmatpush.bf16.msra.mxu0 %v4538
    %5037 = vmatpush.bf16.msra.mxu0 %v4534
    %5038 = vmatpush.bf16.msra.mxu0 %v4530
    %5039 = vmatmul.bf16.gmra.mxu0 %v3301
    %v5040 = vpop.f32.mrf.mxu0
    %v5041 = vadd.f32 %v5028, %v5040
    %v5042 = vpop.f32.mrf.mxu0
    %5043 = vdwg.mxu0
    %5044 = vmatpush.bf16.msra.mxu0 %v4590
    %5045 = vmatpush.bf16.msra.mxu0 %v4586
    %5046 = vmatpush.bf16.msra.mxu0 %v4582
    %5047 = vmatpush.bf16.msra.mxu0 %v4578
    %5048 = vmatpush.bf16.msra.mxu0 %v4574
    %5049 = vmatpush.bf16.msra.mxu0 %v4570
    %5050 = vmatpush.bf16.msra.mxu0 %v4566
    %5051 = vmatpush.bf16.msra.mxu0 %v4562
    %5052 = vmatmul.bf16.gmra.mxu0 %v3302
    %v5053 = vpop.f32.mrf.mxu0
    %v5054 = vadd.f32 %v5041, %v5053
    %v5055 = vpop.f32.mrf.mxu0
    %5056 = vdwg.mxu0
    %5057 = vmatpush.bf16.msra.mxu0 %v4367
    %5058 = vmatpush.bf16.msra.mxu0 %v4363
    %5059 = vmatpush.bf16.msra.mxu0 %v4359
    %5060 = vmatpush.bf16.msra.mxu0 %v4355
    %5061 = vmatpush.bf16.msra.mxu0 %v4351
    %5062 = vmatpush.bf16.msra.mxu0 %v4347
    %5063 = vmatpush.bf16.msra.mxu0 %v4343
    %5064 = vmatpush.bf16.msra.mxu0 %v4339
    %5065 = vmatmul.bf16.gmra.mxu0 %v3295
    %v5066 = vpop.f32.mrf.mxu0
    %v5067 = vadd.f32 %v3563, %v5066
    %v5068 = vpop.f32.mrf.mxu0
    %5069 = vdwg.mxu0
    %5070 = vmatpush.bf16.msra.mxu0 %v4399
    %5071 = vmatpush.bf16.msra.mxu0 %v4395
    %5072 = vmatpush.bf16.msra.mxu0 %v4391
    %5073 = vmatpush.bf16.msra.mxu0 %v4387
    %5074 = vmatpush.bf16.msra.mxu0 %v4383
    %5075 = vmatpush.bf16.msra.mxu0 %v4379
    %5076 = vmatpush.bf16.msra.mxu0 %v4375
    %5077 = vmatpush.bf16.msra.mxu0 %v4371
    %5078 = vmatmul.bf16.gmra.mxu0 %v3296
    %v5079 = vpop.f32.mrf.mxu0
    %v5080 = vadd.f32 %v5067, %v5079
    %v5081 = vpop.f32.mrf.mxu0
    %5082 = vdwg.mxu0
    %5083 = vmatpush.bf16.msra.mxu0 %v4431
    %5084 = vmatpush.bf16.msra.mxu0 %v4427
    %5085 = vmatpush.bf16.msra.mxu0 %v4423
    %5086 = vmatpush.bf16.msra.mxu0 %v4419
    %5087 = vmatpush.bf16.msra.mxu0 %v4415
    %5088 = vmatpush.bf16.msra.mxu0 %v4411
    %5089 = vmatpush.bf16.msra.mxu0 %v4407
    %5090 = vmatpush.bf16.msra.mxu0 %v4403
    %5091 = vmatmul.bf16.gmra.mxu0 %v3297
    %v5092 = vpop.f32.mrf.mxu0
    %v5093 = vadd.f32 %v5080, %v5092
    %v5094 = vpop.f32.mrf.mxu0
    %5095 = vdwg.mxu0
    %5096 = vmatpush.bf16.msra.mxu0 %v4463
    %5097 = vmatpush.bf16.msra.mxu0 %v4459
    %5098 = vmatpush.bf16.msra.mxu0 %v4455
    %5099 = vmatpush.bf16.msra.mxu0 %v4451
    %5100 = vmatpush.bf16.msra.mxu0 %v4447
    %5101 = vmatpush.bf16.msra.mxu0 %v4443
    %5102 = vmatpush.bf16.msra.mxu0 %v4439
    %5103 = vmatpush.bf16.msra.mxu0 %v4435
    %5104 = vmatmul.bf16.gmra.mxu0 %v3298
    %v5105 = vpop.f32.mrf.mxu0
    %v5106 = vadd.f32 %v5093, %v5105
    %v5107 = vpop.f32.mrf.mxu0
    %5108 = vdwg.mxu0
    %5109 = vmatpush.bf16.msra.mxu0 %v4495
    %5110 = vmatpush.bf16.msra.mxu0 %v4491
    %5111 = vmatpush.bf16.msra.mxu0 %v4487
    %5112 = vmatpush.bf16.msra.mxu0 %v4483
    %5113 = vmatpush.bf16.msra.mxu0 %v4479
    %5114 = vmatpush.bf16.msra.mxu0 %v4475
    %5115 = vmatpush.bf16.msra.mxu0 %v4471
    %5116 = vmatpush.bf16.msra.mxu0 %v4467
    %5117 = vmatmul.bf16.gmra.mxu0 %v3299
    %v5118 = vpop.f32.mrf.mxu0
    %v5119 = vadd.f32 %v5106, %v5118
    %v5120 = vpop.f32.mrf.mxu0
    %5121 = vdwg.mxu0
    %5122 = vmatpush.bf16.msra.mxu0 %v4527
    %5123 = vmatpush.bf16.msra.mxu0 %v4523
    %5124 = vmatpush.bf16.msra.mxu0 %v4519
    %5125 = vmatpush.bf16.msra.mxu0 %v4515
    %5126 = vmatpush.bf16.msra.mxu0 %v4511
    %5127 = vmatpush.bf16.msra.mxu0 %v4507
    %5128 = vmatpush.bf16.msra.mxu0 %v4503
    %5129 = vmatpush.bf16.msra.mxu0 %v4499
    %5130 = vmatmul.bf16.gmra.mxu0 %v3300
    %v5131 = vpop.f32.mrf.mxu0
    %v5132 = vadd.f32 %v5119, %v5131
    %v5133 = vpop.f32.mrf.mxu0
    %5134 = vdwg.mxu0
    %5135 = vmatpush.bf16.msra.mxu0 %v4559
    %5136 = vmatpush.bf16.msra.mxu0 %v4555
    %5137 = vmatpush.bf16.msra.mxu0 %v4551
    %5138 = vmatpush.bf16.msra.mxu0 %v4547
    %5139 = vmatpush.bf16.msra.mxu0 %v4543
    %5140 = vmatpush.bf16.msra.mxu0 %v4539
    %5141 = vmatpush.bf16.msra.mxu0 %v4535
    %5142 = vmatpush.bf16.msra.mxu0 %v4531
    %5143 = vmatmul.bf16.gmra.mxu0 %v3301
    %v5144 = vpop.f32.mrf.mxu0
    %v5145 = vadd.f32 %v5132, %v5144
    %v5146 = vpop.f32.mrf.mxu0
    %5147 = vdwg.mxu0
    %5148 = vmatpush.bf16.msra.mxu0 %v4591
    %5149 = vmatpush.bf16.msra.mxu0 %v4587
    %5150 = vmatpush.bf16.msra.mxu0 %v4583
    %5151 = vmatpush.bf16.msra.mxu0 %v4579
    %5152 = vmatpush.bf16.msra.mxu0 %v4575
    %5153 = vmatpush.bf16.msra.mxu0 %v4571
    %5154 = vmatpush.bf16.msra.mxu0 %v4567
    %5155 = vmatpush.bf16.msra.mxu0 %v4563
    %5156 = vmatmul.bf16.gmra.mxu0 %v3302
    %v5157 = vpop.f32.mrf.mxu0
    %v5158 = vadd.f32 %v5145, %v5157
    %v5159 = vpop.f32.mrf.mxu0
    %5160 = vdwg.mxu0
    %5161 = vmatpush.bf16.msra.mxu0 %v4368
    %5162 = vmatpush.bf16.msra.mxu0 %v4364
    %5163 = vmatpush.bf16.msra.mxu0 %v4360
    %5164 = vmatpush.bf16.msra.mxu0 %v4356
    %5165 = vmatpush.bf16.msra.mxu0 %v4352
    %5166 = vmatpush.bf16.msra.mxu0 %v4348
    %5167 = vmatpush.bf16.msra.mxu0 %v4344
    %5168 = vmatpush.bf16.msra.mxu0 %v4340
    %5169 = vmatmul.bf16.gmra.mxu0 %v3295
    %v5170 = vpop.f32.mrf.mxu0
    %v5171 = vadd.f32 %v3564, %v5170
    %v5172 = vpop.f32.mrf.mxu0
    %5173 = vdwg.mxu0
    %5174 = vmatpush.bf16.msra.mxu0 %v4400
    %5175 = vmatpush.bf16.msra.mxu0 %v4396
    %5176 = vmatpush.bf16.msra.mxu0 %v4392
    %5177 = vmatpush.bf16.msra.mxu0 %v4388
    %5178 = vmatpush.bf16.msra.mxu0 %v4384
    %5179 = vmatpush.bf16.msra.mxu0 %v4380
    %5180 = vmatpush.bf16.msra.mxu0 %v4376
    %5181 = vmatpush.bf16.msra.mxu0 %v4372
    %5182 = vmatmul.bf16.gmra.mxu0 %v3296
    %v5183 = vpop.f32.mrf.mxu0
    %v5184 = vadd.f32 %v5171, %v5183
    %v5185 = vpop.f32.mrf.mxu0
    %5186 = vdwg.mxu0
    %5187 = vmatpush.bf16.msra.mxu0 %v4432
    %5188 = vmatpush.bf16.msra.mxu0 %v4428
    %5189 = vmatpush.bf16.msra.mxu0 %v4424
    %5190 = vmatpush.bf16.msra.mxu0 %v4420
    %5191 = vmatpush.bf16.msra.mxu0 %v4416
    %5192 = vmatpush.bf16.msra.mxu0 %v4412
    %5193 = vmatpush.bf16.msra.mxu0 %v4408
    %5194 = vmatpush.bf16.msra.mxu0 %v4404
    %5195 = vmatmul.bf16.gmra.mxu0 %v3297
    %v5196 = vpop.f32.mrf.mxu0
    %v5197 = vadd.f32 %v5184, %v5196
    %v5198 = vpop.f32.mrf.mxu0
    %5199 = vdwg.mxu0
    %5200 = vmatpush.bf16.msra.mxu0 %v4464
    %5201 = vmatpush.bf16.msra.mxu0 %v4460
    %5202 = vmatpush.bf16.msra.mxu0 %v4456
    %5203 = vmatpush.bf16.msra.mxu0 %v4452
    %5204 = vmatpush.bf16.msra.mxu0 %v4448
    %5205 = vmatpush.bf16.msra.mxu0 %v4444
    %5206 = vmatpush.bf16.msra.mxu0 %v4440
    %5207 = vmatpush.bf16.msra.mxu0 %v4436
    %5208 = vmatmul.bf16.gmra.mxu0 %v3298
    %v5209 = vpop.f32.mrf.mxu0
    %v5210 = vadd.f32 %v5197, %v5209
    %v5211 = vpop.f32.mrf.mxu0
    %5212 = vdwg.mxu0
    %5213 = vmatpush.bf16.msra.mxu0 %v4496
    %5214 = vmatpush.bf16.msra.mxu0 %v4492
    %5215 = vmatpush.bf16.msra.mxu0 %v4488
    %5216 = vmatpush.bf16.msra.mxu0 %v4484
    %5217 = vmatpush.bf16.msra.mxu0 %v4480
    %5218 = vmatpush.bf16.msra.mxu0 %v4476
    %5219 = vmatpush.bf16.msra.mxu0 %v4472
    %5220 = vmatpush.bf16.msra.mxu0 %v4468
    %5221 = vmatmul.bf16.gmra.mxu0 %v3299
    %v5222 = vpop.f32.mrf.mxu0
    %v5223 = vadd.f32 %v5210, %v5222
    %v5224 = vpop.f32.mrf.mxu0
    %5225 = vdwg.mxu0
    %5226 = vmatpush.bf16.msra.mxu0 %v4528
    %5227 = vmatpush.bf16.msra.mxu0 %v4524
    %5228 = vmatpush.bf16.msra.mxu0 %v4520
    %5229 = vmatpush.bf16.msra.mxu0 %v4516
    %5230 = vmatpush.bf16.msra.mxu0 %v4512
    %5231 = vmatpush.bf16.msra.mxu0 %v4508
    %5232 = vmatpush.bf16.msra.mxu0 %v4504
    %5233 = vmatpush.bf16.msra.mxu0 %v4500
    %5234 = vmatmul.bf16.gmra.mxu0 %v3300
    %v5235 = vpop.f32.mrf.mxu0
    %v5236 = vadd.f32 %v5223, %v5235
    %v5237 = vpop.f32.mrf.mxu0
    %5238 = vdwg.mxu0
    %5239 = vmatpush.bf16.msra.mxu0 %v4560
    %5240 = vmatpush.bf16.msra.mxu0 %v4556
    %5241 = vmatpush.bf16.msra.mxu0 %v4552
    %5242 = vmatpush.bf16.msra.mxu0 %v4548
    %5243 = vmatpush.bf16.msra.mxu0 %v4544
    %5244 = vmatpush.bf16.msra.mxu0 %v4540
    %5245 = vmatpush.bf16.msra.mxu0 %v4536
    %5246 = vmatpush.bf16.msra.mxu0 %v4532
    %5247 = vmatmul.bf16.gmra.mxu0 %v3301
    %v5248 = vpop.f32.mrf.mxu0
    %v5249 = vadd.f32 %v5236, %v5248
    %v5250 = vpop.f32.mrf.mxu0
    %5251 = vdwg.mxu0
    %5252 = vmatpush.bf16.msra.mxu0 %v4592
    %5253 = vmatpush.bf16.msra.mxu0 %v4588
    %5254 = vmatpush.bf16.msra.mxu0 %v4584
    %5255 = vmatpush.bf16.msra.mxu0 %v4580
    %5256 = vmatpush.bf16.msra.mxu0 %v4576
    %5257 = vmatpush.bf16.msra.mxu0 %v4572
    %5258 = vmatpush.bf16.msra.mxu0 %v4568
    %5259 = vmatpush.bf16.msra.mxu0 %v4564
    %5260 = vmatmul.bf16.gmra.mxu0 %v3302
    %v5261 = vpop.f32.mrf.mxu0
    %v5262 = vadd.f32 %v5249, %v5261
    %v5263 = vpop.f32.mrf.mxu0
    %5264 = vdwg.mxu0
    %v5265 = vmul.f32 %v4950, 0.2
    %v5266 = vmul.f32 %v5054, 0.2
    %v5267 = vmul.f32 %v5158, 0.2
    %v5268 = vmul.f32 %v5262, 0.2
    %v5269 = vmax.f32 %v4950, %v5265
    %v5270 = vmax.f32 %v5054, %v5266
    %v5271 = vmax.f32 %v5158, %v5267
    %v5272 = vmax.f32 %v5262, %v5268
    %v5273 = vpack.c.bf16 %v5269, %v5269
    %v5274 = vpack.c.bf16 %v5270, %v5270
    %v5275 = vpack.c.bf16 %v5271, %v5271
    %v5276 = vpack.c.bf16 %v5272, %v5272
    %v5277 = vld [vmem:[#allocation10] sm:$0xff]
    %v5278 = vld [vmem:[#allocation10 + $0x8] sm:$0xff]
    %v5279 = vld [vmem:[#allocation10 + $0x10] sm:$0xff]
    %v5280 = vld [vmem:[#allocation10 + $0x18] sm:$0xff]
    %v5281 = vld [vmem:[#allocation10 + $0x20] sm:$0xff]
    %v5282 = vld [vmem:[#allocation10 + $0x28] sm:$0xff]
    %v5283 = vld [vmem:[#allocation10 + $0x30] sm:$0xff]
    %v5284 = vld [vmem:[#allocation10 + $0x38] sm:$0xff]
    %v5285 = vld [vmem:[#allocation10 + $0x40] sm:$0xff]
    %v5286 = vld [vmem:[#allocation10 + $0x48] sm:$0xff]
    %v5287 = vld [vmem:[#allocation10 + $0x50] sm:$0xff]
    %v5288 = vld [vmem:[#allocation10 + $0x58] sm:$0xff]
    %v5289 = vld [vmem:[#allocation10 + $0x60] sm:$0xff]
    %v5290 = vld [vmem:[#allocation10 + $0x68] sm:$0xff]
    %v5291 = vld [vmem:[#allocation10 + $0x70] sm:$0xff]
    %v5292 = vld [vmem:[#allocation10 + $0x78] sm:$0xff]
    %v5293 = vld [vmem:[#allocation10 + $0x80] sm:$0xff]
    %v5294 = vld [vmem:[#allocation10 + $0x88] sm:$0xff]
    %v5295 = vld [vmem:[#allocation10 + $0x90] sm:$0xff]
    %v5296 = vld [vmem:[#allocation10 + $0x98] sm:$0xff]
    %v5297 = vld [vmem:[#allocation10 + $0xa0] sm:$0xff]
    %v5298 = vld [vmem:[#allocation10 + $0xa8] sm:$0xff]
    %v5299 = vld [vmem:[#allocation10 + $0xb0] sm:$0xff]
    %v5300 = vld [vmem:[#allocation10 + $0xb8] sm:$0xff]
    %v5301 = vld [vmem:[#allocation10 + $0xc0] sm:$0xff]
    %v5302 = vld [vmem:[#allocation10 + $0xc8] sm:$0xff]
    %v5303 = vld [vmem:[#allocation10 + $0xd0] sm:$0xff]
    %v5304 = vld [vmem:[#allocation10 + $0xd8] sm:$0xff]
    %v5305 = vld [vmem:[#allocation10 + $0xe0] sm:$0xff]
    %v5306 = vld [vmem:[#allocation10 + $0xe8] sm:$0xff]
    %v5307 = vld [vmem:[#allocation10 + $0xf0] sm:$0xff]
    %v5308 = vld [vmem:[#allocation10 + $0xf8] sm:$0xff]
    %v5309 = vld [vmem:[#allocation10 + $0x100] sm:$0xff]
    %v5310 = vld [vmem:[#allocation10 + $0x108] sm:$0xff]
    %v5311 = vld [vmem:[#allocation10 + $0x110] sm:$0xff]
    %v5312 = vld [vmem:[#allocation10 + $0x118] sm:$0xff]
    %v5313 = vld [vmem:[#allocation10 + $0x120] sm:$0xff]
    %v5314 = vld [vmem:[#allocation10 + $0x128] sm:$0xff]
    %v5315 = vld [vmem:[#allocation10 + $0x130] sm:$0xff]
    %v5316 = vld [vmem:[#allocation10 + $0x138] sm:$0xff]
    %v5317 = vld [vmem:[#allocation10 + $0x140] sm:$0xff]
    %v5318 = vld [vmem:[#allocation10 + $0x148] sm:$0xff]
    %v5319 = vld [vmem:[#allocation10 + $0x150] sm:$0xff]
    %v5320 = vld [vmem:[#allocation10 + $0x158] sm:$0xff]
    %v5321 = vld [vmem:[#allocation10 + $0x160] sm:$0xff]
    %v5322 = vld [vmem:[#allocation10 + $0x168] sm:$0xff]
    %v5323 = vld [vmem:[#allocation10 + $0x170] sm:$0xff]
    %v5324 = vld [vmem:[#allocation10 + $0x178] sm:$0xff]
    %v5325 = vld [vmem:[#allocation10 + $0x180] sm:$0xff]
    %v5326 = vld [vmem:[#allocation10 + $0x188] sm:$0xff]
    %v5327 = vld [vmem:[#allocation10 + $0x190] sm:$0xff]
    %v5328 = vld [vmem:[#allocation10 + $0x198] sm:$0xff]
    %v5329 = vld [vmem:[#allocation10 + $0x1a0] sm:$0xff]
    %v5330 = vld [vmem:[#allocation10 + $0x1a8] sm:$0xff]
    %v5331 = vld [vmem:[#allocation10 + $0x1b0] sm:$0xff]
    %v5332 = vld [vmem:[#allocation10 + $0x1b8] sm:$0xff]
    %v5333 = vld [vmem:[#allocation10 + $0x1c0] sm:$0xff]
    %v5334 = vld [vmem:[#allocation10 + $0x1c8] sm:$0xff]
    %v5335 = vld [vmem:[#allocation10 + $0x1d0] sm:$0xff]
    %v5336 = vld [vmem:[#allocation10 + $0x1d8] sm:$0xff]
    %v5337 = vld [vmem:[#allocation10 + $0x1e0] sm:$0xff]
    %v5338 = vld [vmem:[#allocation10 + $0x1e8] sm:$0xff]
    %v5339 = vld [vmem:[#allocation10 + $0x1f0] sm:$0xff]
    %v5340 = vld [vmem:[#allocation10 + $0x1f8] sm:$0xff]
    %v5341 = vld [vmem:[#allocation12] sm:$0x3]
    %v5343 = vperm.slane %v5341, 0
    %v5344 = vperm.slane %v5341, 1
    %v5411 = vunpack.c.l.b16 %v5277
    %v5412 = vunpack.c.h.b16 %v5277
    %v5413 = vunpack.c.l.b16 %v5278
    %v5414 = vunpack.c.h.b16 %v5278
    %v5415 = vunpack.c.l.b16 %v5279
    %v5416 = vunpack.c.h.b16 %v5279
    %v5417 = vunpack.c.l.b16 %v5280
    %v5418 = vunpack.c.h.b16 %v5280
    %v5419 = vunpack.c.l.b16 %v5281
    %v5420 = vunpack.c.h.b16 %v5281
    %v5421 = vunpack.c.l.b16 %v5282
    %v5422 = vunpack.c.h.b16 %v5282
    %v5423 = vunpack.c.l.b16 %v5283
    %v5424 = vunpack.c.h.b16 %v5283
    %v5425 = vunpack.c.l.b16 %v5284
    %v5426 = vunpack.c.h.b16 %v5284
    %v5427 = vunpack.c.l.b16 %v5285
    %v5428 = vunpack.c.h.b16 %v5285
    %v5429 = vunpack.c.l.b16 %v5286
    %v5430 = vunpack.c.h.b16 %v5286
    %v5431 = vunpack.c.l.b16 %v5287
    %v5432 = vunpack.c.h.b16 %v5287
    %v5433 = vunpack.c.l.b16 %v5288
    %v5434 = vunpack.c.h.b16 %v5288
    %v5435 = vunpack.c.l.b16 %v5289
    %v5436 = vunpack.c.h.b16 %v5289
    %v5437 = vunpack.c.l.b16 %v5290
    %v5438 = vunpack.c.h.b16 %v5290
    %v5439 = vunpack.c.l.b16 %v5291
    %v5440 = vunpack.c.h.b16 %v5291
    %v5441 = vunpack.c.l.b16 %v5292
    %v5442 = vunpack.c.h.b16 %v5292
    %v5443 = vunpack.c.l.b16 %v5293
    %v5444 = vunpack.c.h.b16 %v5293
    %v5445 = vunpack.c.l.b16 %v5294
    %v5446 = vunpack.c.h.b16 %v5294
    %v5447 = vunpack.c.l.b16 %v5295
    %v5448 = vunpack.c.h.b16 %v5295
    %v5449 = vunpack.c.l.b16 %v5296
    %v5450 = vunpack.c.h.b16 %v5296
    %v5451 = vunpack.c.l.b16 %v5297
    %v5452 = vunpack.c.h.b16 %v5297
    %v5453 = vunpack.c.l.b16 %v5298
    %v5454 = vunpack.c.h.b16 %v5298
    %v5455 = vunpack.c.l.b16 %v5299
    %v5456 = vunpack.c.h.b16 %v5299
    %v5457 = vunpack.c.l.b16 %v5300
    %v5458 = vunpack.c.h.b16 %v5300
    %v5459 = vunpack.c.l.b16 %v5301
    %v5460 = vunpack.c.h.b16 %v5301
    %v5461 = vunpack.c.l.b16 %v5302
    %v5462 = vunpack.c.h.b16 %v5302
    %v5463 = vunpack.c.l.b16 %v5303
    %v5464 = vunpack.c.h.b16 %v5303
    %v5465 = vunpack.c.l.b16 %v5304
    %v5466 = vunpack.c.h.b16 %v5304
    %v5467 = vunpack.c.l.b16 %v5305
    %v5468 = vunpack.c.h.b16 %v5305
    %v5469 = vunpack.c.l.b16 %v5306
    %v5470 = vunpack.c.h.b16 %v5306
    %v5471 = vunpack.c.l.b16 %v5307
    %v5472 = vunpack.c.h.b16 %v5307
    %v5473 = vunpack.c.l.b16 %v5308
    %v5474 = vunpack.c.h.b16 %v5308
    %v5475 = vunpack.c.l.b16 %v5309
    %v5476 = vunpack.c.h.b16 %v5309
    %v5477 = vunpack.c.l.b16 %v5310
    %v5478 = vunpack.c.h.b16 %v5310
    %v5479 = vunpack.c.l.b16 %v5311
    %v5480 = vunpack.c.h.b16 %v5311
    %v5481 = vunpack.c.l.b16 %v5312
    %v5482 = vunpack.c.h.b16 %v5312
    %v5483 = vunpack.c.l.b16 %v5313
    %v5484 = vunpack.c.h.b16 %v5313
    %v5485 = vunpack.c.l.b16 %v5314
    %v5486 = vunpack.c.h.b16 %v5314
    %v5487 = vunpack.c.l.b16 %v5315
    %v5488 = vunpack.c.h.b16 %v5315
    %v5489 = vunpack.c.l.b16 %v5316
    %v5490 = vunpack.c.h.b16 %v5316
    %v5491 = vunpack.c.l.b16 %v5317
    %v5492 = vunpack.c.h.b16 %v5317
    %v5493 = vunpack.c.l.b16 %v5318
    %v5494 = vunpack.c.h.b16 %v5318
    %v5495 = vunpack.c.l.b16 %v5319
    %v5496 = vunpack.c.h.b16 %v5319
    %v5497 = vunpack.c.l.b16 %v5320
    %v5498 = vunpack.c.h.b16 %v5320
    %v5499 = vunpack.c.l.b16 %v5321
    %v5500 = vunpack.c.h.b16 %v5321
    %v5501 = vunpack.c.l.b16 %v5322
    %v5502 = vunpack.c.h.b16 %v5322
    %v5503 = vunpack.c.l.b16 %v5323
    %v5504 = vunpack.c.h.b16 %v5323
    %v5505 = vunpack.c.l.b16 %v5324
    %v5506 = vunpack.c.h.b16 %v5324
    %v5507 = vunpack.c.l.b16 %v5325
    %v5508 = vunpack.c.h.b16 %v5325
    %v5509 = vunpack.c.l.b16 %v5326
    %v5510 = vunpack.c.h.b16 %v5326
    %v5511 = vunpack.c.l.b16 %v5327
    %v5512 = vunpack.c.h.b16 %v5327
    %v5513 = vunpack.c.l.b16 %v5328
    %v5514 = vunpack.c.h.b16 %v5328
    %v5515 = vunpack.c.l.b16 %v5329
    %v5516 = vunpack.c.h.b16 %v5329
    %v5517 = vunpack.c.l.b16 %v5330
    %v5518 = vunpack.c.h.b16 %v5330
    %v5519 = vunpack.c.l.b16 %v5331
    %v5520 = vunpack.c.h.b16 %v5331
    %v5521 = vunpack.c.l.b16 %v5332
    %v5522 = vunpack.c.h.b16 %v5332
    %v5523 = vunpack.c.l.b16 %v5333
    %v5524 = vunpack.c.h.b16 %v5333
    %v5525 = vunpack.c.l.b16 %v5334
    %v5526 = vunpack.c.h.b16 %v5334
    %v5527 = vunpack.c.l.b16 %v5335
    %v5528 = vunpack.c.h.b16 %v5335
    %v5529 = vunpack.c.l.b16 %v5336
    %v5530 = vunpack.c.h.b16 %v5336
    %v5531 = vunpack.c.l.b16 %v5337
    %v5532 = vunpack.c.h.b16 %v5337
    %v5533 = vunpack.c.l.b16 %v5338
    %v5534 = vunpack.c.h.b16 %v5338
    %v5535 = vunpack.c.l.b16 %v5339
    %v5536 = vunpack.c.h.b16 %v5339
    %v5537 = vunpack.c.l.b16 %v5340
    %v5538 = vunpack.c.h.b16 %v5340
    %v5539 = vpack.c.b16 %v5413, %v5411
    %v5540 = vpack.c.b16 %v5414, %v5412
    %v5541 = vpack.c.b16 %v5417, %v5415
    %v5542 = vpack.c.b16 %v5418, %v5416
    %v5543 = vpack.c.b16 %v5421, %v5419
    %v5544 = vpack.c.b16 %v5422, %v5420
    %v5545 = vpack.c.b16 %v5425, %v5423
    %v5546 = vpack.c.b16 %v5426, %v5424
    %v5547 = vpack.c.b16 %v5429, %v5427
    %v5548 = vpack.c.b16 %v5430, %v5428
    %v5549 = vpack.c.b16 %v5433, %v5431
    %v5550 = vpack.c.b16 %v5434, %v5432
    %v5551 = vpack.c.b16 %v5437, %v5435
    %v5552 = vpack.c.b16 %v5438, %v5436
    %v5553 = vpack.c.b16 %v5441, %v5439
    %v5554 = vpack.c.b16 %v5442, %v5440
    %v5555 = vpack.c.b16 %v5445, %v5443
    %v5556 = vpack.c.b16 %v5446, %v5444
    %v5557 = vpack.c.b16 %v5449, %v5447
    %v5558 = vpack.c.b16 %v5450, %v5448
    %v5559 = vpack.c.b16 %v5453, %v5451
    %v5560 = vpack.c.b16 %v5454, %v5452
    %v5561 = vpack.c.b16 %v5457, %v5455
    %v5562 = vpack.c.b16 %v5458, %v5456
    %v5563 = vpack.c.b16 %v5461, %v5459
    %v5564 = vpack.c.b16 %v5462, %v5460
    %v5565 = vpack.c.b16 %v5465, %v5463
    %v5566 = vpack.c.b16 %v5466, %v5464
    %v5567 = vpack.c.b16 %v5469, %v5467
    %v5568 = vpack.c.b16 %v5470, %v5468
    %v5569 = vpack.c.b16 %v5473, %v5471
    %v5570 = vpack.c.b16 %v5474, %v5472
    %v5571 = vpack.c.b16 %v5477, %v5475
    %v5572 = vpack.c.b16 %v5478, %v5476
    %v5573 = vpack.c.b16 %v5481, %v5479
    %v5574 = vpack.c.b16 %v5482, %v5480
    %v5575 = vpack.c.b16 %v5485, %v5483
    %v5576 = vpack.c.b16 %v5486, %v5484
    %v5577 = vpack.c.b16 %v5489, %v5487
    %v5578 = vpack.c.b16 %v5490, %v5488
    %v5579 = vpack.c.b16 %v5493, %v5491
    %v5580 = vpack.c.b16 %v5494, %v5492
    %v5581 = vpack.c.b16 %v5497, %v5495
    %v5582 = vpack.c.b16 %v5498, %v5496
    %v5583 = vpack.c.b16 %v5501, %v5499
    %v5584 = vpack.c.b16 %v5502, %v5500
    %v5585 = vpack.c.b16 %v5505, %v5503
    %v5586 = vpack.c.b16 %v5506, %v5504
    %v5587 = vpack.c.b16 %v5509, %v5507
    %v5588 = vpack.c.b16 %v5510, %v5508
    %v5589 = vpack.c.b16 %v5513, %v5511
    %v5590 = vpack.c.b16 %v5514, %v5512
    %v5591 = vpack.c.b16 %v5517, %v5515
    %v5592 = vpack.c.b16 %v5518, %v5516
    %v5593 = vpack.c.b16 %v5521, %v5519
    %v5594 = vpack.c.b16 %v5522, %v5520
    %v5595 = vpack.c.b16 %v5525, %v5523
    %v5596 = vpack.c.b16 %v5526, %v5524
    %v5597 = vpack.c.b16 %v5529, %v5527
    %v5598 = vpack.c.b16 %v5530, %v5528
    %v5599 = vpack.c.b16 %v5533, %v5531
    %v5600 = vpack.c.b16 %v5534, %v5532
    %v5601 = vpack.c.b16 %v5537, %v5535
    %v5602 = vpack.c.b16 %v5538, %v5536
    %5667 = vmatpush.bf16.msra.mxu0 %v5553
    %5668 = vmatpush.bf16.msra.mxu0 %v5551
    %5669 = vmatpush.bf16.msra.mxu0 %v5549
    %5670 = vmatpush.bf16.msra.mxu0 %v5547
    %5671 = vmatpush.bf16.msra.mxu0 %v5545
    %5672 = vmatpush.bf16.msra.mxu0 %v5543
    %5673 = vmatpush.bf16.msra.mxu0 %v5541
    %5674 = vmatpush.bf16.msra.mxu0 %v5539
    %5675 = vmatmul.bf16.gmra.mxu0 %v5273
    %v5676 = vpop.f32.mrf.mxu0
    %v5677 = vadd.f32 %v5343, %v5676
    %v5678 = vpop.f32.mrf.mxu0
    %5679 = vdwg.mxu0
    %5680 = vmatpush.bf16.msra.mxu0 %v5569
    %5681 = vmatpush.bf16.msra.mxu0 %v5567
    %5682 = vmatpush.bf16.msra.mxu0 %v5565
    %5683 = vmatpush.bf16.msra.mxu0 %v5563
    %5684 = vmatpush.bf16.msra.mxu0 %v5561
    %5685 = vmatpush.bf16.msra.mxu0 %v5559
    %5686 = vmatpush.bf16.msra.mxu0 %v5557
    %5687 = vmatpush.bf16.msra.mxu0 %v5555
    %5688 = vmatmul.bf16.gmra.mxu0 %v5274
    %v5689 = vpop.f32.mrf.mxu0
    %v5690 = vadd.f32 %v5677, %v5689
    %v5691 = vpop.f32.mrf.mxu0
    %5692 = vdwg.mxu0
    %5693 = vmatpush.bf16.msra.mxu0 %v5585
    %5694 = vmatpush.bf16.msra.mxu0 %v5583
    %5695 = vmatpush.bf16.msra.mxu0 %v5581
    %5696 = vmatpush.bf16.msra.mxu0 %v5579
    %5697 = vmatpush.bf16.msra.mxu0 %v5577
    %5698 = vmatpush.bf16.msra.mxu0 %v5575
    %5699 = vmatpush.bf16.msra.mxu0 %v5573
    %5700 = vmatpush.bf16.msra.mxu0 %v5571
    %5701 = vmatmul.bf16.gmra.mxu0 %v5275
    %v5702 = vpop.f32.mrf.mxu0
    %v5703 = vadd.f32 %v5690, %v5702
    %v5704 = vpop.f32.mrf.mxu0
    %5705 = vdwg.mxu0
    %5706 = vmatpush.bf16.msra.mxu0 %v5601
    %5707 = vmatpush.bf16.msra.mxu0 %v5599
    %5708 = vmatpush.bf16.msra.mxu0 %v5597
    %5709 = vmatpush.bf16.msra.mxu0 %v5595
    %5710 = vmatpush.bf16.msra.mxu0 %v5593
    %5711 = vmatpush.bf16.msra.mxu0 %v5591
    %5712 = vmatpush.bf16.msra.mxu0 %v5589
    %5713 = vmatpush.bf16.msra.mxu0 %v5587
    %5714 = vmatmul.bf16.gmra.mxu0 %v5276
    %v5715 = vpop.f32.mrf.mxu0
    %v5716 = vadd.f32 %v5703, %v5715
    %v5717 = vpop.f32.mrf.mxu0
    %5718 = vdwg.mxu0
    %5719 = vmatpush.bf16.msra.mxu0 %v5554
    %5720 = vmatpush.bf16.msra.mxu0 %v5552
    %5721 = vmatpush.bf16.msra.mxu0 %v5550
    %5722 = vmatpush.bf16.msra.mxu0 %v5548
    %5723 = vmatpush.bf16.msra.mxu0 %v5546
    %5724 = vmatpush.bf16.msra.mxu0 %v5544
    %5725 = vmatpush.bf16.msra.mxu0 %v5542
    %5726 = vmatpush.bf16.msra.mxu0 %v5540
    %5727 = vmatmul.bf16.gmra.mxu0 %v5273
    %v5728 = vpop.f32.mrf.mxu0
    %v5729 = vadd.f32 %v5344, %v5728
    %v5730 = vpop.f32.mrf.mxu0
    %5731 = vdwg.mxu0
    %5732 = vmatpush.bf16.msra.mxu0 %v5570
    %5733 = vmatpush.bf16.msra.mxu0 %v5568
    %5734 = vmatpush.bf16.msra.mxu0 %v5566
    %5735 = vmatpush.bf16.msra.mxu0 %v5564
    %5736 = vmatpush.bf16.msra.mxu0 %v5562
    %5737 = vmatpush.bf16.msra.mxu0 %v5560
    %5738 = vmatpush.bf16.msra.mxu0 %v5558
    %5739 = vmatpush.bf16.msra.mxu0 %v5556
    %5740 = vmatmul.bf16.gmra.mxu0 %v5274
    %v5741 = vpop.f32.mrf.mxu0
    %v5742 = vadd.f32 %v5729, %v5741
    %v5743 = vpop.f32.mrf.mxu0
    %5744 = vdwg.mxu0
    %5745 = vmatpush.bf16.msra.mxu0 %v5586
    %5746 = vmatpush.bf16.msra.mxu0 %v5584
    %5747 = vmatpush.bf16.msra.mxu0 %v5582
    %5748 = vmatpush.bf16.msra.mxu0 %v5580
    %5749 = vmatpush.bf16.msra.mxu0 %v5578
    %5750 = vmatpush.bf16.msra.mxu0 %v5576
    %5751 = vmatpush.bf16.msra.mxu0 %v5574
    %5752 = vmatpush.bf16.msra.mxu0 %v5572
    %5753 = vmatmul.bf16.gmra.mxu0 %v5275
    %v5754 = vpop.f32.mrf.mxu0
    %v5755 = vadd.f32 %v5742, %v5754
    %v5756 = vpop.f32.mrf.mxu0
    %5757 = vdwg.mxu0
    %5758 = vmatpush.bf16.msra.mxu0 %v5602
    %5759 = vmatpush.bf16.msra.mxu0 %v5600
    %5760 = vmatpush.bf16.msra.mxu0 %v5598
    %5761 = vmatpush.bf16.msra.mxu0 %v5596
    %5762 = vmatpush.bf16.msra.mxu0 %v5594
    %5763 = vmatpush.bf16.msra.mxu0 %v5592
    %5764 = vmatpush.bf16.msra.mxu0 %v5590
    %5765 = vmatpush.bf16.msra.mxu0 %v5588
    %5766 = vmatmul.bf16.gmra.mxu0 %v5276
    %v5767 = vpop.f32.mrf.mxu0
    %v5768 = vadd.f32 %v5755, %v5767
    %v5769 = vpop.f32.mrf.mxu0
    %5770 = vdwg.mxu0
    %v5771 = vmul.f32 %v5716, 0.2
    %v5772 = vmul.f32 %v5768, 0.2
    %v5773 = vmax.f32 %v5716, %v5771
    %v5774 = vmax.f32 %v5768, %v5772
    %v5775 = vpack.c.bf16 %v5773, %v5773
    %v5776 = vpack.c.bf16 %v5774, %v5774
    %v5777 = vld [vmem:[#allocation13] sm:$0xf]
    %v5778 = vld [vmem:[#allocation13 + $0x4] sm:$0xf]
    %v5779 = vld [vmem:[#allocation13 + $0x8] sm:$0xf]
    %v5780 = vld [vmem:[#allocation13 + $0xc] sm:$0xf]
    %v5781 = vld [vmem:[#allocation13 + $0x10] sm:$0xf]
    %v5782 = vld [vmem:[#allocation13 + $0x14] sm:$0xf]
    %v5783 = vld [vmem:[#allocation13 + $0x18] sm:$0xf]
    %v5784 = vld [vmem:[#allocation13 + $0x1c] sm:$0xf]
    %v5785 = vld [vmem:[#allocation13 + $0x20] sm:$0xf]
    %v5786 = vld [vmem:[#allocation13 + $0x24] sm:$0xf]
    %v5787 = vld [vmem:[#allocation13 + $0x28] sm:$0xf]
    %v5788 = vld [vmem:[#allocation13 + $0x2c] sm:$0xf]
    %v5789 = vld [vmem:[#allocation13 + $0x30] sm:$0xf]
    %v5790 = vld [vmem:[#allocation13 + $0x34] sm:$0xf]
    %v5791 = vld [vmem:[#allocation13 + $0x38] sm:$0xf]
    %v5792 = vld [vmem:[#allocation13 + $0x3c] sm:$0xf]
    %v5793 = vld [vmem:[#allocation13 + $0x40] sm:$0xf]
    %v5794 = vld [vmem:[#allocation13 + $0x44] sm:$0xf]
    %v5795 = vld [vmem:[#allocation13 + $0x48] sm:$0xf]
    %v5796 = vld [vmem:[#allocation13 + $0x4c] sm:$0xf]
    %v5797 = vld [vmem:[#allocation13 + $0x50] sm:$0xf]
    %v5798 = vld [vmem:[#allocation13 + $0x54] sm:$0xf]
    %v5799 = vld [vmem:[#allocation13 + $0x58] sm:$0xf]
    %v5800 = vld [vmem:[#allocation13 + $0x5c] sm:$0xf]
    %v5801 = vld [vmem:[#allocation13 + $0x60] sm:$0xf]
    %v5802 = vld [vmem:[#allocation13 + $0x64] sm:$0xf]
    %v5803 = vld [vmem:[#allocation13 + $0x68] sm:$0xf]
    %v5804 = vld [vmem:[#allocation13 + $0x6c] sm:$0xf]
    %v5805 = vld [vmem:[#allocation13 + $0x70] sm:$0xf]
    %v5806 = vld [vmem:[#allocation13 + $0x74] sm:$0xf]
    %v5807 = vld [vmem:[#allocation13 + $0x78] sm:$0xf]
    %v5808 = vld [vmem:[#allocation13 + $0x7c] sm:$0xf]
    %v5809 = vld [vmem:[#allocation15] sm:$0x1]
    %v5811 = vperm.slane %v5809, 0
    %v5845 = vunpack.c.l.b16 %v5777
    %v5846 = vunpack.c.l.b16 %v5778
    %v5847 = vunpack.c.l.b16 %v5779
    %v5848 = vunpack.c.l.b16 %v5780
    %v5849 = vunpack.c.l.b16 %v5781
    %v5850 = vunpack.c.l.b16 %v5782
    %v5851 = vunpack.c.l.b16 %v5783
    %v5852 = vunpack.c.l.b16 %v5784
    %v5853 = vunpack.c.l.b16 %v5785
    %v5854 = vunpack.c.l.b16 %v5786
    %v5855 = vunpack.c.l.b16 %v5787
    %v5856 = vunpack.c.l.b16 %v5788
    %v5857 = vunpack.c.l.b16 %v5789
    %v5858 = vunpack.c.l.b16 %v5790
    %v5859 = vunpack.c.l.b16 %v5791
    %v5860 = vunpack.c.l.b16 %v5792
    %v5861 = vunpack.c.l.b16 %v5793
    %v5862 = vunpack.c.l.b16 %v5794
    %v5863 = vunpack.c.l.b16 %v5795
    %v5864 = vunpack.c.l.b16 %v5796
    %v5865 = vunpack.c.l.b16 %v5797
    %v5866 = vunpack.c.l.b16 %v5798
    %v5867 = vunpack.c.l.b16 %v5799
    %v5868 = vunpack.c.l.b16 %v5800
    %v5869 = vunpack.c.l.b16 %v5801
    %v5870 = vunpack.c.l.b16 %v5802
    %v5871 = vunpack.c.l.b16 %v5803
    %v5872 = vunpack.c.l.b16 %v5804
    %v5873 = vunpack.c.l.b16 %v5805
    %v5874 = vunpack.c.l.b16 %v5806
    %v5875 = vunpack.c.l.b16 %v5807
    %v5876 = vunpack.c.l.b16 %v5808
    %v5877 = vpack.c.b16 %v5846, %v5845
    %v5878 = vpack.c.b16 %v5848, %v5847
    %v5879 = vpack.c.b16 %v5850, %v5849
    %v5880 = vpack.c.b16 %v5852, %v5851
    %v5881 = vpack.c.b16 %v5854, %v5853
    %v5882 = vpack.c.b16 %v5856, %v5855
    %v5883 = vpack.c.b16 %v5858, %v5857
    %v5884 = vpack.c.b16 %v5860, %v5859
    %v5885 = vpack.c.b16 %v5862, %v5861
    %v5886 = vpack.c.b16 %v5864, %v5863
    %v5887 = vpack.c.b16 %v5866, %v5865
    %v5888 = vpack.c.b16 %v5868, %v5867
    %v5889 = vpack.c.b16 %v5870, %v5869
    %v5890 = vpack.c.b16 %v5872, %v5871
    %v5891 = vpack.c.b16 %v5874, %v5873
    %v5892 = vpack.c.b16 %v5876, %v5875
    %5909 = vmatpush.bf16.msra.mxu0 %v5884
    %5910 = vmatpush.bf16.msra.mxu0 %v5883
    %5911 = vmatpush.bf16.msra.mxu0 %v5882
    %5912 = vmatpush.bf16.msra.mxu0 %v5881
    %5913 = vmatpush.bf16.msra.mxu0 %v5880
    %5914 = vmatpush.bf16.msra.mxu0 %v5879
    %5915 = vmatpush.bf16.msra.mxu0 %v5878
    %5916 = vmatpush.bf16.msra.mxu0 %v5877
    %5917 = vmatmul.bf16.gmra.mxu0 %v5775
    %v5918 = vpop.f32.mrf.mxu0
    %v5919 = vadd.f32 %v5811, %v5918
    %v5920 = vpop.f32.mrf.mxu0
    %5921 = vdwg.mxu0
    %5922 = vmatpush.bf16.msra.mxu0 %v5892
    %5923 = vmatpush.bf16.msra.mxu0 %v5891
    %5924 = vmatpush.bf16.msra.mxu0 %v5890
    %5925 = vmatpush.bf16.msra.mxu0 %v5889
    %5926 = vmatpush.bf16.msra.mxu0 %v5888
    %5927 = vmatpush.bf16.msra.mxu0 %v5887
    %5928 = vmatpush.bf16.msra.mxu0 %v5886
    %5929 = vmatpush.bf16.msra.mxu0 %v5885
    %5930 = vmatmul.bf16.gmra.mxu0 %v5776
    %v5931 = vpop.f32.mrf.mxu0
    %v5932 = vadd.f32 %v5919, %v5931
    %v5933 = vpop.f32.mrf.mxu0
    %5934 = vdwg.mxu0
    %v5935 = vxor.u32 %v5932, 2147483648
    %v5936 = vmul.f32 %v5935, 1.442695
    %v5937 = vpow.pop %v5936
    %v5938 = vadd.f32 %v5937, 1.0
    %v5939 = vrcp.pop %v5938
    %v5940 = vmul.f32 %v5938, %v5939
    %v5941 = vsub.f32 1.0, %v5940
    %v5942 = vmul.f32 %v5939, %v5941
    %v5943 = vadd.f32 %v5939, %v5942
    %vm5944 = vweird.f32 %v5938
    %vm5945 = vweird.f32 %v5939
    %vm5946 = vmor %vm5944, %vm5945
    %v5947 = vsel %vm5946, %v5939, %v5943
    %v5948 = vand.u32 2147483647, %v5938
    %vm5949 = vcmp.eq.f32.partialorder %v5948, 8.507059e+37
    %v5950 = vand.u32 %v5938, 2147483648
    %v5951 = vor.u32 1.1754944e-38, %v5950
    %v5952 = vsel %vm5949, %v5951, %v5947
    %v5953 = vmul.f32 1.0, %v5952
    %v5954 = vpack.c.bf16 %v5953, %v5953
    %5955 = vst [vmem:[%s9] sm:$0xf] %v5954
    // Predicated region
    $region74: #{discriminator_forward.1} parent=1 // pred_check
      _
    $region75: #{discriminator_forward.1} parent=1 // pred_check_branch
      %5957 = sbr.rel (0) target = $region77
    $region76: #{discriminator_forward.1} parent=1 // pred_region
      _
    $region77: #{discriminator_forward.1} parent=1 // pred_fallthru
      _
    // Predicated region
    $region78: #{discriminator_forward.1} parent=1 // pred_check
      _
    $region79: #{discriminator_forward.1} parent=1 // pred_check_branch
      %5959 = sbr.rel (0) target = $region81
    $region80: #{discriminator_forward.1} parent=1 // pred_region
      _
    $region81: #{discriminator_forward.1} parent=1 // pred_fallthru
      _
    %5960 = vsyncpa [#allocation3], 1
    %5961 = vsyncpa [#allocation5], 1
    %5962 = vsyncpa [#allocation8], 1
    %5963 = vsyncpa [#allocation11], 1
    %5964 = vsyncpa [#allocation14], 1

</llo_original>
